<compile_context>
chip_gen: v6e
topology: v6e:2x2x1
jax: 0.10.0
libtpu: 0.0.40
codegen_flags: <defaults>
</compile_context>

<pallas_src>
import math
import functools

import numpy as np
import jax
import jax.numpy as jnp
from jax.experimental import pallas as pl
from jax.experimental.pallas import tpu as pltpu

LANE = 128   # TPU lane width: d_model / head_dim / ffn hidden all padded to this


# ----------------------------------------------------------------------------
# Fused Pallas kernel: PE add + all encoder layers (lane-dense, whole batch)
# ----------------------------------------------------------------------------
def fused_backbone_kernel(
    x_ref,       # (N, LANE)   N = L*B, row r -> (l = r // B, b = r % B); zero beyond d_model
    pe_ref,      # (N, LANE)   positional encoding rows, zero beyond d_model
    mask_ref,    # (N, N)      additive block-diagonal bias (0 / -1e30)
    wqkv_ref,    # (NL, 3*NH, LANE, LANE)  per (head, q/k/v) projection; softmax scale folded into q
    wo_ref,      # (NL, NH, LANE, LANE)    per-head slice of the out-projection
    w1_ref,      # (NL, LANE, LANE)        FFN up   (d_model -> hidden)
    w2_ref,      # (NL, LANE, LANE)        FFN down (hidden  -> d_model)
    vec_ref,     # (NL, 16, LANE)  rows: 0..8 = qkv biases (3h+{0:q,1:k,2:v}),
                 #                 9 = bo, 10 = b1, 11 = b2, 12 = ln1_g, 13 = ln1_b,
                 #                 14 = ln2_g, 15 = ln2_b   (all zero on padded lanes)
    o_ref,       # (N, LANE)
    *, d_model, num_heads,
):
    N = x_ref.shape[0]
    num_layers = wqkv_ref.shape[0]
    inv_d = 1.0 / d_model

    # valid-lane mask, built once (only needed to zero the centered LN term on pad lanes)
    lane_mask = (jax.lax.broadcasted_iota(jnp.int32, (1, LANE), 1) < d_model
                 ).astype(jnp.float32)

    # ---- positional encoding (dropout = identity in eval) -------------------
    x = x_ref[...].astype(jnp.float32) + pe_ref[...].astype(jnp.float32)   # (N, LANE)
    mask_bias = mask_ref[...]                                              # (N, N)

    def layernorm(y, gamma, beta):
        # y has exact zeros on padded lanes; stats use d_model, not LANE.
        mu = jnp.sum(y, axis=-1, keepdims=True) * inv_d
        c = (y - mu) * lane_mask
        var = jnp.sum(c * c, axis=-1, keepdims=True) * inv_d
        return c * jax.lax.rsqrt(var + 1e-5) * gamma + beta    # beta zero-padded -> pads stay 0

    for l in range(num_layers):                  # static unroll over layers
        vecs = vec_ref[l]                        # (16, LANE)

        # ---- multi-head self attention (per-head 128x128 tile-aligned blocks) ----
        attn = jnp.zeros((N, LANE), jnp.float32)
        for h in range(num_heads):               # static unroll over heads
            q = jnp.dot(x, wqkv_ref[l, 3 * h + 0],
                        preferred_element_type=jnp.float32) + vecs[3 * h + 0:3 * h + 1, :]
            k = jnp.dot(x, wqkv_ref[l, 3 * h + 1],
                        preferred_element_type=jnp.float32) + vecs[3 * h + 1:3 * h + 2, :]
            v = jnp.dot(x, wqkv_ref[l, 3 * h + 2],
                        preferred_element_type=jnp.float32) + vecs[3 * h + 2:3 * h + 3, :]
            # scores without materializing k.T; padded head lanes of q/k are exactly 0,
            # so the 128-deep contraction equals the 11-deep one bit-for-bit.
            s = jax.lax.dot_general(q, k, (((1,), (1,)), ((), ())),
                                    preferred_element_type=jnp.float32)    # (N, N)
            s = s + mask_bias                                              # keep attention per-batch
            s = s - jnp.max(s, axis=-1, keepdims=True)
            p = jnp.exp(s)
            # EUP reciprocal (free slot); set approx=False for bit-exact softmax normalization.
            p = p * pl.reciprocal(jnp.sum(p, axis=-1, keepdims=True), approx=True)
            hv = jnp.dot(p, v, preferred_element_type=jnp.float32)         # (N, LANE)
            attn = attn + jnp.dot(hv, wo_ref[l, h],
                                  preferred_element_type=jnp.float32)      # accumulate heads
        attn = attn + vecs[9:10, :]                                        # out-projection bias

        # ---- residual + LayerNorm1 (post-norm, eps=1e-5, biased var) --------
        y = layernorm(x + attn, vecs[12:13, :], vecs[13:14, :])

        # ---- feed-forward: relu(y W1 + b1) W2 + b2 (padded hidden lanes stay 0) ----
        h1 = jnp.maximum(
            jnp.dot(y, w1_ref[l], preferred_element_type=jnp.float32) + vecs[10:11, :], 0.0)
        ff = jnp.dot(h1, w2_ref[l], preferred_element_type=jnp.float32) + vecs[11:12, :]

        # ---- residual + LayerNorm2 ------------------------------------------
        x = layernorm(y + ff, vecs[14:15, :], vecs[15:16, :])

    o_ref[...] = x.astype(o_ref.dtype)           # lane-dense (N, 128) unmasked store


# ----------------------------------------------------------------------------
# Wrapper: single pallas_call, everything resident in VMEM (< 3 MiB total)
# ----------------------------------------------------------------------------
@functools.partial(jax.jit, static_argnames=("num_heads",))
def transformer_backbone(x_lbd, pe, params, num_heads):
    """x: (L, B, D) as in the PyTorch module (batch_first=False)."""
    L, B, D = x_lbd.shape
    N = L * B
    assert D <= LANE

    # Row-major flatten (free, no transpose): row = l*B + b; lane-pad D -> 128 with zeros.
    x_pad = jnp.pad(x_lbd.reshape(N, D).astype(jnp.float32), ((0, 0), (0, LANE - D)))
    pe_rows = jnp.broadcast_to(pe[:L].reshape(L, 1, D), (L, B, D)).reshape(N, D)
    pe_pad = jnp.pad(pe_rows.astype(jnp.float32), ((0, 0), (0, LANE - D)))

    # Block-diagonal attention mask precomputed once as an additive bias.
    b_idx = jnp.arange(N, dtype=jnp.int32) % B
    mask_bias = jnp.where(b_idx[:, None] == b_idx[None, :], 0.0, -1e30).astype(jnp.float32)

    vmem = pl.BlockSpec(memory_space=pltpu.MemorySpace.VMEM)
    kernel = functools.partial(fused_backbone_kernel, d_model=D, num_heads=num_heads)

    # TODO(synk): for large L*B on v7x, add a grid over batches
    # (dimension_semantics=("parallel",)) and a flash-style key-block loop; at N=16
    # a single invocation with full VMEM residency is optimal on all generations.
    out_pad = pl.pallas_call(
        kernel,
        out_shape=jax.ShapeDtypeStruct((N, LANE), jnp.float32),
        in_specs=[vmem] * 8,
        out_specs=vmem,
    )(x_pad, pe_pad, mask_bias,
      params["w_qkv"], params["w_o"], params["w_1"], params["w_2"], params["vec"])

    return out_pad[:, :D].reshape(L, B, D).astype(x_lbd.dtype)


# ----------------------------------------------------------------------------
# Deterministic parameter / buffer construction (lane-padded, per-head packed)
# ----------------------------------------------------------------------------
def build_positional_encoding(d_model, max_len=300):
    # Faithful port of the PyTorch PositionalEncoding buffer (requires odd d_model).
    pe = np.zeros((max_len, d_model), np.float32)
    position = np.arange(0, max_len, dtype=np.float32)[:, None]
    div_term = np.exp(np.arange(0, d_model, 2, dtype=np.float32)
                      * (-math.log(10000.0) / d_model))
    arg = position * div_term
    pe[:, 0::2] = np.sin(arg)
    pe[:, 1::2] = np.cos(arg[:, 0:-1])
    return jnp.asarray(pe)                                   # (max_len, d_model)


def init_params(key, num_layers, d_model, hidden_dim, num_heads):
    """nn.TransformerEncoderLayer params, zero-padded to 128 lanes and stacked per layer."""
    assert d_model % num_heads == 0 and d_model <= LANE and hidden_dim <= LANE
    hd = d_model // num_heads
    scale = 1.0 / math.sqrt(hd)

    w_qkv_l, wo_l, w1_l, w2_l, vec_l = [], [], [], [], []
    for i in range(num_layers):
        ks = jax.random.split(jax.random.fold_in(key, i), 8)
        in_w = np.asarray(jax.random.normal(ks[0], (3 * d_model, d_model), jnp.float32)) / math.sqrt(d_model)
        in_b = np.asarray(jax.random.normal(ks[1], (3 * d_model,), jnp.float32)) * 0.02
        wo = np.asarray(jax.random.normal(ks[2], (d_model, d_model), jnp.float32)) / math.sqrt(d_model)
        bo = np.asarray(jax.random.normal(ks[3], (d_model,), jnp.float32)) * 0.02
        w1 = np.asarray(jax.random.normal(ks[4], (hidden_dim, d_model), jnp.float32)) / math.sqrt(d_model)
        b1 = np.asarray(jax.random.normal(ks[5], (hidden_dim,), jnp.float32)) * 0.02
        w2 = np.asarray(jax.random.normal(ks[6], (d_model, hidden_dim), jnp.float32)) / math.sqrt(hidden_dim)
        b2 = np.asarray(jax.random.normal(ks[7], (d_model,), jnp.float32)) * 0.02

        # qkv = x @ in_w.T + in_b, rows [q | k | v]; repack per (head, q/k/v) into
        # zero-padded (LANE, LANE) blocks with the softmax scale folded into q.
        w_qkv = np.zeros((3 * num_heads, LANE, LANE), np.float32)
        vec = np.zeros((16, LANE), np.float32)
        for h in range(num_heads):
            for j in range(3):                               # 0=q, 1=k, 2=v
                rows = slice(j * d_model + h * hd, j * d_model + (h + 1) * hd)
                blk = in_w[rows, :].T                        # (d_model, hd)
                bias = in_b[rows]                            # (hd,)
                if j == 0:
                    blk = blk * scale
                    bias = bias * scale
                w_qkv[3 * h + j, :d_model, :hd] = blk
                vec[3 * h + j, :hd] = bias

        # out = concat_heads @ wo.T + bo  ->  per-head (LANE, LANE) slices, accumulated in-kernel.
        wo_h = np.zeros((num_heads, LANE, LANE), np.float32)
        wot = wo.T                                           # rows = concat-head dim
        for h in range(num_heads):
            wo_h[h, :hd, :d_model] = wot[h * hd:(h + 1) * hd, :]
        vec[9, :d_model] = bo

        w1p = np.zeros((LANE, LANE), np.float32)
        w1p[:d_model, :hidden_dim] = w1.T                    # y @ w1.T
        vec[10, :hidden_dim] = b1
        w2p = np.zeros((LANE, LANE), np.float32)
        w2p[:hidden_dim, :d_model] = w2.T                    # h1 @ w2.T
        vec[11, :d_model] = b2

        vec[12, :d_model] = 1.0                              # ln1 gamma (beta row 13 stays 0)
        vec[14, :d_model] = 1.0                              # ln2 gamma (beta row 15 stays 0)

        w_qkv_l.append(w_qkv)
        wo_l.append(wo_h)
        w1_l.append(w1p)
        w2_l.append(w2p)
        vec_l.append(vec)

    return {
        "w_qkv": jnp.asarray(np.stack(w_qkv_l)),   # (NL, 3*NH, LANE, LANE)
        "w_o":   jnp.asarray(np.stack(wo_l)),      # (NL, NH,   LANE, LANE)
        "w_1":   jnp.asarray(np.stack(w1_l)),      # (NL, LANE, LANE)
        "w_2":   jnp.asarray(np.stack(w2_l)),      # (NL, LANE, LANE)
        "vec":   jnp.asarray(np.stack(vec_l)),     # (NL, 16, LANE)
    }


# ----------------------------------------------------------------------------
if __name__ == "__main__":
    INPUT_DIM = 33      # odd (required by the reference PositionalEncoding), divisible by heads
    HIDDEN_DIM = 64
    NUM_LAYERS = 2
    NUM_HEADS = 3
    SEQ, BATCH = 8, 2

    key = jax.random.PRNGKey(0)
    kx, kp = jax.random.split(key)

    x = jax.random.normal(kx, (SEQ, BATCH, INPUT_DIM), jnp.float32)   # (L, B, D)
    pe = build_positional_encoding(INPUT_DIM)
    params = init_params(kp, NUM_LAYERS, INPUT_DIM, HIDDEN_DIM, NUM_HEADS)

    out = transformer_backbone(x, pe, params, num_heads=NUM_HEADS)
    out = jax.block_until_ready(out)

    assert out.shape == (SEQ, BATCH, INPUT_DIM), out.shape
    assert bool(jnp.all(jnp.isfinite(out)))
    print("KERNEL_OK")
</pallas_src>

<mosaic_0001>
module attributes {stable_mosaic.version = 11 : i64} {
  func.func @fused_backbone_kernel(%arg0: memref<16x128xf32, #tpu.memory_space<vmem>>, %arg1: memref<16x128xf32, #tpu.memory_space<vmem>>, %arg2: memref<16x16xf32, #tpu.memory_space<vmem>>, %arg3: memref<2x9x128x128xf32, #tpu.memory_space<vmem>>, %arg4: memref<2x3x128x128xf32, #tpu.memory_space<vmem>>, %arg5: memref<2x128x128xf32, #tpu.memory_space<vmem>>, %arg6: memref<2x128x128xf32, #tpu.memory_space<vmem>>, %arg7: memref<2x16x128xf32, #tpu.memory_space<vmem>>, %arg8: memref<16x128xf32, #tpu.memory_space<vmem>>) attributes {dimension_semantics = [], scalar_prefetch = 0 : i64, scratch_operands = 0 : i64, tpu.core_type = #tpu.core_type<tc>} {
    %0 = tpu.iota {dimensions = array<i32: 1>} : vector<1x128xi32>
    %c33_i32 = arith.constant 33 : i32
    %1 = vector.broadcast %c33_i32 : i32 to vector<1x128xi32>
    %2 = arith.cmpi slt, %0, %1 : vector<1x128xi32>
    %3 = arith.extui %2 : vector<1x128xi1> to vector<1x128xi32>
    %4 = arith.sitofp %3 : vector<1x128xi32> to vector<1x128xf32>
    %c0 = arith.constant 0 : index
    %c0_0 = arith.constant 0 : index
    %5 = vector.load %arg0[%c0, %c0_0] : memref<16x128xf32, #tpu.memory_space<vmem>>, vector<16x128xf32>
    %c0_1 = arith.constant 0 : index
    %c0_2 = arith.constant 0 : index
    %6 = vector.load %arg1[%c0_1, %c0_2] : memref<16x128xf32, #tpu.memory_space<vmem>>, vector<16x128xf32>
    %7 = arith.addf %5, %6 : vector<16x128xf32>
    %c0_3 = arith.constant 0 : index
    %c0_4 = arith.constant 0 : index
    %8 = vector.load %arg2[%c0_3, %c0_4] : memref<16x16xf32, #tpu.memory_space<vmem>>, vector<16x16xf32>
    %c0_5 = arith.constant 0 : index
    %c0_6 = arith.constant 0 : index
    %c0_7 = arith.constant 0 : index
    %9 = vector.load %arg7[%c0_5, %c0_6, %c0_7] : memref<2x16x128xf32, #tpu.memory_space<vmem>>, vector<1x16x128xf32>
    %10 = vector.shape_cast %9 : vector<1x16x128xf32> to vector<16x128xf32>
    %cst = arith.constant 0.000000e+00 : f32
    %11 = vector.broadcast %cst : f32 to vector<16x128xf32>
    %c0_8 = arith.constant 0 : index
    %c0_9 = arith.constant 0 : index
    %c0_10 = arith.constant 0 : index
    %c0_11 = arith.constant 0 : index
    %12 = vector.load %arg3[%c0_8, %c0_9, %c0_10, %c0_11] : memref<2x9x128x128xf32, #tpu.memory_space<vmem>>, vector<1x1x128x128xf32>
    %13 = vector.shape_cast %12 : vector<1x1x128x128xf32> to vector<128x128xf32>
    %cst_12 = arith.constant dense<0.000000e+00> : vector<16x128xf32>
    %14 = tpu.matmul %7, %13, %cst_12 {dimension_numbers = #tpu.dot_dimension_numbers<[1], [0], [0], [1], [0, 0, 1, 1], [], []>} : vector<16x128xf32>, vector<128x128xf32>, vector<16x128xf32> -> vector<16x128xf32>
    %15 = vector.extract_strided_slice %10 {offsets = [0, 0], sizes = [1, 128], strides = [1, 1]} : vector<16x128xf32> to vector<1x128xf32>
    %16 = vector.broadcast %15 : vector<1x128xf32> to vector<16x128xf32>
    %17 = arith.addf %14, %16 : vector<16x128xf32>
    %c0_13 = arith.constant 0 : index
    %c1 = arith.constant 1 : index
    %c0_14 = arith.constant 0 : index
    %c0_15 = arith.constant 0 : index
    %18 = vector.load %arg3[%c0_13, %c1, %c0_14, %c0_15] : memref<2x9x128x128xf32, #tpu.memory_space<vmem>>, vector<1x1x128x128xf32>
    %19 = vector.shape_cast %18 : vector<1x1x128x128xf32> to vector<128x128xf32>
    %cst_16 = arith.constant dense<0.000000e+00> : vector<16x128xf32>
    %20 = tpu.matmul %7, %19, %cst_16 {dimension_numbers = #tpu.dot_dimension_numbers<[1], [0], [0], [1], [0, 0, 1, 1], [], []>} : vector<16x128xf32>, vector<128x128xf32>, vector<16x128xf32> -> vector<16x128xf32>
    %21 = vector.extract_strided_slice %10 {offsets = [1, 0], sizes = [1, 128], strides = [1, 1]} : vector<16x128xf32> to vector<1x128xf32>
    %22 = vector.broadcast %21 : vector<1x128xf32> to vector<16x128xf32>
    %23 = arith.addf %20, %22 : vector<16x128xf32>
    %c0_17 = arith.constant 0 : index
    %c2 = arith.constant 2 : index
    %c0_18 = arith.constant 0 : index
    %c0_19 = arith.constant 0 : index
    %24 = vector.load %arg3[%c0_17, %c2, %c0_18, %c0_19] : memref<2x9x128x128xf32, #tpu.memory_space<vmem>>, vector<1x1x128x128xf32>
    %25 = vector.shape_cast %24 : vector<1x1x128x128xf32> to vector<128x128xf32>
    %cst_20 = arith.constant dense<0.000000e+00> : vector<16x128xf32>
    %26 = tpu.matmul %7, %25, %cst_20 {dimension_numbers = #tpu.dot_dimension_numbers<[1], [0], [0], [1], [0, 0, 1, 1], [], []>} : vector<16x128xf32>, vector<128x128xf32>, vector<16x128xf32> -> vector<16x128xf32>
    %27 = vector.extract_strided_slice %10 {offsets = [2, 0], sizes = [1, 128], strides = [1, 1]} : vector<16x128xf32> to vector<1x128xf32>
    %28 = vector.broadcast %27 : vector<1x128xf32> to vector<16x128xf32>
    %29 = arith.addf %26, %28 : vector<16x128xf32>
    %cst_21 = arith.constant dense<0.000000e+00> : vector<16x16xf32>
    %30 = tpu.matmul %17, %23, %cst_21 {dimension_numbers = #tpu.dot_dimension_numbers<[1], [1], [0], [0], [0, 0, 1, 0], [], []>} : vector<16x128xf32>, vector<16x128xf32>, vector<16x16xf32> -> vector<16x16xf32>
    %31 = arith.addf %30, %8 : vector<16x16xf32>
    %cst_22 = arith.constant dense<0xFF800000> : vector<16xf32>
    %32 = vector.multi_reduction <maximumf>, %31, %cst_22 [1] : vector<16x16xf32> to vector<16xf32>
    %33 = vector.shape_cast %32 : vector<16xf32> to vector<16x1xf32>
    %34 = vector.broadcast %33 : vector<16x1xf32> to vector<16x16xf32>
    %35 = arith.subf %31, %34 : vector<16x16xf32>
    %36 = math.exp %35 : vector<16x16xf32>
    %cst_23 = arith.constant dense<0.000000e+00> : vector<16xf32>
    %37 = vector.multi_reduction <add>, %36, %cst_23 [1] : vector<16x16xf32> to vector<16xf32>
    %38 = vector.shape_cast %37 : vector<16xf32> to vector<16x1xf32>
    %39 = tpu.reciprocal %38 {approx = true} : vector<16x1xf32> -> vector<16x1xf32>
    %40 = vector.broadcast %39 : vector<16x1xf32> to vector<16x16xf32>
    %41 = arith.mulf %36, %40 : vector<16x16xf32>
    %cst_24 = arith.constant dense<0.000000e+00> : vector<16x128xf32>
    %42 = tpu.matmul %41, %29, %cst_24 {dimension_numbers = #tpu.dot_dimension_numbers<[1], [0], [0], [1], [0, 0, 1, 1], [], []>} : vector<16x16xf32>, vector<16x128xf32>, vector<16x128xf32> -> vector<16x128xf32>
    %c0_25 = arith.constant 0 : index
    %c0_26 = arith.constant 0 : index
    %c0_27 = arith.constant 0 : index
    %c0_28 = arith.constant 0 : index
    %43 = vector.load %arg4[%c0_25, %c0_26, %c0_27, %c0_28] : memref<2x3x128x128xf32, #tpu.memory_space<vmem>>, vector<1x1x128x128xf32>
    %44 = vector.shape_cast %43 : vector<1x1x128x128xf32> to vector<128x128xf32>
    %cst_29 = arith.constant dense<0.000000e+00> : vector<16x128xf32>
    %45 = tpu.matmul %42, %44, %cst_29 {dimension_numbers = #tpu.dot_dimension_numbers<[1], [0], [0], [1], [0, 0, 1, 1], [], []>} : vector<16x128xf32>, vector<128x128xf32>, vector<16x128xf32> -> vector<16x128xf32>
    %46 = arith.addf %11, %45 : vector<16x128xf32>
    %c0_30 = arith.constant 0 : index
    %c3 = arith.constant 3 : index
    %c0_31 = arith.constant 0 : index
    %c0_32 = arith.constant 0 : index
    %47 = vector.load %arg3[%c0_30, %c3, %c0_31, %c0_32] : memref<2x9x128x128xf32, #tpu.memory_space<vmem>>, vector<1x1x128x128xf32>
    %48 = vector.shape_cast %47 : vector<1x1x128x128xf32> to vector<128x128xf32>
    %cst_33 = arith.constant dense<0.000000e+00> : vector<16x128xf32>
    %49 = tpu.matmul %7, %48, %cst_33 {dimension_numbers = #tpu.dot_dimension_numbers<[1], [0], [0], [1], [0, 0, 1, 1], [], []>} : vector<16x128xf32>, vector<128x128xf32>, vector<16x128xf32> -> vector<16x128xf32>
    %50 = vector.extract_strided_slice %10 {offsets = [3, 0], sizes = [1, 128], strides = [1, 1]} : vector<16x128xf32> to vector<1x128xf32>
    %51 = vector.broadcast %50 : vector<1x128xf32> to vector<16x128xf32>
    %52 = arith.addf %49, %51 : vector<16x128xf32>
    %c0_34 = arith.constant 0 : index
    %c4 = arith.constant 4 : index
    %c0_35 = arith.constant 0 : index
    %c0_36 = arith.constant 0 : index
    %53 = vector.load %arg3[%c0_34, %c4, %c0_35, %c0_36] : memref<2x9x128x128xf32, #tpu.memory_space<vmem>>, vector<1x1x128x128xf32>
    %54 = vector.shape_cast %53 : vector<1x1x128x128xf32> to vector<128x128xf32>
    %cst_37 = arith.constant dense<0.000000e+00> : vector<16x128xf32>
    %55 = tpu.matmul %7, %54, %cst_37 {dimension_numbers = #tpu.dot_dimension_numbers<[1], [0], [0], [1], [0, 0, 1, 1], [], []>} : vector<16x128xf32>, vector<128x128xf32>, vector<16x128xf32> -> vector<16x128xf32>
    %56 = vector.extract_strided_slice %10 {offsets = [4, 0], sizes = [1, 128], strides = [1, 1]} : vector<16x128xf32> to vector<1x128xf32>
    %57 = vector.broadcast %56 : vector<1x128xf32> to vector<16x128xf32>
    %58 = arith.addf %55, %57 : vector<16x128xf32>
    %c0_38 = arith.constant 0 : index
    %c5 = arith.constant 5 : index
    %c0_39 = arith.constant 0 : index
    %c0_40 = arith.constant 0 : index
    %59 = vector.load %arg3[%c0_38, %c5, %c0_39, %c0_40] : memref<2x9x128x128xf32, #tpu.memory_space<vmem>>, vector<1x1x128x128xf32>
    %60 = vector.shape_cast %59 : vector<1x1x128x128xf32> to vector<128x128xf32>
    %cst_41 = arith.constant dense<0.000000e+00> : vector<16x128xf32>
    %61 = tpu.matmul %7, %60, %cst_41 {dimension_numbers = #tpu.dot_dimension_numbers<[1], [0], [0], [1], [0, 0, 1, 1], [], []>} : vector<16x128xf32>, vector<128x128xf32>, vector<16x128xf32> -> vector<16x128xf32>
    %62 = vector.extract_strided_slice %10 {offsets = [5, 0], sizes = [1, 128], strides = [1, 1]} : vector<16x128xf32> to vector<1x128xf32>
    %63 = vector.broadcast %62 : vector<1x128xf32> to vector<16x128xf32>
    %64 = arith.addf %61, %63 : vector<16x128xf32>
    %cst_42 = arith.constant dense<0.000000e+00> : vector<16x16xf32>
    %65 = tpu.matmul %52, %58, %cst_42 {dimension_numbers = #tpu.dot_dimension_numbers<[1], [1], [0], [0], [0, 0, 1, 0], [], []>} : vector<16x128xf32>, vector<16x128xf32>, vector<16x16xf32> -> vector<16x16xf32>
    %66 = arith.addf %65, %8 : vector<16x16xf32>
    %cst_43 = arith.constant dense<0xFF800000> : vector<16xf32>
    %67 = vector.multi_reduction <maximumf>, %66, %cst_43 [1] : vector<16x16xf32> to vector<16xf32>
    %68 = vector.shape_cast %67 : vector<16xf32> to vector<16x1xf32>
    %69 = vector.broadcast %68 : vector<16x1xf32> to vector<16x16xf32>
    %70 = arith.subf %66, %69 : vector<16x16xf32>
    %71 = math.exp %70 : vector<16x16xf32>
    %cst_44 = arith.constant dense<0.000000e+00> : vector<16xf32>
    %72 = vector.multi_reduction <add>, %71, %cst_44 [1] : vector<16x16xf32> to vector<16xf32>
    %73 = vector.shape_cast %72 : vector<16xf32> to vector<16x1xf32>
    %74 = tpu.reciprocal %73 {approx = true} : vector<16x1xf32> -> vector<16x1xf32>
    %75 = vector.broadcast %74 : vector<16x1xf32> to vector<16x16xf32>
    %76 = arith.mulf %71, %75 : vector<16x16xf32>
    %cst_45 = arith.constant dense<0.000000e+00> : vector<16x128xf32>
    %77 = tpu.matmul %76, %64, %cst_45 {dimension_numbers = #tpu.dot_dimension_numbers<[1], [0], [0], [1], [0, 0, 1, 1], [], []>} : vector<16x16xf32>, vector<16x128xf32>, vector<16x128xf32> -> vector<16x128xf32>
    %c0_46 = arith.constant 0 : index
    %c1_47 = arith.constant 1 : index
    %c0_48 = arith.constant 0 : index
    %c0_49 = arith.constant 0 : index
    %78 = vector.load %arg4[%c0_46, %c1_47, %c0_48, %c0_49] : memref<2x3x128x128xf32, #tpu.memory_space<vmem>>, vector<1x1x128x128xf32>
    %79 = vector.shape_cast %78 : vector<1x1x128x128xf32> to vector<128x128xf32>
    %cst_50 = arith.constant dense<0.000000e+00> : vector<16x128xf32>
    %80 = tpu.matmul %77, %79, %cst_50 {dimension_numbers = #tpu.dot_dimension_numbers<[1], [0], [0], [1], [0, 0, 1, 1], [], []>} : vector<16x128xf32>, vector<128x128xf32>, vector<16x128xf32> -> vector<16x128xf32>
    %81 = arith.addf %46, %80 : vector<16x128xf32>
    %c0_51 = arith.constant 0 : index
    %c6 = arith.constant 6 : index
    %c0_52 = arith.constant 0 : index
    %c0_53 = arith.constant 0 : index
    %82 = vector.load %arg3[%c0_51, %c6, %c0_52, %c0_53] : memref<2x9x128x128xf32, #tpu.memory_space<vmem>>, vector<1x1x128x128xf32>
    %83 = vector.shape_cast %82 : vector<1x1x128x128xf32> to vector<128x128xf32>
    %cst_54 = arith.constant dense<0.000000e+00> : vector<16x128xf32>
    %84 = tpu.matmul %7, %83, %cst_54 {dimension_numbers = #tpu.dot_dimension_numbers<[1], [0], [0], [1], [0, 0, 1, 1], [], []>} : vector<16x128xf32>, vector<128x128xf32>, vector<16x128xf32> -> vector<16x128xf32>
    %85 = vector.extract_strided_slice %10 {offsets = [6, 0], sizes = [1, 128], strides = [1, 1]} : vector<16x128xf32> to vector<1x128xf32>
    %86 = vector.broadcast %85 : vector<1x128xf32> to vector<16x128xf32>
    %87 = arith.addf %84, %86 : vector<16x128xf32>
    %c0_55 = arith.constant 0 : index
    %c7 = arith.constant 7 : index
    %c0_56 = arith.constant 0 : index
    %c0_57 = arith.constant 0 : index
    %88 = vector.load %arg3[%c0_55, %c7, %c0_56, %c0_57] : memref<2x9x128x128xf32, #tpu.memory_space<vmem>>, vector<1x1x128x128xf32>
    %89 = vector.shape_cast %88 : vector<1x1x128x128xf32> to vector<128x128xf32>
    %cst_58 = arith.constant dense<0.000000e+00> : vector<16x128xf32>
    %90 = tpu.matmul %7, %89, %cst_58 {dimension_numbers = #tpu.dot_dimension_numbers<[1], [0], [0], [1], [0, 0, 1, 1], [], []>} : vector<16x128xf32>, vector<128x128xf32>, vector<16x128xf32> -> vector<16x128xf32>
    %91 = vector.extract_strided_slice %10 {offsets = [7, 0], sizes = [1, 128], strides = [1, 1]} : vector<16x128xf32> to vector<1x128xf32>
    %92 = vector.broadcast %91 : vector<1x128xf32> to vector<16x128xf32>
    %93 = arith.addf %90, %92 : vector<16x128xf32>
    %c0_59 = arith.constant 0 : index
    %c8 = arith.constant 8 : index
    %c0_60 = arith.constant 0 : index
    %c0_61 = arith.constant 0 : index
    %94 = vector.load %arg3[%c0_59, %c8, %c0_60, %c0_61] : memref<2x9x128x128xf32, #tpu.memory_space<vmem>>, vector<1x1x128x128xf32>
    %95 = vector.shape_cast %94 : vector<1x1x128x128xf32> to vector<128x128xf32>
    %cst_62 = arith.constant dense<0.000000e+00> : vector<16x128xf32>
    %96 = tpu.matmul %7, %95, %cst_62 {dimension_numbers = #tpu.dot_dimension_numbers<[1], [0], [0], [1], [0, 0, 1, 1], [], []>} : vector<16x128xf32>, vector<128x128xf32>, vector<16x128xf32> -> vector<16x128xf32>
    %97 = vector.extract_strided_slice %10 {offsets = [8, 0], sizes = [1, 128], strides = [1, 1]} : vector<16x128xf32> to vector<1x128xf32>
    %98 = vector.broadcast %97 : vector<1x128xf32> to vector<16x128xf32>
    %99 = arith.addf %96, %98 : vector<16x128xf32>
    %cst_63 = arith.constant dense<0.000000e+00> : vector<16x16xf32>
    %100 = tpu.matmul %87, %93, %cst_63 {dimension_numbers = #tpu.dot_dimension_numbers<[1], [1], [0], [0], [0, 0, 1, 0], [], []>} : vector<16x128xf32>, vector<16x128xf32>, vector<16x16xf32> -> vector<16x16xf32>
    %101 = arith.addf %100, %8 : vector<16x16xf32>
    %cst_64 = arith.constant dense<0xFF800000> : vector<16xf32>
    %102 = vector.multi_reduction <maximumf>, %101, %cst_64 [1] : vector<16x16xf32> to vector<16xf32>
    %103 = vector.shape_cast %102 : vector<16xf32> to vector<16x1xf32>
    %104 = vector.broadcast %103 : vector<16x1xf32> to vector<16x16xf32>
    %105 = arith.subf %101, %104 : vector<16x16xf32>
    %106 = math.exp %105 : vector<16x16xf32>
    %cst_65 = arith.constant dense<0.000000e+00> : vector<16xf32>
    %107 = vector.multi_reduction <add>, %106, %cst_65 [1] : vector<16x16xf32> to vector<16xf32>
    %108 = vector.shape_cast %107 : vector<16xf32> to vector<16x1xf32>
    %109 = tpu.reciprocal %108 {approx = true} : vector<16x1xf32> -> vector<16x1xf32>
    %110 = vector.broadcast %109 : vector<16x1xf32> to vector<16x16xf32>
    %111 = arith.mulf %106, %110 : vector<16x16xf32>
    %cst_66 = arith.constant dense<0.000000e+00> : vector<16x128xf32>
    %112 = tpu.matmul %111, %99, %cst_66 {dimension_numbers = #tpu.dot_dimension_numbers<[1], [0], [0], [1], [0, 0, 1, 1], [], []>} : vector<16x16xf32>, vector<16x128xf32>, vector<16x128xf32> -> vector<16x128xf32>
    %c0_67 = arith.constant 0 : index
    %c2_68 = arith.constant 2 : index
    %c0_69 = arith.constant 0 : index
    %c0_70 = arith.constant 0 : index
    %113 = vector.load %arg4[%c0_67, %c2_68, %c0_69, %c0_70] : memref<2x3x128x128xf32, #tpu.memory_space<vmem>>, vector<1x1x128x128xf32>
    %114 = vector.shape_cast %113 : vector<1x1x128x128xf32> to vector<128x128xf32>
    %cst_71 = arith.constant dense<0.000000e+00> : vector<16x128xf32>
    %115 = tpu.matmul %112, %114, %cst_71 {dimension_numbers = #tpu.dot_dimension_numbers<[1], [0], [0], [1], [0, 0, 1, 1], [], []>} : vector<16x128xf32>, vector<128x128xf32>, vector<16x128xf32> -> vector<16x128xf32>
    %116 = arith.addf %81, %115 : vector<16x128xf32>
    %117 = vector.extract_strided_slice %10 {offsets = [9, 0], sizes = [1, 128], strides = [1, 1]} : vector<16x128xf32> to vector<1x128xf32>
    %118 = vector.broadcast %117 : vector<1x128xf32> to vector<16x128xf32>
    %119 = arith.addf %116, %118 : vector<16x128xf32>
    %120 = arith.addf %7, %119 : vector<16x128xf32>
    %121 = vector.extract_strided_slice %10 {offsets = [12, 0], sizes = [1, 128], strides = [1, 1]} : vector<16x128xf32> to vector<1x128xf32>
    %122 = vector.extract_strided_slice %10 {offsets = [13, 0], sizes = [1, 128], strides = [1, 1]} : vector<16x128xf32> to vector<1x128xf32>
    %cst_72 = arith.constant dense<0.000000e+00> : vector<16xf32>
    %123 = vector.multi_reduction <add>, %120, %cst_72 [1] : vector<16x128xf32> to vector<16xf32>
    %124 = vector.shape_cast %123 : vector<16xf32> to vector<16x1xf32>
    %cst_73 = arith.constant 0.0303030312 : f32
    %125 = vector.broadcast %cst_73 : f32 to vector<16x1xf32>
    %126 = arith.mulf %124, %125 : vector<16x1xf32>
    %127 = vector.broadcast %126 : vector<16x1xf32> to vector<16x128xf32>
    %128 = arith.subf %120, %127 : vector<16x128xf32>
    %129 = vector.broadcast %4 : vector<1x128xf32> to vector<16x128xf32>
    %130 = arith.mulf %128, %129 : vector<16x128xf32>
    %131 = arith.mulf %130, %130 : vector<16x128xf32>
    %cst_74 = arith.constant dense<0.000000e+00> : vector<16xf32>
    %132 = vector.multi_reduction <add>, %131, %cst_74 [1] : vector<16x128xf32> to vector<16xf32>
    %133 = vector.shape_cast %132 : vector<16xf32> to vector<16x1xf32>
    %cst_75 = arith.constant 0.0303030312 : f32
    %134 = vector.broadcast %cst_75 : f32 to vector<16x1xf32>
    %135 = arith.mulf %133, %134 : vector<16x1xf32>
    %cst_76 = arith.constant 9.99999974E-6 : f32
    %136 = vector.broadcast %cst_76 : f32 to vector<16x1xf32>
    %137 = arith.addf %135, %136 : vector<16x1xf32>
    %138 = math.rsqrt %137 : vector<16x1xf32>
    %139 = vector.broadcast %138 : vector<16x1xf32> to vector<16x128xf32>
    %140 = arith.mulf %130, %139 : vector<16x128xf32>
    %141 = vector.broadcast %121 : vector<1x128xf32> to vector<16x128xf32>
    %142 = arith.mulf %140, %141 : vector<16x128xf32>
    %143 = vector.broadcast %122 : vector<1x128xf32> to vector<16x128xf32>
    %144 = arith.addf %142, %143 : vector<16x128xf32>
    %c0_77 = arith.constant 0 : index
    %c0_78 = arith.constant 0 : index
    %c0_79 = arith.constant 0 : index
    %145 = vector.load %arg5[%c0_77, %c0_78, %c0_79] : memref<2x128x128xf32, #tpu.memory_space<vmem>>, vector<1x128x128xf32>
    %146 = vector.shape_cast %145 : vector<1x128x128xf32> to vector<128x128xf32>
    %cst_80 = arith.constant dense<0.000000e+00> : vector<16x128xf32>
    %147 = tpu.matmul %144, %146, %cst_80 {dimension_numbers = #tpu.dot_dimension_numbers<[1], [0], [0], [1], [0, 0, 1, 1], [], []>} : vector<16x128xf32>, vector<128x128xf32>, vector<16x128xf32> -> vector<16x128xf32>
    %148 = vector.extract_strided_slice %10 {offsets = [10, 0], sizes = [1, 128], strides = [1, 1]} : vector<16x128xf32> to vector<1x128xf32>
    %149 = vector.broadcast %148 : vector<1x128xf32> to vector<16x128xf32>
    %150 = arith.addf %147, %149 : vector<16x128xf32>
    %cst_81 = arith.constant 0.000000e+00 : f32
    %151 = vector.broadcast %cst_81 : f32 to vector<16x128xf32>
    %152 = arith.maximumf %150, %151 : vector<16x128xf32>
    %c0_82 = arith.constant 0 : index
    %c0_83 = arith.constant 0 : index
    %c0_84 = arith.constant 0 : index
    %153 = vector.load %arg6[%c0_82, %c0_83, %c0_84] : memref<2x128x128xf32, #tpu.memory_space<vmem>>, vector<1x128x128xf32>
    %154 = vector.shape_cast %153 : vector<1x128x128xf32> to vector<128x128xf32>
    %cst_85 = arith.constant dense<0.000000e+00> : vector<16x128xf32>
    %155 = tpu.matmul %152, %154, %cst_85 {dimension_numbers = #tpu.dot_dimension_numbers<[1], [0], [0], [1], [0, 0, 1, 1], [], []>} : vector<16x128xf32>, vector<128x128xf32>, vector<16x128xf32> -> vector<16x128xf32>
    %156 = vector.extract_strided_slice %10 {offsets = [11, 0], sizes = [1, 128], strides = [1, 1]} : vector<16x128xf32> to vector<1x128xf32>
    %157 = vector.broadcast %156 : vector<1x128xf32> to vector<16x128xf32>
    %158 = arith.addf %155, %157 : vector<16x128xf32>
    %159 = arith.addf %144, %158 : vector<16x128xf32>
    %160 = vector.extract_strided_slice %10 {offsets = [14, 0], sizes = [1, 128], strides = [1, 1]} : vector<16x128xf32> to vector<1x128xf32>
    %161 = vector.extract_strided_slice %10 {offsets = [15, 0], sizes = [1, 128], strides = [1, 1]} : vector<16x128xf32> to vector<1x128xf32>
    %cst_86 = arith.constant dense<0.000000e+00> : vector<16xf32>
    %162 = vector.multi_reduction <add>, %159, %cst_86 [1] : vector<16x128xf32> to vector<16xf32>
    %163 = vector.shape_cast %162 : vector<16xf32> to vector<16x1xf32>
    %cst_87 = arith.constant 0.0303030312 : f32
    %164 = vector.broadcast %cst_87 : f32 to vector<16x1xf32>
    %165 = arith.mulf %163, %164 : vector<16x1xf32>
    %166 = vector.broadcast %165 : vector<16x1xf32> to vector<16x128xf32>
    %167 = arith.subf %159, %166 : vector<16x128xf32>
    %168 = vector.broadcast %4 : vector<1x128xf32> to vector<16x128xf32>
    %169 = arith.mulf %167, %168 : vector<16x128xf32>
    %170 = arith.mulf %169, %169 : vector<16x128xf32>
    %cst_88 = arith.constant dense<0.000000e+00> : vector<16xf32>
    %171 = vector.multi_reduction <add>, %170, %cst_88 [1] : vector<16x128xf32> to vector<16xf32>
    %172 = vector.shape_cast %171 : vector<16xf32> to vector<16x1xf32>
    %cst_89 = arith.constant 0.0303030312 : f32
    %173 = vector.broadcast %cst_89 : f32 to vector<16x1xf32>
    %174 = arith.mulf %172, %173 : vector<16x1xf32>
    %cst_90 = arith.constant 9.99999974E-6 : f32
    %175 = vector.broadcast %cst_90 : f32 to vector<16x1xf32>
    %176 = arith.addf %174, %175 : vector<16x1xf32>
    %177 = math.rsqrt %176 : vector<16x1xf32>
    %178 = vector.broadcast %177 : vector<16x1xf32> to vector<16x128xf32>
    %179 = arith.mulf %169, %178 : vector<16x128xf32>
    %180 = vector.broadcast %160 : vector<1x128xf32> to vector<16x128xf32>
    %181 = arith.mulf %179, %180 : vector<16x128xf32>
    %182 = vector.broadcast %161 : vector<1x128xf32> to vector<16x128xf32>
    %183 = arith.addf %181, %182 : vector<16x128xf32>
    %c1_91 = arith.constant 1 : index
    %c0_92 = arith.constant 0 : index
    %c0_93 = arith.constant 0 : index
    %184 = vector.load %arg7[%c1_91, %c0_92, %c0_93] : memref<2x16x128xf32, #tpu.memory_space<vmem>>, vector<1x16x128xf32>
    %185 = vector.shape_cast %184 : vector<1x16x128xf32> to vector<16x128xf32>
    %cst_94 = arith.constant 0.000000e+00 : f32
    %186 = vector.broadcast %cst_94 : f32 to vector<16x128xf32>
    %c1_95 = arith.constant 1 : index
    %c0_96 = arith.constant 0 : index
    %c0_97 = arith.constant 0 : index
    %c0_98 = arith.constant 0 : index
    %187 = vector.load %arg3[%c1_95, %c0_96, %c0_97, %c0_98] : memref<2x9x128x128xf32, #tpu.memory_space<vmem>>, vector<1x1x128x128xf32>
    %188 = vector.shape_cast %187 : vector<1x1x128x128xf32> to vector<128x128xf32>
    %cst_99 = arith.constant dense<0.000000e+00> : vector<16x128xf32>
    %189 = tpu.matmul %183, %188, %cst_99 {dimension_numbers = #tpu.dot_dimension_numbers<[1], [0], [0], [1], [0, 0, 1, 1], [], []>} : vector<16x128xf32>, vector<128x128xf32>, vector<16x128xf32> -> vector<16x128xf32>
    %190 = vector.extract_strided_slice %185 {offsets = [0, 0], sizes = [1, 128], strides = [1, 1]} : vector<16x128xf32> to vector<1x128xf32>
    %191 = vector.broadcast %190 : vector<1x128xf32> to vector<16x128xf32>
    %192 = arith.addf %189, %191 : vector<16x128xf32>
    %c1_100 = arith.constant 1 : index
    %c1_101 = arith.constant 1 : index
    %c0_102 = arith.constant 0 : index
    %c0_103 = arith.constant 0 : index
    %193 = vector.load %arg3[%c1_100, %c1_101, %c0_102, %c0_103] : memref<2x9x128x128xf32, #tpu.memory_space<vmem>>, vector<1x1x128x128xf32>
    %194 = vector.shape_cast %193 : vector<1x1x128x128xf32> to vector<128x128xf32>
    %cst_104 = arith.constant dense<0.000000e+00> : vector<16x128xf32>
    %195 = tpu.matmul %183, %194, %cst_104 {dimension_numbers = #tpu.dot_dimension_numbers<[1], [0], [0], [1], [0, 0, 1, 1], [], []>} : vector<16x128xf32>, vector<128x128xf32>, vector<16x128xf32> -> vector<16x128xf32>
    %196 = vector.extract_strided_slice %185 {offsets = [1, 0], sizes = [1, 128], strides = [1, 1]} : vector<16x128xf32> to vector<1x128xf32>
    %197 = vector.broadcast %196 : vector<1x128xf32> to vector<16x128xf32>
    %198 = arith.addf %195, %197 : vector<16x128xf32>
    %c1_105 = arith.constant 1 : index
    %c2_106 = arith.constant 2 : index
    %c0_107 = arith.constant 0 : index
    %c0_108 = arith.constant 0 : index
    %199 = vector.load %arg3[%c1_105, %c2_106, %c0_107, %c0_108] : memref<2x9x128x128xf32, #tpu.memory_space<vmem>>, vector<1x1x128x128xf32>
    %200 = vector.shape_cast %199 : vector<1x1x128x128xf32> to vector<128x128xf32>
    %cst_109 = arith.constant dense<0.000000e+00> : vector<16x128xf32>
    %201 = tpu.matmul %183, %200, %cst_109 {dimension_numbers = #tpu.dot_dimension_numbers<[1], [0], [0], [1], [0, 0, 1, 1], [], []>} : vector<16x128xf32>, vector<128x128xf32>, vector<16x128xf32> -> vector<16x128xf32>
    %202 = vector.extract_strided_slice %185 {offsets = [2, 0], sizes = [1, 128], strides = [1, 1]} : vector<16x128xf32> to vector<1x128xf32>
    %203 = vector.broadcast %202 : vector<1x128xf32> to vector<16x128xf32>
    %204 = arith.addf %201, %203 : vector<16x128xf32>
    %cst_110 = arith.constant dense<0.000000e+00> : vector<16x16xf32>
    %205 = tpu.matmul %192, %198, %cst_110 {dimension_numbers = #tpu.dot_dimension_numbers<[1], [1], [0], [0], [0, 0, 1, 0], [], []>} : vector<16x128xf32>, vector<16x128xf32>, vector<16x16xf32> -> vector<16x16xf32>
    %206 = arith.addf %205, %8 : vector<16x16xf32>
    %cst_111 = arith.constant dense<0xFF800000> : vector<16xf32>
    %207 = vector.multi_reduction <maximumf>, %206, %cst_111 [1] : vector<16x16xf32> to vector<16xf32>
    %208 = vector.shape_cast %207 : vector<16xf32> to vector<16x1xf32>
    %209 = vector.broadcast %208 : vector<16x1xf32> to vector<16x16xf32>
    %210 = arith.subf %206, %209 : vector<16x16xf32>
    %211 = math.exp %210 : vector<16x16xf32>
    %cst_112 = arith.constant dense<0.000000e+00> : vector<16xf32>
    %212 = vector.multi_reduction <add>, %211, %cst_112 [1] : vector<16x16xf32> to vector<16xf32>
    %213 = vector.shape_cast %212 : vector<16xf32> to vector<16x1xf32>
    %214 = tpu.reciprocal %213 {approx = true} : vector<16x1xf32> -> vector<16x1xf32>
    %215 = vector.broadcast %214 : vector<16x1xf32> to vector<16x16xf32>
    %216 = arith.mulf %211, %215 : vector<16x16xf32>
    %cst_113 = arith.constant dense<0.000000e+00> : vector<16x128xf32>
    %217 = tpu.matmul %216, %204, %cst_113 {dimension_numbers = #tpu.dot_dimension_numbers<[1], [0], [0], [1], [0, 0, 1, 1], [], []>} : vector<16x16xf32>, vector<16x128xf32>, vector<16x128xf32> -> vector<16x128xf32>
    %c1_114 = arith.constant 1 : index
    %c0_115 = arith.constant 0 : index
    %c0_116 = arith.constant 0 : index
    %c0_117 = arith.constant 0 : index
    %218 = vector.load %arg4[%c1_114, %c0_115, %c0_116, %c0_117] : memref<2x3x128x128xf32, #tpu.memory_space<vmem>>, vector<1x1x128x128xf32>
    %219 = vector.shape_cast %218 : vector<1x1x128x128xf32> to vector<128x128xf32>
    %cst_118 = arith.constant dense<0.000000e+00> : vector<16x128xf32>
    %220 = tpu.matmul %217, %219, %cst_118 {dimension_numbers = #tpu.dot_dimension_numbers<[1], [0], [0], [1], [0, 0, 1, 1], [], []>} : vector<16x128xf32>, vector<128x128xf32>, vector<16x128xf32> -> vector<16x128xf32>
    %221 = arith.addf %186, %220 : vector<16x128xf32>
    %c1_119 = arith.constant 1 : index
    %c3_120 = arith.constant 3 : index
    %c0_121 = arith.constant 0 : index
    %c0_122 = arith.constant 0 : index
    %222 = vector.load %arg3[%c1_119, %c3_120, %c0_121, %c0_122] : memref<2x9x128x128xf32, #tpu.memory_space<vmem>>, vector<1x1x128x128xf32>
    %223 = vector.shape_cast %222 : vector<1x1x128x128xf32> to vector<128x128xf32>
    %cst_123 = arith.constant dense<0.000000e+00> : vector<16x128xf32>
    %224 = tpu.matmul %183, %223, %cst_123 {dimension_numbers = #tpu.dot_dimension_numbers<[1], [0], [0], [1], [0, 0, 1, 1], [], []>} : vector<16x128xf32>, vector<128x128xf32>, vector<16x128xf32> -> vector<16x128xf32>
    %225 = vector.extract_strided_slice %185 {offsets = [3, 0], sizes = [1, 128], strides = [1, 1]} : vector<16x128xf32> to vector<1x128xf32>
    %226 = vector.broadcast %225 : vector<1x128xf32> to vector<16x128xf32>
    %227 = arith.addf %224, %226 : vector<16x128xf32>
    %c1_124 = arith.constant 1 : index
    %c4_125 = arith.constant 4 : index
    %c0_126 = arith.constant 0 : index
    %c0_127 = arith.constant 0 : index
    %228 = vector.load %arg3[%c1_124, %c4_125, %c0_126, %c0_127] : memref<2x9x128x128xf32, #tpu.memory_space<vmem>>, vector<1x1x128x128xf32>
    %229 = vector.shape_cast %228 : vector<1x1x128x128xf32> to vector<128x128xf32>
    %cst_128 = arith.constant dense<0.000000e+00> : vector<16x128xf32>
    %230 = tpu.matmul %183, %229, %cst_128 {dimension_numbers = #tpu.dot_dimension_numbers<[1], [0], [0], [1], [0, 0, 1, 1], [], []>} : vector<16x128xf32>, vector<128x128xf32>, vector<16x128xf32> -> vector<16x128xf32>
    %231 = vector.extract_strided_slice %185 {offsets = [4, 0], sizes = [1, 128], strides = [1, 1]} : vector<16x128xf32> to vector<1x128xf32>
    %232 = vector.broadcast %231 : vector<1x128xf32> to vector<16x128xf32>
    %233 = arith.addf %230, %232 : vector<16x128xf32>
    %c1_129 = arith.constant 1 : index
    %c5_130 = arith.constant 5 : index
    %c0_131 = arith.constant 0 : index
    %c0_132 = arith.constant 0 : index
    %234 = vector.load %arg3[%c1_129, %c5_130, %c0_131, %c0_132] : memref<2x9x128x128xf32, #tpu.memory_space<vmem>>, vector<1x1x128x128xf32>
    %235 = vector.shape_cast %234 : vector<1x1x128x128xf32> to vector<128x128xf32>
    %cst_133 = arith.constant dense<0.000000e+00> : vector<16x128xf32>
    %236 = tpu.matmul %183, %235, %cst_133 {dimension_numbers = #tpu.dot_dimension_numbers<[1], [0], [0], [1], [0, 0, 1, 1], [], []>} : vector<16x128xf32>, vector<128x128xf32>, vector<16x128xf32> -> vector<16x128xf32>
    %237 = vector.extract_strided_slice %185 {offsets = [5, 0], sizes = [1, 128], strides = [1, 1]} : vector<16x128xf32> to vector<1x128xf32>
    %238 = vector.broadcast %237 : vector<1x128xf32> to vector<16x128xf32>
    %239 = arith.addf %236, %238 : vector<16x128xf32>
    %cst_134 = arith.constant dense<0.000000e+00> : vector<16x16xf32>
    %240 = tpu.matmul %227, %233, %cst_134 {dimension_numbers = #tpu.dot_dimension_numbers<[1], [1], [0], [0], [0, 0, 1, 0], [], []>} : vector<16x128xf32>, vector<16x128xf32>, vector<16x16xf32> -> vector<16x16xf32>
    %241 = arith.addf %240, %8 : vector<16x16xf32>
    %cst_135 = arith.constant dense<0xFF800000> : vector<16xf32>
    %242 = vector.multi_reduction <maximumf>, %241, %cst_135 [1] : vector<16x16xf32> to vector<16xf32>
    %243 = vector.shape_cast %242 : vector<16xf32> to vector<16x1xf32>
    %244 = vector.broadcast %243 : vector<16x1xf32> to vector<16x16xf32>
    %245 = arith.subf %241, %244 : vector<16x16xf32>
    %246 = math.exp %245 : vector<16x16xf32>
    %cst_136 = arith.constant dense<0.000000e+00> : vector<16xf32>
    %247 = vector.multi_reduction <add>, %246, %cst_136 [1] : vector<16x16xf32> to vector<16xf32>
    %248 = vector.shape_cast %247 : vector<16xf32> to vector<16x1xf32>
    %249 = tpu.reciprocal %248 {approx = true} : vector<16x1xf32> -> vector<16x1xf32>
    %250 = vector.broadcast %249 : vector<16x1xf32> to vector<16x16xf32>
    %251 = arith.mulf %246, %250 : vector<16x16xf32>
    %cst_137 = arith.constant dense<0.000000e+00> : vector<16x128xf32>
    %252 = tpu.matmul %251, %239, %cst_137 {dimension_numbers = #tpu.dot_dimension_numbers<[1], [0], [0], [1], [0, 0, 1, 1], [], []>} : vector<16x16xf32>, vector<16x128xf32>, vector<16x128xf32> -> vector<16x128xf32>
    %c1_138 = arith.constant 1 : index
    %c1_139 = arith.constant 1 : index
    %c0_140 = arith.constant 0 : index
    %c0_141 = arith.constant 0 : index
    %253 = vector.load %arg4[%c1_138, %c1_139, %c0_140, %c0_141] : memref<2x3x128x128xf32, #tpu.memory_space<vmem>>, vector<1x1x128x128xf32>
    %254 = vector.shape_cast %253 : vector<1x1x128x128xf32> to vector<128x128xf32>
    %cst_142 = arith.constant dense<0.000000e+00> : vector<16x128xf32>
    %255 = tpu.matmul %252, %254, %cst_142 {dimension_numbers = #tpu.dot_dimension_numbers<[1], [0], [0], [1], [0, 0, 1, 1], [], []>} : vector<16x128xf32>, vector<128x128xf32>, vector<16x128xf32> -> vector<16x128xf32>
    %256 = arith.addf %221, %255 : vector<16x128xf32>
    %c1_143 = arith.constant 1 : index
    %c6_144 = arith.constant 6 : index
    %c0_145 = arith.constant 0 : index
    %c0_146 = arith.constant 0 : index
    %257 = vector.load %arg3[%c1_143, %c6_144, %c0_145, %c0_146] : memref<2x9x128x128xf32, #tpu.memory_space<vmem>>, vector<1x1x128x128xf32>
    %258 = vector.shape_cast %257 : vector<1x1x128x128xf32> to vector<128x128xf32>
    %cst_147 = arith.constant dense<0.000000e+00> : vector<16x128xf32>
    %259 = tpu.matmul %183, %258, %cst_147 {dimension_numbers = #tpu.dot_dimension_numbers<[1], [0], [0], [1], [0, 0, 1, 1], [], []>} : vector<16x128xf32>, vector<128x128xf32>, vector<16x128xf32> -> vector<16x128xf32>
    %260 = vector.extract_strided_slice %185 {offsets = [6, 0], sizes = [1, 128], strides = [1, 1]} : vector<16x128xf32> to vector<1x128xf32>
    %261 = vector.broadcast %260 : vector<1x128xf32> to vector<16x128xf32>
    %262 = arith.addf %259, %261 : vector<16x128xf32>
    %c1_148 = arith.constant 1 : index
    %c7_149 = arith.constant 7 : index
    %c0_150 = arith.constant 0 : index
    %c0_151 = arith.constant 0 : index
    %263 = vector.load %arg3[%c1_148, %c7_149, %c0_150, %c0_151] : memref<2x9x128x128xf32, #tpu.memory_space<vmem>>, vector<1x1x128x128xf32>
    %264 = vector.shape_cast %263 : vector<1x1x128x128xf32> to vector<128x128xf32>
    %cst_152 = arith.constant dense<0.000000e+00> : vector<16x128xf32>
    %265 = tpu.matmul %183, %264, %cst_152 {dimension_numbers = #tpu.dot_dimension_numbers<[1], [0], [0], [1], [0, 0, 1, 1], [], []>} : vector<16x128xf32>, vector<128x128xf32>, vector<16x128xf32> -> vector<16x128xf32>
    %266 = vector.extract_strided_slice %185 {offsets = [7, 0], sizes = [1, 128], strides = [1, 1]} : vector<16x128xf32> to vector<1x128xf32>
    %267 = vector.broadcast %266 : vector<1x128xf32> to vector<16x128xf32>
    %268 = arith.addf %265, %267 : vector<16x128xf32>
    %c1_153 = arith.constant 1 : index
    %c8_154 = arith.constant 8 : index
    %c0_155 = arith.constant 0 : index
    %c0_156 = arith.constant 0 : index
    %269 = vector.load %arg3[%c1_153, %c8_154, %c0_155, %c0_156] : memref<2x9x128x128xf32, #tpu.memory_space<vmem>>, vector<1x1x128x128xf32>
    %270 = vector.shape_cast %269 : vector<1x1x128x128xf32> to vector<128x128xf32>
    %cst_157 = arith.constant dense<0.000000e+00> : vector<16x128xf32>
    %271 = tpu.matmul %183, %270, %cst_157 {dimension_numbers = #tpu.dot_dimension_numbers<[1], [0], [0], [1], [0, 0, 1, 1], [], []>} : vector<16x128xf32>, vector<128x128xf32>, vector<16x128xf32> -> vector<16x128xf32>
    %272 = vector.extract_strided_slice %185 {offsets = [8, 0], sizes = [1, 128], strides = [1, 1]} : vector<16x128xf32> to vector<1x128xf32>
    %273 = vector.broadcast %272 : vector<1x128xf32> to vector<16x128xf32>
    %274 = arith.addf %271, %273 : vector<16x128xf32>
    %cst_158 = arith.constant dense<0.000000e+00> : vector<16x16xf32>
    %275 = tpu.matmul %262, %268, %cst_158 {dimension_numbers = #tpu.dot_dimension_numbers<[1], [1], [0], [0], [0, 0, 1, 0], [], []>} : vector<16x128xf32>, vector<16x128xf32>, vector<16x16xf32> -> vector<16x16xf32>
    %276 = arith.addf %275, %8 : vector<16x16xf32>
    %cst_159 = arith.constant dense<0xFF800000> : vector<16xf32>
    %277 = vector.multi_reduction <maximumf>, %276, %cst_159 [1] : vector<16x16xf32> to vector<16xf32>
    %278 = vector.shape_cast %277 : vector<16xf32> to vector<16x1xf32>
    %279 = vector.broadcast %278 : vector<16x1xf32> to vector<16x16xf32>
    %280 = arith.subf %276, %279 : vector<16x16xf32>
    %281 = math.exp %280 : vector<16x16xf32>
    %cst_160 = arith.constant dense<0.000000e+00> : vector<16xf32>
    %282 = vector.multi_reduction <add>, %281, %cst_160 [1] : vector<16x16xf32> to vector<16xf32>
    %283 = vector.shape_cast %282 : vector<16xf32> to vector<16x1xf32>
    %284 = tpu.reciprocal %283 {approx = true} : vector<16x1xf32> -> vector<16x1xf32>
    %285 = vector.broadcast %284 : vector<16x1xf32> to vector<16x16xf32>
    %286 = arith.mulf %281, %285 : vector<16x16xf32>
    %cst_161 = arith.constant dense<0.000000e+00> : vector<16x128xf32>
    %287 = tpu.matmul %286, %274, %cst_161 {dimension_numbers = #tpu.dot_dimension_numbers<[1], [0], [0], [1], [0, 0, 1, 1], [], []>} : vector<16x16xf32>, vector<16x128xf32>, vector<16x128xf32> -> vector<16x128xf32>
    %c1_162 = arith.constant 1 : index
    %c2_163 = arith.constant 2 : index
    %c0_164 = arith.constant 0 : index
    %c0_165 = arith.constant 0 : index
    %288 = vector.load %arg4[%c1_162, %c2_163, %c0_164, %c0_165] : memref<2x3x128x128xf32, #tpu.memory_space<vmem>>, vector<1x1x128x128xf32>
    %289 = vector.shape_cast %288 : vector<1x1x128x128xf32> to vector<128x128xf32>
    %cst_166 = arith.constant dense<0.000000e+00> : vector<16x128xf32>
    %290 = tpu.matmul %287, %289, %cst_166 {dimension_numbers = #tpu.dot_dimension_numbers<[1], [0], [0], [1], [0, 0, 1, 1], [], []>} : vector<16x128xf32>, vector<128x128xf32>, vector<16x128xf32> -> vector<16x128xf32>
    %291 = arith.addf %256, %290 : vector<16x128xf32>
    %292 = vector.extract_strided_slice %185 {offsets = [9, 0], sizes = [1, 128], strides = [1, 1]} : vector<16x128xf32> to vector<1x128xf32>
    %293 = vector.broadcast %292 : vector<1x128xf32> to vector<16x128xf32>
    %294 = arith.addf %291, %293 : vector<16x128xf32>
    %295 = arith.addf %183, %294 : vector<16x128xf32>
    %296 = vector.extract_strided_slice %185 {offsets = [12, 0], sizes = [1, 128], strides = [1, 1]} : vector<16x128xf32> to vector<1x128xf32>
    %297 = vector.extract_strided_slice %185 {offsets = [13, 0], sizes = [1, 128], strides = [1, 1]} : vector<16x128xf32> to vector<1x128xf32>
    %cst_167 = arith.constant dense<0.000000e+00> : vector<16xf32>
    %298 = vector.multi_reduction <add>, %295, %cst_167 [1] : vector<16x128xf32> to vector<16xf32>
    %299 = vector.shape_cast %298 : vector<16xf32> to vector<16x1xf32>
    %cst_168 = arith.constant 0.0303030312 : f32
    %300 = vector.broadcast %cst_168 : f32 to vector<16x1xf32>
    %301 = arith.mulf %299, %300 : vector<16x1xf32>
    %302 = vector.broadcast %301 : vector<16x1xf32> to vector<16x128xf32>
    %303 = arith.subf %295, %302 : vector<16x128xf32>
    %304 = vector.broadcast %4 : vector<1x128xf32> to vector<16x128xf32>
    %305 = arith.mulf %303, %304 : vector<16x128xf32>
    %306 = arith.mulf %305, %305 : vector<16x128xf32>
    %cst_169 = arith.constant dense<0.000000e+00> : vector<16xf32>
    %307 = vector.multi_reduction <add>, %306, %cst_169 [1] : vector<16x128xf32> to vector<16xf32>
    %308 = vector.shape_cast %307 : vector<16xf32> to vector<16x1xf32>
    %cst_170 = arith.constant 0.0303030312 : f32
    %309 = vector.broadcast %cst_170 : f32 to vector<16x1xf32>
    %310 = arith.mulf %308, %309 : vector<16x1xf32>
    %cst_171 = arith.constant 9.99999974E-6 : f32
    %311 = vector.broadcast %cst_171 : f32 to vector<16x1xf32>
    %312 = arith.addf %310, %311 : vector<16x1xf32>
    %313 = math.rsqrt %312 : vector<16x1xf32>
    %314 = vector.broadcast %313 : vector<16x1xf32> to vector<16x128xf32>
    %315 = arith.mulf %305, %314 : vector<16x128xf32>
    %316 = vector.broadcast %296 : vector<1x128xf32> to vector<16x128xf32>
    %317 = arith.mulf %315, %316 : vector<16x128xf32>
    %318 = vector.broadcast %297 : vector<1x128xf32> to vector<16x128xf32>
    %319 = arith.addf %317, %318 : vector<16x128xf32>
    %c1_172 = arith.constant 1 : index
    %c0_173 = arith.constant 0 : index
    %c0_174 = arith.constant 0 : index
    %320 = vector.load %arg5[%c1_172, %c0_173, %c0_174] : memref<2x128x128xf32, #tpu.memory_space<vmem>>, vector<1x128x128xf32>
    %321 = vector.shape_cast %320 : vector<1x128x128xf32> to vector<128x128xf32>
    %cst_175 = arith.constant dense<0.000000e+00> : vector<16x128xf32>
    %322 = tpu.matmul %319, %321, %cst_175 {dimension_numbers = #tpu.dot_dimension_numbers<[1], [0], [0], [1], [0, 0, 1, 1], [], []>} : vector<16x128xf32>, vector<128x128xf32>, vector<16x128xf32> -> vector<16x128xf32>
    %323 = vector.extract_strided_slice %185 {offsets = [10, 0], sizes = [1, 128], strides = [1, 1]} : vector<16x128xf32> to vector<1x128xf32>
    %324 = vector.broadcast %323 : vector<1x128xf32> to vector<16x128xf32>
    %325 = arith.addf %322, %324 : vector<16x128xf32>
    %cst_176 = arith.constant 0.000000e+00 : f32
    %326 = vector.broadcast %cst_176 : f32 to vector<16x128xf32>
    %327 = arith.maximumf %325, %326 : vector<16x128xf32>
    %c1_177 = arith.constant 1 : index
    %c0_178 = arith.constant 0 : index
    %c0_179 = arith.constant 0 : index
    %328 = vector.load %arg6[%c1_177, %c0_178, %c0_179] : memref<2x128x128xf32, #tpu.memory_space<vmem>>, vector<1x128x128xf32>
    %329 = vector.shape_cast %328 : vector<1x128x128xf32> to vector<128x128xf32>
    %cst_180 = arith.constant dense<0.000000e+00> : vector<16x128xf32>
    %330 = tpu.matmul %327, %329, %cst_180 {dimension_numbers = #tpu.dot_dimension_numbers<[1], [0], [0], [1], [0, 0, 1, 1], [], []>} : vector<16x128xf32>, vector<128x128xf32>, vector<16x128xf32> -> vector<16x128xf32>
    %331 = vector.extract_strided_slice %185 {offsets = [11, 0], sizes = [1, 128], strides = [1, 1]} : vector<16x128xf32> to vector<1x128xf32>
    %332 = vector.broadcast %331 : vector<1x128xf32> to vector<16x128xf32>
    %333 = arith.addf %330, %332 : vector<16x128xf32>
    %334 = arith.addf %319, %333 : vector<16x128xf32>
    %335 = vector.extract_strided_slice %185 {offsets = [14, 0], sizes = [1, 128], strides = [1, 1]} : vector<16x128xf32> to vector<1x128xf32>
    %336 = vector.extract_strided_slice %185 {offsets = [15, 0], sizes = [1, 128], strides = [1, 1]} : vector<16x128xf32> to vector<1x128xf32>
    %cst_181 = arith.constant dense<0.000000e+00> : vector<16xf32>
    %337 = vector.multi_reduction <add>, %334, %cst_181 [1] : vector<16x128xf32> to vector<16xf32>
    %338 = vector.shape_cast %337 : vector<16xf32> to vector<16x1xf32>
    %cst_182 = arith.constant 0.0303030312 : f32
    %339 = vector.broadcast %cst_182 : f32 to vector<16x1xf32>
    %340 = arith.mulf %338, %339 : vector<16x1xf32>
    %341 = vector.broadcast %340 : vector<16x1xf32> to vector<16x128xf32>
    %342 = arith.subf %334, %341 : vector<16x128xf32>
    %343 = vector.broadcast %4 : vector<1x128xf32> to vector<16x128xf32>
    %344 = arith.mulf %342, %343 : vector<16x128xf32>
    %345 = arith.mulf %344, %344 : vector<16x128xf32>
    %cst_183 = arith.constant dense<0.000000e+00> : vector<16xf32>
    %346 = vector.multi_reduction <add>, %345, %cst_183 [1] : vector<16x128xf32> to vector<16xf32>
    %347 = vector.shape_cast %346 : vector<16xf32> to vector<16x1xf32>
    %cst_184 = arith.constant 0.0303030312 : f32
    %348 = vector.broadcast %cst_184 : f32 to vector<16x1xf32>
    %349 = arith.mulf %347, %348 : vector<16x1xf32>
    %cst_185 = arith.constant 9.99999974E-6 : f32
    %350 = vector.broadcast %cst_185 : f32 to vector<16x1xf32>
    %351 = arith.addf %349, %350 : vector<16x1xf32>
    %352 = math.rsqrt %351 : vector<16x1xf32>
    %353 = vector.broadcast %352 : vector<16x1xf32> to vector<16x128xf32>
    %354 = arith.mulf %344, %353 : vector<16x128xf32>
    %355 = vector.broadcast %335 : vector<1x128xf32> to vector<16x128xf32>
    %356 = arith.mulf %354, %355 : vector<16x128xf32>
    %357 = vector.broadcast %336 : vector<1x128xf32> to vector<16x128xf32>
    %358 = arith.addf %356, %357 : vector<16x128xf32>
    %c0_186 = arith.constant 0 : index
    %c0_187 = arith.constant 0 : index
    %359 = vector.load %arg8[%c0_186, %c0_187] : memref<16x128xf32, #tpu.memory_space<vmem>>, vector<16x128xf32>
    tpu.vector_store %arg8[%c0_186, %c0_187], %358 {strides = array<i32>} : memref<16x128xf32, #tpu.memory_space<vmem>>, vector<16x128xf32>,
    return
  }
}

</mosaic_0001>

<llo_original>
// kernel: transformer_backbone.1
$region0: #{transformer_backbone.1}
  #allocation0 [shape = 'u32[]', space=smem, size = 0x4, offset = 0x4, fixed_abs, tag = 'smem constant byte address 0x4 - core index']
  #allocation1 [shape = 'u32[144,128]{1,0:T(1,128)}', space=vmem, size = 0x12000, scoped, tag = 'internal scratch']
  %s0 = inlined_call_operand.vmem [shape: f32[16,128], index: 0, kind: input, shape index: {}]
  %s1 = inlined_call_operand.vmem [shape: f32[16,128], index: 1, kind: input, shape index: {}]
  %s2 = inlined_call_operand.vmem [shape: f32[16,16], index: 2, kind: input, shape index: {}]
  %s3 = inlined_call_operand.hbm [shape: f32[2,9,128,128], index: 3, kind: input, shape index: {}]
  %s4 = inlined_call_operand.hbm [shape: f32[2,3,128,128], index: 4, kind: input, shape index: {}]
  %s5 = inlined_call_operand.hbm [shape: f32[2,128,128], index: 5, kind: input, shape index: {}]
  %s6 = inlined_call_operand.hbm [shape: f32[2,128,128], index: 6, kind: input, shape index: {}]
  %s7 = inlined_call_operand.hbm [shape: f32[2,16,128], index: 7, kind: input, shape index: {}]
  %s8 = inlined_call_operand.hbm [shape: f32[16,128], index: 8, kind: output, shape index: {}]
  %s9 = sld [smem:[#allocation0]]
  $region62: #{transformer_backbone.1} parent=0
    _
  %s11 = ssub.s32 1, %s9
  %s12 = scalar_select 0, %s11, %s9
  $region1: #{transformer_backbone.1} parent=0
    #allocation2 [shape = 'u8[1179648]{0}', space=vmem, size = 0x120000, scoped, tag = 'input window, operand 3, single buffered']
    #allocation3 [shape = 's32[1]{0}', space=sflag, size = 0x4, scoped, tag = 'scoped memory for transformer_backbone.1']
    #allocation4 [shape = 's32[1]{0}', space=sflag, size = 0x4, scoped, tag = 'scoped memory for transformer_backbone.1']
    #allocation5 [shape = 'u8[393216]{0}', space=vmem, size = 0x60000, scoped, tag = 'input window, operand 4, single buffered']
    #allocation6 [shape = 's32[1]{0}', space=sflag, size = 0x4, scoped, tag = 'scoped memory for transformer_backbone.1']
    #allocation7 [shape = 'u8[131072]{0}', space=vmem, size = 0x20000, scoped, tag = 'input window, operand 5, single buffered']
    #allocation8 [shape = 'u8[131072]{0}', space=vmem, size = 0x20000, scoped, tag = 'input window, operand 6, single buffered']
    #allocation9 [shape = 's32[1]{0}', space=sflag, size = 0x4, scoped, tag = 'scoped memory for transformer_backbone.1']
    #allocation10 [shape = 'u8[16384]{0}', space=vmem, size = 0x4000, scoped, tag = 'input window, operand 7, single buffered']
    #allocation11 [shape = 'u8[8192]{0}', space=vmem, size = 0x2000, scoped, tag = 'output window, operand 0, single buffered']
    %13 = vsyncpa [#allocation3], 0
    %14 = vsyncpa [#allocation6], 0
    %15 = vsyncpa [#allocation9], 0
    %16 = vsyncpa [#allocation4], 0
    // Predicated region
    $region2: #{transformer_backbone.1} parent=1 // pred_check
      _
    $region3: #{transformer_backbone.1} parent=1 // pred_check_branch
      %18 = sbr.rel (0) target = $region5
    $region4: #{transformer_backbone.1} parent=1 // pred_region
      _
    $region5: #{transformer_backbone.1} parent=1 // pred_fallthru
      _
    // Predicated region
    $region6: #{transformer_backbone.1} parent=1 // pred_check
      _
    $region7: #{transformer_backbone.1} parent=1 // pred_check_branch
      %20 = sbr.rel (0) target = $region9
    $region8: #{transformer_backbone.1} parent=1 // pred_region
      _
    $region9: #{transformer_backbone.1} parent=1 // pred_fallthru
      _
    // Predicated region
    $region10: #{transformer_backbone.1} parent=1 // pred_check
      _
    $region11: #{transformer_backbone.1} parent=1 // pred_check_branch
      %22 = sbr.rel (0) target = $region13
    $region12: #{transformer_backbone.1} parent=1 // pred_region
      _
    $region13: #{transformer_backbone.1} parent=1 // pred_fallthru
      _
    // Predicated region
    $region14: #{transformer_backbone.1} parent=1 // pred_check
      _
    $region15: #{transformer_backbone.1} parent=1 // pred_check_branch
      %24 = sbr.rel (0) target = $region17
    $region16: #{transformer_backbone.1} parent=1 // pred_region
      %s26 = ssub.s32 36864, 36864
      %27 = vsyncadd [#allocation3], %s26
      %s28 = sshll.u32 [#allocation2], 4
      %s29 = int_to_ptr.vmem [resolvable:$true] %s28
      %34 = dma.hbm_to_vmem [thread:$0]  %s3, 36864, %s29, [#allocation3], 128, 128, 8
    $region17: #{transformer_backbone.1} parent=1 // pred_fallthru
      _
    // Predicated region
    $region18: #{transformer_backbone.1} parent=1 // pred_check
      _
    $region19: #{transformer_backbone.1} parent=1 // pred_check_branch
      %36 = sbr.rel (0) target = $region21
    $region20: #{transformer_backbone.1} parent=1 // pred_region
      %s38 = ssub.s32 12288, 12288
      %39 = vsyncadd [#allocation6], %s38
      %s40 = sshll.u32 [#allocation5], 4
      %s41 = int_to_ptr.vmem [resolvable:$true] %s40
      %46 = dma.hbm_to_vmem [thread:$0]  %s4, 12288, %s41, [#allocation6], 128, 128, 8
    $region21: #{transformer_backbone.1} parent=1 // pred_fallthru
      _
    // Predicated region
    $region22: #{transformer_backbone.1} parent=1 // pred_check
      _
    $region23: #{transformer_backbone.1} parent=1 // pred_check_branch
      %48 = sbr.rel (0) target = $region25
    $region24: #{transformer_backbone.1} parent=1 // pred_region
      %s50 = ssub.s32 4096, 4096
      %51 = vsyncadd [#allocation6], %s50
      %s52 = sshll.u32 [#allocation7], 4
      %s53 = int_to_ptr.vmem [resolvable:$true] %s52
      %58 = dma.hbm_to_vmem [thread:$0]  %s5, 4096, %s53, [#allocation6], 128, 128, 8
    $region25: #{transformer_backbone.1} parent=1 // pred_fallthru
      _
    // Predicated region
    $region26: #{transformer_backbone.1} parent=1 // pred_check
      _
    $region27: #{transformer_backbone.1} parent=1 // pred_check_branch
      %60 = sbr.rel (0) target = $region29
    $region28: #{transformer_backbone.1} parent=1 // pred_region
      %s62 = ssub.s32 4096, 4096
      %63 = vsyncadd [#allocation9], %s62
      %s64 = sshll.u32 [#allocation8], 4
      %s65 = int_to_ptr.vmem [resolvable:$true] %s64
      %70 = dma.hbm_to_vmem [thread:$0]  %s6, 4096, %s65, [#allocation9], 128, 128, 8
    $region29: #{transformer_backbone.1} parent=1 // pred_fallthru
      _
    // Predicated region
    $region30: #{transformer_backbone.1} parent=1 // pred_check
      _
    $region31: #{transformer_backbone.1} parent=1 // pred_check_branch
      %72 = sbr.rel (0) target = $region33
    $region32: #{transformer_backbone.1} parent=1 // pred_region
      %s74 = ssub.s32 512, 512
      %75 = vsyncadd [#allocation9], %s74
      %s76 = sshll.u32 [#allocation10], 4
      %s77 = int_to_ptr.vmem [resolvable:$true] %s76
      %82 = dma.hbm_to_vmem [thread:$0]  %s7, 512, %s77, [#allocation9], 128, 128, 8
    $region33: #{transformer_backbone.1} parent=1 // pred_fallthru
      _
    // Predicated region
    $region34: #{transformer_backbone.1} parent=1 // pred_check
      _
    $region35: #{transformer_backbone.1} parent=1 // pred_check_branch
      %84 = sbr.rel (0) target = $region37
    $region36: #{transformer_backbone.1} parent=1 // pred_region
      %85 = dma.done [#allocation3], 36864
    $region37: #{transformer_backbone.1} parent=1 // pred_fallthru
      _
    // Predicated region
    $region38: #{transformer_backbone.1} parent=1 // pred_check
      _
    $region39: #{transformer_backbone.1} parent=1 // pred_check_branch
      %87 = sbr.rel (0) target = $region41
    $region40: #{transformer_backbone.1} parent=1 // pred_region
      %88 = dma.done [#allocation6], 12288
    $region41: #{transformer_backbone.1} parent=1 // pred_fallthru
      _
    // Predicated region
    $region42: #{transformer_backbone.1} parent=1 // pred_check
      _
    $region43: #{transformer_backbone.1} parent=1 // pred_check_branch
      %90 = sbr.rel (0) target = $region45
    $region44: #{transformer_backbone.1} parent=1 // pred_region
      %91 = dma.done [#allocation6], 4096
    $region45: #{transformer_backbone.1} parent=1 // pred_fallthru
      _
    // Predicated region
    $region46: #{transformer_backbone.1} parent=1 // pred_check
      _
    $region47: #{transformer_backbone.1} parent=1 // pred_check_branch
      %93 = sbr.rel (0) target = $region49
    $region48: #{transformer_backbone.1} parent=1 // pred_region
      %94 = dma.done [#allocation9], 4096
    $region49: #{transformer_backbone.1} parent=1 // pred_fallthru
      _
    // Predicated region
    $region50: #{transformer_backbone.1} parent=1 // pred_check
      _
    $region51: #{transformer_backbone.1} parent=1 // pred_check_branch
      %96 = sbr.rel (0) target = $region53
    $region52: #{transformer_backbone.1} parent=1 // pred_region
      %97 = dma.done [#allocation9], 512
    $region53: #{transformer_backbone.1} parent=1 // pred_fallthru
      _
    %v98 = vlaneseq
    %v99 = vand.u32 %v98, 127
    %vm100 = vcmp.lt.s32.totalorder %v99, 33
    %v101 = vsel %vm100, 1, 0
    %v102 = vcvt.s32.f32 %v101
    %v103 = vld [vmem:[%s0] sm:$0xff]
    %v104 = vld [vmem:[%s0 + $0x8] sm:$0xff]
    %v105 = vld [vmem:[%s1] sm:$0xff]
    %v106 = vld [vmem:[%s1 + $0x8] sm:$0xff]
    %v107 = vadd.f32 %v103, %v105
    %v108 = vadd.f32 %v104, %v106
    %v109 = vld [vmem:[%s2] sm:$0xff]
    %v110 = vld [vmem:[%s2 + $0x8] sm:$0xff]
    %v111 = vld [vmem:[#allocation10] sm:$0xff]
    %v112 = vld [vmem:[#allocation10 + $0x8] sm:$0xff]
    %v113 = vld [vmem:[#allocation2] sm:$0xff]
    %v114 = vld [vmem:[#allocation2 + $0x8] sm:$0xff]
    %v115 = vld [vmem:[#allocation2 + $0x10] sm:$0xff]
    %v116 = vld [vmem:[#allocation2 + $0x18] sm:$0xff]
    %v117 = vld [vmem:[#allocation2 + $0x20] sm:$0xff]
    %v118 = vld [vmem:[#allocation2 + $0x28] sm:$0xff]
    %v119 = vld [vmem:[#allocation2 + $0x30] sm:$0xff]
    %v120 = vld [vmem:[#allocation2 + $0x38] sm:$0xff]
    %v121 = vld [vmem:[#allocation2 + $0x40] sm:$0xff]
    %v122 = vld [vmem:[#allocation2 + $0x48] sm:$0xff]
    %v123 = vld [vmem:[#allocation2 + $0x50] sm:$0xff]
    %v124 = vld [vmem:[#allocation2 + $0x58] sm:$0xff]
    %v125 = vld [vmem:[#allocation2 + $0x60] sm:$0xff]
    %v126 = vld [vmem:[#allocation2 + $0x68] sm:$0xff]
    %v127 = vld [vmem:[#allocation2 + $0x70] sm:$0xff]
    %v128 = vld [vmem:[#allocation2 + $0x78] sm:$0xff]
    %v129 = vlaneseq
    %v130 = vshrl.u32 %v129, 7
    %v131 = vsub.s32 0, %v130
    %v132 = vrot.slane %v111, %v131
    %133 = vmatprep.subr.mxu0 0.0
    %134 = vmatpush1.msra.mxu0 %v128
    %135 = vmatprep.subr.mxu0 0.0
    %136 = vmatpush1.msra.mxu0 %v127
    %137 = vmatprep.subr.mxu0 0.0
    %138 = vmatpush1.msra.mxu0 %v126
    %139 = vmatprep.subr.mxu0 0.0
    %140 = vmatpush1.msra.mxu0 %v125
    %141 = vmatprep.subr.mxu0 0.0
    %142 = vmatpush1.msra.mxu0 %v124
    %143 = vmatprep.subr.mxu0 0.0
    %144 = vmatpush1.msra.mxu0 %v123
    %145 = vmatprep.subr.mxu0 0.0
    %146 = vmatpush1.msra.mxu0 %v122
    %147 = vmatprep.subr.mxu0 0.0
    %148 = vmatpush1.msra.mxu0 %v121
    %149 = vmatprep.subr.mxu0 0.0
    %150 = vmatpush1.msra.mxu0 %v120
    %151 = vmatprep.subr.mxu0 0.0
    %152 = vmatpush1.msra.mxu0 %v119
    %153 = vmatprep.subr.mxu0 0.0
    %154 = vmatpush1.msra.mxu0 %v118
    %155 = vmatprep.subr.mxu0 0.0
    %156 = vmatpush1.msra.mxu0 %v117
    %157 = vmatprep.subr.mxu0 0.0
    %158 = vmatpush1.msra.mxu0 %v116
    %159 = vmatprep.subr.mxu0 0.0
    %160 = vmatpush1.msra.mxu0 %v115
    %161 = vmatprep.subr.mxu0 0.0
    %162 = vmatpush1.msra.mxu0 %v114
    %163 = vmatprep.subr.mxu0 0.0
    %164 = vmatpush1.msra.mxu0 %v113
    %165 = vmatprep.subr.mxu0 0.0
    %166 = vmatpush2.msra.mxu0 0.0
    %167 = vmatprep.subr.mxu0 0.0
    %168 = vmatpush2.msra.mxu0 0.0
    %169 = vmatprep.subr.mxu0 0.0
    %170 = vmatpush2.msra.mxu0 0.0
    %171 = vmatprep.subr.mxu0 0.0
    %172 = vmatpush2.msra.mxu0 0.0
    %173 = vmatprep.subr.mxu0 0.0
    %174 = vmatpush2.msra.mxu0 0.0
    %175 = vmatprep.subr.mxu0 0.0
    %176 = vmatpush2.msra.mxu0 0.0
    %177 = vmatprep.subr.mxu0 0.0
    %178 = vmatpush2.msra.mxu0 0.0
    %179 = vmatprep.subr.mxu0 0.0
    %180 = vmatpush2.msra.mxu0 0.0
    %181 = vmatprep.subr.mxu0 0.0
    %182 = vmatpush2.msra.mxu0 0.0
    %183 = vmatprep.subr.mxu0 0.0
    %184 = vmatpush2.msra.mxu0 0.0
    %185 = vmatprep.subr.mxu0 0.0
    %186 = vmatpush2.msra.mxu0 0.0
    %187 = vmatprep.subr.mxu0 0.0
    %188 = vmatpush2.msra.mxu0 0.0
    %189 = vmatprep.subr.mxu0 0.0
    %190 = vmatpush2.msra.mxu0 0.0
    %191 = vmatprep.subr.mxu0 0.0
    %192 = vmatpush2.msra.mxu0 0.0
    %193 = vmatprep.subr.mxu0 0.0
    %194 = vmatpush2.msra.mxu0 0.0
    %195 = vmatprep.subr.mxu0 0.0
    %196 = vmatpush2.msra.mxu0 0.0
    %197 = vmatprep.mubr.f32.mxu0 0.0
    %198 = vmatmul.mubr.f32.gmra.mxu0 %v107
    %v199 = vpop.f32.mrf.mxu0
    %v200 = vadd.f32 %v132, %v199
    %v201 = vpop.f32.mrf.mxu0
    %202 = vmatprep.mubr.f32.mxu0 0.0
    %203 = vmatmul.mubr.f32.gmra.mxu0 %v108
    %v204 = vpop.f32.mrf.mxu0
    %v205 = vadd.f32 %v132, %v204
    %v206 = vpop.f32.mrf.mxu0
    %207 = vdwg.mxu0
    %s208 = scalar_lea.vmem [#allocation2], 128
    %v209 = vld [vmem:[%s208] sm:$0xff]
    %v210 = vld [vmem:[%s208 + $0x8] sm:$0xff]
    %v211 = vld [vmem:[%s208 + $0x10] sm:$0xff]
    %v212 = vld [vmem:[%s208 + $0x18] sm:$0xff]
    %v213 = vld [vmem:[%s208 + $0x20] sm:$0xff]
    %v214 = vld [vmem:[%s208 + $0x28] sm:$0xff]
    %v215 = vld [vmem:[%s208 + $0x30] sm:$0xff]
    %v216 = vld [vmem:[%s208 + $0x38] sm:$0xff]
    %v217 = vld [vmem:[%s208 + $0x40] sm:$0xff]
    %v218 = vld [vmem:[%s208 + $0x48] sm:$0xff]
    %v219 = vld [vmem:[%s208 + $0x50] sm:$0xff]
    %v220 = vld [vmem:[%s208 + $0x58] sm:$0xff]
    %v221 = vld [vmem:[%s208 + $0x60] sm:$0xff]
    %v222 = vld [vmem:[%s208 + $0x68] sm:$0xff]
    %v223 = vld [vmem:[%s208 + $0x70] sm:$0xff]
    %v224 = vld [vmem:[%s208 + $0x78] sm:$0xff]
    %v225 = vlaneseq
    %v226 = vshrl.u32 %v225, 7
    %v227 = vsub.s32 1, %v226
    %v228 = vrot.slane %v111, %v227
    %229 = vmatprep.subr.mxu0 0.0
    %230 = vmatpush1.msra.mxu0 %v224
    %231 = vmatprep.subr.mxu0 0.0
    %232 = vmatpush1.msra.mxu0 %v223
    %233 = vmatprep.subr.mxu0 0.0
    %234 = vmatpush1.msra.mxu0 %v222
    %235 = vmatprep.subr.mxu0 0.0
    %236 = vmatpush1.msra.mxu0 %v221
    %237 = vmatprep.subr.mxu0 0.0
    %238 = vmatpush1.msra.mxu0 %v220
    %239 = vmatprep.subr.mxu0 0.0
    %240 = vmatpush1.msra.mxu0 %v219
    %241 = vmatprep.subr.mxu0 0.0
    %242 = vmatpush1.msra.mxu0 %v218
    %243 = vmatprep.subr.mxu0 0.0
    %244 = vmatpush1.msra.mxu0 %v217
    %245 = vmatprep.subr.mxu0 0.0
    %246 = vmatpush1.msra.mxu0 %v216
    %247 = vmatprep.subr.mxu0 0.0
    %248 = vmatpush1.msra.mxu0 %v215
    %249 = vmatprep.subr.mxu0 0.0
    %250 = vmatpush1.msra.mxu0 %v214
    %251 = vmatprep.subr.mxu0 0.0
    %252 = vmatpush1.msra.mxu0 %v213
    %253 = vmatprep.subr.mxu0 0.0
    %254 = vmatpush1.msra.mxu0 %v212
    %255 = vmatprep.subr.mxu0 0.0
    %256 = vmatpush1.msra.mxu0 %v211
    %257 = vmatprep.subr.mxu0 0.0
    %258 = vmatpush1.msra.mxu0 %v210
    %259 = vmatprep.subr.mxu0 0.0
    %260 = vmatpush1.msra.mxu0 %v209
    %261 = vmatprep.subr.mxu0 0.0
    %262 = vmatpush2.msra.mxu0 0.0
    %263 = vmatprep.subr.mxu0 0.0
    %264 = vmatpush2.msra.mxu0 0.0
    %265 = vmatprep.subr.mxu0 0.0
    %266 = vmatpush2.msra.mxu0 0.0
    %267 = vmatprep.subr.mxu0 0.0
    %268 = vmatpush2.msra.mxu0 0.0
    %269 = vmatprep.subr.mxu0 0.0
    %270 = vmatpush2.msra.mxu0 0.0
    %271 = vmatprep.subr.mxu0 0.0
    %272 = vmatpush2.msra.mxu0 0.0
    %273 = vmatprep.subr.mxu0 0.0
    %274 = vmatpush2.msra.mxu0 0.0
    %275 = vmatprep.subr.mxu0 0.0
    %276 = vmatpush2.msra.mxu0 0.0
    %277 = vmatprep.subr.mxu0 0.0
    %278 = vmatpush2.msra.mxu0 0.0
    %279 = vmatprep.subr.mxu0 0.0
    %280 = vmatpush2.msra.mxu0 0.0
    %281 = vmatprep.subr.mxu0 0.0
    %282 = vmatpush2.msra.mxu0 0.0
    %283 = vmatprep.subr.mxu0 0.0
    %284 = vmatpush2.msra.mxu0 0.0
    %285 = vmatprep.subr.mxu0 0.0
    %286 = vmatpush2.msra.mxu0 0.0
    %287 = vmatprep.subr.mxu0 0.0
    %288 = vmatpush2.msra.mxu0 0.0
    %289 = vmatprep.subr.mxu0 0.0
    %290 = vmatpush2.msra.mxu0 0.0
    %291 = vmatprep.subr.mxu0 0.0
    %292 = vmatpush2.msra.mxu0 0.0
    %293 = vmatprep.mubr.f32.mxu0 0.0
    %294 = vmatmul.mubr.f32.gmra.mxu0 %v107
    %v295 = vpop.f32.mrf.mxu0
    %v296 = vadd.f32 %v228, %v295
    %v297 = vpop.f32.mrf.mxu0
    %298 = vmatprep.mubr.f32.mxu0 0.0
    %299 = vmatmul.mubr.f32.gmra.mxu0 %v108
    %v300 = vpop.f32.mrf.mxu0
    %v301 = vadd.f32 %v228, %v300
    %v302 = vpop.f32.mrf.mxu0
    %303 = vdwg.mxu0
    %s304 = scalar_lea.vmem [#allocation2], 256
    %v305 = vld [vmem:[%s304] sm:$0xff]
    %v306 = vld [vmem:[%s304 + $0x8] sm:$0xff]
    %v307 = vld [vmem:[%s304 + $0x10] sm:$0xff]
    %v308 = vld [vmem:[%s304 + $0x18] sm:$0xff]
    %v309 = vld [vmem:[%s304 + $0x20] sm:$0xff]
    %v310 = vld [vmem:[%s304 + $0x28] sm:$0xff]
    %v311 = vld [vmem:[%s304 + $0x30] sm:$0xff]
    %v312 = vld [vmem:[%s304 + $0x38] sm:$0xff]
    %v313 = vld [vmem:[%s304 + $0x40] sm:$0xff]
    %v314 = vld [vmem:[%s304 + $0x48] sm:$0xff]
    %v315 = vld [vmem:[%s304 + $0x50] sm:$0xff]
    %v316 = vld [vmem:[%s304 + $0x58] sm:$0xff]
    %v317 = vld [vmem:[%s304 + $0x60] sm:$0xff]
    %v318 = vld [vmem:[%s304 + $0x68] sm:$0xff]
    %v319 = vld [vmem:[%s304 + $0x70] sm:$0xff]
    %v320 = vld [vmem:[%s304 + $0x78] sm:$0xff]
    %v321 = vlaneseq
    %v322 = vshrl.u32 %v321, 7
    %v323 = vsub.s32 2, %v322
    %v324 = vrot.slane %v111, %v323
    %325 = vmatprep.subr.mxu0 0.0
    %326 = vmatpush1.msra.mxu0 %v320
    %327 = vmatprep.subr.mxu0 0.0
    %328 = vmatpush1.msra.mxu0 %v319
    %329 = vmatprep.subr.mxu0 0.0
    %330 = vmatpush1.msra.mxu0 %v318
    %331 = vmatprep.subr.mxu0 0.0
    %332 = vmatpush1.msra.mxu0 %v317
    %333 = vmatprep.subr.mxu0 0.0
    %334 = vmatpush1.msra.mxu0 %v316
    %335 = vmatprep.subr.mxu0 0.0
    %336 = vmatpush1.msra.mxu0 %v315
    %337 = vmatprep.subr.mxu0 0.0
    %338 = vmatpush1.msra.mxu0 %v314
    %339 = vmatprep.subr.mxu0 0.0
    %340 = vmatpush1.msra.mxu0 %v313
    %341 = vmatprep.subr.mxu0 0.0
    %342 = vmatpush1.msra.mxu0 %v312
    %343 = vmatprep.subr.mxu0 0.0
    %344 = vmatpush1.msra.mxu0 %v311
    %345 = vmatprep.subr.mxu0 0.0
    %346 = vmatpush1.msra.mxu0 %v310
    %347 = vmatprep.subr.mxu0 0.0
    %348 = vmatpush1.msra.mxu0 %v309
    %349 = vmatprep.subr.mxu0 0.0
    %350 = vmatpush1.msra.mxu0 %v308
    %351 = vmatprep.subr.mxu0 0.0
    %352 = vmatpush1.msra.mxu0 %v307
    %353 = vmatprep.subr.mxu0 0.0
    %354 = vmatpush1.msra.mxu0 %v306
    %355 = vmatprep.subr.mxu0 0.0
    %356 = vmatpush1.msra.mxu0 %v305
    %357 = vmatprep.subr.mxu0 0.0
    %358 = vmatpush2.msra.mxu0 0.0
    %359 = vmatprep.subr.mxu0 0.0
    %360 = vmatpush2.msra.mxu0 0.0
    %361 = vmatprep.subr.mxu0 0.0
    %362 = vmatpush2.msra.mxu0 0.0
    %363 = vmatprep.subr.mxu0 0.0
    %364 = vmatpush2.msra.mxu0 0.0
    %365 = vmatprep.subr.mxu0 0.0
    %366 = vmatpush2.msra.mxu0 0.0
    %367 = vmatprep.subr.mxu0 0.0
    %368 = vmatpush2.msra.mxu0 0.0
    %369 = vmatprep.subr.mxu0 0.0
    %370 = vmatpush2.msra.mxu0 0.0
    %371 = vmatprep.subr.mxu0 0.0
    %372 = vmatpush2.msra.mxu0 0.0
    %373 = vmatprep.subr.mxu0 0.0
    %374 = vmatpush2.msra.mxu0 0.0
    %375 = vmatprep.subr.mxu0 0.0
    %376 = vmatpush2.msra.mxu0 0.0
    %377 = vmatprep.subr.mxu0 0.0
    %378 = vmatpush2.msra.mxu0 0.0
    %379 = vmatprep.subr.mxu0 0.0
    %380 = vmatpush2.msra.mxu0 0.0
    %381 = vmatprep.subr.mxu0 0.0
    %382 = vmatpush2.msra.mxu0 0.0
    %383 = vmatprep.subr.mxu0 0.0
    %384 = vmatpush2.msra.mxu0 0.0
    %385 = vmatprep.subr.mxu0 0.0
    %386 = vmatpush2.msra.mxu0 0.0
    %387 = vmatprep.subr.mxu0 0.0
    %388 = vmatpush2.msra.mxu0 0.0
    %389 = vmatprep.mubr.f32.mxu0 0.0
    %390 = vmatmul.mubr.f32.gmra.mxu0 %v107
    %v391 = vpop.f32.mrf.mxu0
    %v392 = vadd.f32 %v324, %v391
    %v393 = vpop.f32.mrf.mxu0
    %394 = vmatprep.mubr.f32.mxu0 0.0
    %395 = vmatmul.mubr.f32.gmra.mxu0 %v108
    %v396 = vpop.f32.mrf.mxu0
    %v397 = vadd.f32 %v324, %v396
    %v398 = vpop.f32.mrf.mxu0
    %399 = vdwg.mxu0
    %400 = vmatprep.subr.mxu0 0.0
    %401 = vmatpush1.xpose.msra.mxu0 0.0
    %402 = vmatprep.subr.mxu0 0.0
    %403 = vmatpush1.xpose.msra.mxu0 0.0
    %404 = vmatprep.subr.mxu0 0.0
    %405 = vmatpush1.xpose.msra.mxu0 0.0
    %406 = vmatprep.subr.mxu0 0.0
    %407 = vmatpush1.xpose.msra.mxu0 0.0
    %408 = vmatprep.subr.mxu0 0.0
    %409 = vmatpush1.xpose.msra.mxu0 0.0
    %410 = vmatprep.subr.mxu0 0.0
    %411 = vmatpush1.xpose.msra.mxu0 0.0
    %412 = vmatprep.subr.mxu0 0.0
    %413 = vmatpush1.xpose.msra.mxu0 0.0
    %414 = vmatprep.subr.mxu0 0.0
    %415 = vmatpush1.xpose.msra.mxu0 0.0
    %416 = vmatprep.subr.mxu0 0.0
    %417 = vmatpush1.xpose.msra.mxu0 0.0
    %418 = vmatprep.subr.mxu0 0.0
    %419 = vmatpush1.xpose.msra.mxu0 0.0
    %420 = vmatprep.subr.mxu0 0.0
    %421 = vmatpush1.xpose.msra.mxu0 0.0
    %422 = vmatprep.subr.mxu0 0.0
    %423 = vmatpush1.xpose.msra.mxu0 0.0
    %424 = vmatprep.subr.mxu0 0.0
    %425 = vmatpush1.xpose.msra.mxu0 0.0
    %426 = vmatprep.subr.mxu0 0.0
    %427 = vmatpush1.xpose.msra.mxu0 0.0
    %428 = vmatprep.subr.mxu0 0.0
    %429 = vmatpush1.xpose.msra.mxu0 %v301
    %430 = vmatprep.subr.mxu0 0.0
    %431 = vmatpush1.xpose.msra.mxu0 %v296
    %432 = vmatprep.subr.mxu0 0.0
    %433 = vmatpush2.xpose.msra.mxu0 0.0
    %434 = vmatprep.subr.mxu0 0.0
    %435 = vmatpush2.xpose.msra.mxu0 0.0
    %436 = vmatprep.subr.mxu0 0.0
    %437 = vmatpush2.xpose.msra.mxu0 0.0
    %438 = vmatprep.subr.mxu0 0.0
    %439 = vmatpush2.xpose.msra.mxu0 0.0
    %440 = vmatprep.subr.mxu0 0.0
    %441 = vmatpush2.xpose.msra.mxu0 0.0
    %442 = vmatprep.subr.mxu0 0.0
    %443 = vmatpush2.xpose.msra.mxu0 0.0
    %444 = vmatprep.subr.mxu0 0.0
    %445 = vmatpush2.xpose.msra.mxu0 0.0
    %446 = vmatprep.subr.mxu0 0.0
    %447 = vmatpush2.xpose.msra.mxu0 0.0
    %448 = vmatprep.subr.mxu0 0.0
    %449 = vmatpush2.xpose.msra.mxu0 0.0
    %450 = vmatprep.subr.mxu0 0.0
    %451 = vmatpush2.xpose.msra.mxu0 0.0
    %452 = vmatprep.subr.mxu0 0.0
    %453 = vmatpush2.xpose.msra.mxu0 0.0
    %454 = vmatprep.subr.mxu0 0.0
    %455 = vmatpush2.xpose.msra.mxu0 0.0
    %456 = vmatprep.subr.mxu0 0.0
    %457 = vmatpush2.xpose.msra.mxu0 0.0
    %458 = vmatprep.subr.mxu0 0.0
    %459 = vmatpush2.xpose.msra.mxu0 0.0
    %460 = vmatprep.subr.mxu0 0.0
    %461 = vmatpush2.xpose.msra.mxu0 0.0
    %462 = vmatprep.subr.mxu0 0.0
    %463 = vmatpush2.xpose.msra.mxu0 0.0
    %464 = vmatprep.mubr.f32.mxu0 0.0
    %465 = vmatmul.mubr.f32.gmra.mxu0 %v200
    %v466 = vpop.f32.mrf.mxu0
    %v467 = vadd.f32 %v109, %v466
    %v468 = vpop.f32.mrf.mxu0
    %469 = vmatprep.mubr.f32.mxu0 0.0
    %470 = vmatmul.mubr.f32.gmra.mxu0 %v205
    %v471 = vpop.f32.mrf.mxu0
    %v472 = vadd.f32 %v110, %v471
    %v473 = vpop.f32.mrf.mxu0
    %474 = vdwg.mxu0
    %vm475 = vcmask 130048
    %v476 = vsel %vm475, %v467, -inf
    %477 = vmax.xlane.f32.xlu0 %v476
    %v478 = vpop.xlane.xlu0 %477
    %v479 = vsel %vm475, %v472, -inf
    %480 = vmax.xlane.f32.xlu0 %v479
    %v481 = vpop.xlane.xlu0 %480
    %v482 = vsub.f32 %v467, %v478
    %v483 = vsub.f32 %v472, %v481
    %v484 = vmul.f32 %v482, 1.442695
    %v485 = vpow.pop %v484
    %v486 = vmul.f32 %v483, 1.442695
    %v487 = vpow.pop %v486
    %v488 = vsel %vm475, %v485, 0.0
    %489 = vadd.xlane.f32.xlu0 %v488
    %v490 = vpop.xlane.xlu0 %489
    %v491 = vsel %vm475, %v487, 0.0
    %492 = vadd.xlane.f32.xlu0 %v491
    %v493 = vpop.xlane.xlu0 %492
    %v494 = vrcp.pop %v490
    %v495 = vrcp.pop %v493
    %v496 = vmul.f32 %v485, %v494
    %v497 = vmul.f32 %v487, %v495
    %v499 = vsel %vm475, %v496, 0
    %v502 = vsel %vm475, %v497, 0
    %504 = vmatprep.subr.mxu0 0.0
    %505 = vmatpush1.msra.mxu0 0.0
    %506 = vmatprep.subr.mxu0 0.0
    %507 = vmatpush1.msra.mxu0 0.0
    %508 = vmatprep.subr.mxu0 0.0
    %509 = vmatpush1.msra.mxu0 0.0
    %510 = vmatprep.subr.mxu0 0.0
    %511 = vmatpush1.msra.mxu0 0.0
    %512 = vmatprep.subr.mxu0 0.0
    %513 = vmatpush1.msra.mxu0 0.0
    %514 = vmatprep.subr.mxu0 0.0
    %515 = vmatpush1.msra.mxu0 0.0
    %516 = vmatprep.subr.mxu0 0.0
    %517 = vmatpush1.msra.mxu0 0.0
    %518 = vmatprep.subr.mxu0 0.0
    %519 = vmatpush1.msra.mxu0 0.0
    %520 = vmatprep.subr.mxu0 0.0
    %521 = vmatpush1.msra.mxu0 0.0
    %522 = vmatprep.subr.mxu0 0.0
    %523 = vmatpush1.msra.mxu0 0.0
    %524 = vmatprep.subr.mxu0 0.0
    %525 = vmatpush1.msra.mxu0 0.0
    %526 = vmatprep.subr.mxu0 0.0
    %527 = vmatpush1.msra.mxu0 0.0
    %528 = vmatprep.subr.mxu0 0.0
    %529 = vmatpush1.msra.mxu0 0.0
    %530 = vmatprep.subr.mxu0 0.0
    %531 = vmatpush1.msra.mxu0 0.0
    %532 = vmatprep.subr.mxu0 0.0
    %533 = vmatpush1.msra.mxu0 %v397
    %534 = vmatprep.subr.mxu0 0.0
    %535 = vmatpush1.msra.mxu0 %v392
    %536 = vmatprep.subr.mxu0 0.0
    %537 = vmatpush2.msra.mxu0 0.0
    %538 = vmatprep.subr.mxu0 0.0
    %539 = vmatpush2.msra.mxu0 0.0
    %540 = vmatprep.subr.mxu0 0.0
    %541 = vmatpush2.msra.mxu0 0.0
    %542 = vmatprep.subr.mxu0 0.0
    %543 = vmatpush2.msra.mxu0 0.0
    %544 = vmatprep.subr.mxu0 0.0
    %545 = vmatpush2.msra.mxu0 0.0
    %546 = vmatprep.subr.mxu0 0.0
    %547 = vmatpush2.msra.mxu0 0.0
    %548 = vmatprep.subr.mxu0 0.0
    %549 = vmatpush2.msra.mxu0 0.0
    %550 = vmatprep.subr.mxu0 0.0
    %551 = vmatpush2.msra.mxu0 0.0
    %552 = vmatprep.subr.mxu0 0.0
    %553 = vmatpush2.msra.mxu0 0.0
    %554 = vmatprep.subr.mxu0 0.0
    %555 = vmatpush2.msra.mxu0 0.0
    %556 = vmatprep.subr.mxu0 0.0
    %557 = vmatpush2.msra.mxu0 0.0
    %558 = vmatprep.subr.mxu0 0.0
    %559 = vmatpush2.msra.mxu0 0.0
    %560 = vmatprep.subr.mxu0 0.0
    %561 = vmatpush2.msra.mxu0 0.0
    %562 = vmatprep.subr.mxu0 0.0
    %563 = vmatpush2.msra.mxu0 0.0
    %564 = vmatprep.subr.mxu0 0.0
    %565 = vmatpush2.msra.mxu0 0.0
    %566 = vmatprep.subr.mxu0 0.0
    %567 = vmatpush2.msra.mxu0 0.0
    %568 = vmatprep.mubr.f32.mxu0 0.0
    %569 = vmatmul.mubr.f32.gmra.mxu0 %v499
    %v570 = vpop.f32.mrf.mxu0
    %v571 = vadd.f32 0.0, %v570
    %v572 = vpop.f32.mrf.mxu0
    %573 = vmatprep.mubr.f32.mxu0 0.0
    %574 = vmatmul.mubr.f32.gmra.mxu0 %v502
    %v575 = vpop.f32.mrf.mxu0
    %v576 = vadd.f32 0.0, %v575
    %v577 = vpop.f32.mrf.mxu0
    %578 = vdwg.mxu0
    %v579 = vld [vmem:[#allocation5] sm:$0xff]
    %v580 = vld [vmem:[#allocation5 + $0x8] sm:$0xff]
    %v581 = vld [vmem:[#allocation5 + $0x10] sm:$0xff]
    %v582 = vld [vmem:[#allocation5 + $0x18] sm:$0xff]
    %v583 = vld [vmem:[#allocation5 + $0x20] sm:$0xff]
    %v584 = vld [vmem:[#allocation5 + $0x28] sm:$0xff]
    %v585 = vld [vmem:[#allocation5 + $0x30] sm:$0xff]
    %v586 = vld [vmem:[#allocation5 + $0x38] sm:$0xff]
    %v587 = vld [vmem:[#allocation5 + $0x40] sm:$0xff]
    %v588 = vld [vmem:[#allocation5 + $0x48] sm:$0xff]
    %v589 = vld [vmem:[#allocation5 + $0x50] sm:$0xff]
    %v590 = vld [vmem:[#allocation5 + $0x58] sm:$0xff]
    %v591 = vld [vmem:[#allocation5 + $0x60] sm:$0xff]
    %v592 = vld [vmem:[#allocation5 + $0x68] sm:$0xff]
    %v593 = vld [vmem:[#allocation5 + $0x70] sm:$0xff]
    %v594 = vld [vmem:[#allocation5 + $0x78] sm:$0xff]
    %s595 = scalar_lea.vmem [#allocation2], 384
    %v596 = vld [vmem:[%s595] sm:$0xff]
    %v597 = vld [vmem:[%s595 + $0x8] sm:$0xff]
    %v598 = vld [vmem:[%s595 + $0x10] sm:$0xff]
    %v599 = vld [vmem:[%s595 + $0x18] sm:$0xff]
    %v600 = vld [vmem:[%s595 + $0x20] sm:$0xff]
    %v601 = vld [vmem:[%s595 + $0x28] sm:$0xff]
    %v602 = vld [vmem:[%s595 + $0x30] sm:$0xff]
    %v603 = vld [vmem:[%s595 + $0x38] sm:$0xff]
    %v604 = vld [vmem:[%s595 + $0x40] sm:$0xff]
    %v605 = vld [vmem:[%s595 + $0x48] sm:$0xff]
    %v606 = vld [vmem:[%s595 + $0x50] sm:$0xff]
    %v607 = vld [vmem:[%s595 + $0x58] sm:$0xff]
    %v608 = vld [vmem:[%s595 + $0x60] sm:$0xff]
    %v609 = vld [vmem:[%s595 + $0x68] sm:$0xff]
    %v610 = vld [vmem:[%s595 + $0x70] sm:$0xff]
    %v611 = vld [vmem:[%s595 + $0x78] sm:$0xff]
    %v612 = vlaneseq
    %v613 = vshrl.u32 %v612, 7
    %v614 = vsub.s32 3, %v613
    %v615 = vrot.slane %v111, %v614
    %616 = vmatprep.subr.mxu0 0.0
    %617 = vmatpush1.msra.mxu0 %v611
    %618 = vmatprep.subr.mxu0 0.0
    %619 = vmatpush1.msra.mxu0 %v610
    %620 = vmatprep.subr.mxu0 0.0
    %621 = vmatpush1.msra.mxu0 %v609
    %622 = vmatprep.subr.mxu0 0.0
    %623 = vmatpush1.msra.mxu0 %v608
    %624 = vmatprep.subr.mxu0 0.0
    %625 = vmatpush1.msra.mxu0 %v607
    %626 = vmatprep.subr.mxu0 0.0
    %627 = vmatpush1.msra.mxu0 %v606
    %628 = vmatprep.subr.mxu0 0.0
    %629 = vmatpush1.msra.mxu0 %v605
    %630 = vmatprep.subr.mxu0 0.0
    %631 = vmatpush1.msra.mxu0 %v604
    %632 = vmatprep.subr.mxu0 0.0
    %633 = vmatpush1.msra.mxu0 %v603
    %634 = vmatprep.subr.mxu0 0.0
    %635 = vmatpush1.msra.mxu0 %v602
    %636 = vmatprep.subr.mxu0 0.0
    %637 = vmatpush1.msra.mxu0 %v601
    %638 = vmatprep.subr.mxu0 0.0
    %639 = vmatpush1.msra.mxu0 %v600
    %640 = vmatprep.subr.mxu0 0.0
    %641 = vmatpush1.msra.mxu0 %v599
    %642 = vmatprep.subr.mxu0 0.0
    %643 = vmatpush1.msra.mxu0 %v598
    %644 = vmatprep.subr.mxu0 0.0
    %645 = vmatpush1.msra.mxu0 %v597
    %646 = vmatprep.subr.mxu0 0.0
    %647 = vmatpush1.msra.mxu0 %v596
    %648 = vmatprep.subr.mxu0 0.0
    %649 = vmatpush2.msra.mxu0 0.0
    %650 = vmatprep.subr.mxu0 0.0
    %651 = vmatpush2.msra.mxu0 0.0
    %652 = vmatprep.subr.mxu0 0.0
    %653 = vmatpush2.msra.mxu0 0.0
    %654 = vmatprep.subr.mxu0 0.0
    %655 = vmatpush2.msra.mxu0 0.0
    %656 = vmatprep.subr.mxu0 0.0
    %657 = vmatpush2.msra.mxu0 0.0
    %658 = vmatprep.subr.mxu0 0.0
    %659 = vmatpush2.msra.mxu0 0.0
    %660 = vmatprep.subr.mxu0 0.0
    %661 = vmatpush2.msra.mxu0 0.0
    %662 = vmatprep.subr.mxu0 0.0
    %663 = vmatpush2.msra.mxu0 0.0
    %664 = vmatprep.subr.mxu0 0.0
    %665 = vmatpush2.msra.mxu0 0.0
    %666 = vmatprep.subr.mxu0 0.0
    %667 = vmatpush2.msra.mxu0 0.0
    %668 = vmatprep.subr.mxu0 0.0
    %669 = vmatpush2.msra.mxu0 0.0
    %670 = vmatprep.subr.mxu0 0.0
    %671 = vmatpush2.msra.mxu0 0.0
    %672 = vmatprep.subr.mxu0 0.0
    %673 = vmatpush2.msra.mxu0 0.0
    %674 = vmatprep.subr.mxu0 0.0
    %675 = vmatpush2.msra.mxu0 0.0
    %676 = vmatprep.subr.mxu0 0.0
    %677 = vmatpush2.msra.mxu0 0.0
    %678 = vmatprep.subr.mxu0 0.0
    %679 = vmatpush2.msra.mxu0 0.0
    %680 = vmatprep.mubr.f32.mxu0 0.0
    %681 = vmatmul.mubr.f32.gmra.mxu0 %v107
    %v682 = vpop.f32.mrf.mxu0
    %v683 = vadd.f32 %v615, %v682
    %v684 = vpop.f32.mrf.mxu0
    %685 = vmatprep.mubr.f32.mxu0 0.0
    %686 = vmatmul.mubr.f32.gmra.mxu0 %v108
    %v687 = vpop.f32.mrf.mxu0
    %v688 = vadd.f32 %v615, %v687
    %v689 = vpop.f32.mrf.mxu0
    %690 = vdwg.mxu0
    %s691 = scalar_lea.vmem [#allocation2], 512
    %v692 = vld [vmem:[%s691] sm:$0xff]
    %v693 = vld [vmem:[%s691 + $0x8] sm:$0xff]
    %v694 = vld [vmem:[%s691 + $0x10] sm:$0xff]
    %v695 = vld [vmem:[%s691 + $0x18] sm:$0xff]
    %v696 = vld [vmem:[%s691 + $0x20] sm:$0xff]
    %v697 = vld [vmem:[%s691 + $0x28] sm:$0xff]
    %v698 = vld [vmem:[%s691 + $0x30] sm:$0xff]
    %v699 = vld [vmem:[%s691 + $0x38] sm:$0xff]
    %v700 = vld [vmem:[%s691 + $0x40] sm:$0xff]
    %v701 = vld [vmem:[%s691 + $0x48] sm:$0xff]
    %v702 = vld [vmem:[%s691 + $0x50] sm:$0xff]
    %v703 = vld [vmem:[%s691 + $0x58] sm:$0xff]
    %v704 = vld [vmem:[%s691 + $0x60] sm:$0xff]
    %v705 = vld [vmem:[%s691 + $0x68] sm:$0xff]
    %v706 = vld [vmem:[%s691 + $0x70] sm:$0xff]
    %v707 = vld [vmem:[%s691 + $0x78] sm:$0xff]
    %v708 = vlaneseq
    %v709 = vshrl.u32 %v708, 7
    %v710 = vsub.s32 4, %v709
    %v711 = vrot.slane %v111, %v710
    %712 = vmatprep.subr.mxu0 0.0
    %713 = vmatpush1.msra.mxu0 %v707
    %714 = vmatprep.subr.mxu0 0.0
    %715 = vmatpush1.msra.mxu0 %v706
    %716 = vmatprep.subr.mxu0 0.0
    %717 = vmatpush1.msra.mxu0 %v705
    %718 = vmatprep.subr.mxu0 0.0
    %719 = vmatpush1.msra.mxu0 %v704
    %720 = vmatprep.subr.mxu0 0.0
    %721 = vmatpush1.msra.mxu0 %v703
    %722 = vmatprep.subr.mxu0 0.0
    %723 = vmatpush1.msra.mxu0 %v702
    %724 = vmatprep.subr.mxu0 0.0
    %725 = vmatpush1.msra.mxu0 %v701
    %726 = vmatprep.subr.mxu0 0.0
    %727 = vmatpush1.msra.mxu0 %v700
    %728 = vmatprep.subr.mxu0 0.0
    %729 = vmatpush1.msra.mxu0 %v699
    %730 = vmatprep.subr.mxu0 0.0
    %731 = vmatpush1.msra.mxu0 %v698
    %732 = vmatprep.subr.mxu0 0.0
    %733 = vmatpush1.msra.mxu0 %v697
    %734 = vmatprep.subr.mxu0 0.0
    %735 = vmatpush1.msra.mxu0 %v696
    %736 = vmatprep.subr.mxu0 0.0
    %737 = vmatpush1.msra.mxu0 %v695
    %738 = vmatprep.subr.mxu0 0.0
    %739 = vmatpush1.msra.mxu0 %v694
    %740 = vmatprep.subr.mxu0 0.0
    %741 = vmatpush1.msra.mxu0 %v693
    %742 = vmatprep.subr.mxu0 0.0
    %743 = vmatpush1.msra.mxu0 %v692
    %744 = vmatprep.subr.mxu0 0.0
    %745 = vmatpush2.msra.mxu0 0.0
    %746 = vmatprep.subr.mxu0 0.0
    %747 = vmatpush2.msra.mxu0 0.0
    %748 = vmatprep.subr.mxu0 0.0
    %749 = vmatpush2.msra.mxu0 0.0
    %750 = vmatprep.subr.mxu0 0.0
    %751 = vmatpush2.msra.mxu0 0.0
    %752 = vmatprep.subr.mxu0 0.0
    %753 = vmatpush2.msra.mxu0 0.0
    %754 = vmatprep.subr.mxu0 0.0
    %755 = vmatpush2.msra.mxu0 0.0
    %756 = vmatprep.subr.mxu0 0.0
    %757 = vmatpush2.msra.mxu0 0.0
    %758 = vmatprep.subr.mxu0 0.0
    %759 = vmatpush2.msra.mxu0 0.0
    %760 = vmatprep.subr.mxu0 0.0
    %761 = vmatpush2.msra.mxu0 0.0
    %762 = vmatprep.subr.mxu0 0.0
    %763 = vmatpush2.msra.mxu0 0.0
    %764 = vmatprep.subr.mxu0 0.0
    %765 = vmatpush2.msra.mxu0 0.0
    %766 = vmatprep.subr.mxu0 0.0
    %767 = vmatpush2.msra.mxu0 0.0
    %768 = vmatprep.subr.mxu0 0.0
    %769 = vmatpush2.msra.mxu0 0.0
    %770 = vmatprep.subr.mxu0 0.0
    %771 = vmatpush2.msra.mxu0 0.0
    %772 = vmatprep.subr.mxu0 0.0
    %773 = vmatpush2.msra.mxu0 0.0
    %774 = vmatprep.subr.mxu0 0.0
    %775 = vmatpush2.msra.mxu0 0.0
    %776 = vmatprep.mubr.f32.mxu0 0.0
    %777 = vmatmul.mubr.f32.gmra.mxu0 %v107
    %v778 = vpop.f32.mrf.mxu0
    %v779 = vadd.f32 %v711, %v778
    %v780 = vpop.f32.mrf.mxu0
    %781 = vmatprep.mubr.f32.mxu0 0.0
    %782 = vmatmul.mubr.f32.gmra.mxu0 %v108
    %v783 = vpop.f32.mrf.mxu0
    %v784 = vadd.f32 %v711, %v783
    %v785 = vpop.f32.mrf.mxu0
    %786 = vdwg.mxu0
    %s787 = scalar_lea.vmem [#allocation2], 640
    %v788 = vld [vmem:[%s787] sm:$0xff]
    %v789 = vld [vmem:[%s787 + $0x8] sm:$0xff]
    %v790 = vld [vmem:[%s787 + $0x10] sm:$0xff]
    %v791 = vld [vmem:[%s787 + $0x18] sm:$0xff]
    %v792 = vld [vmem:[%s787 + $0x20] sm:$0xff]
    %v793 = vld [vmem:[%s787 + $0x28] sm:$0xff]
    %v794 = vld [vmem:[%s787 + $0x30] sm:$0xff]
    %v795 = vld [vmem:[%s787 + $0x38] sm:$0xff]
    %v796 = vld [vmem:[%s787 + $0x40] sm:$0xff]
    %v797 = vld [vmem:[%s787 + $0x48] sm:$0xff]
    %v798 = vld [vmem:[%s787 + $0x50] sm:$0xff]
    %v799 = vld [vmem:[%s787 + $0x58] sm:$0xff]
    %v800 = vld [vmem:[%s787 + $0x60] sm:$0xff]
    %v801 = vld [vmem:[%s787 + $0x68] sm:$0xff]
    %v802 = vld [vmem:[%s787 + $0x70] sm:$0xff]
    %v803 = vld [vmem:[%s787 + $0x78] sm:$0xff]
    %v804 = vlaneseq
    %v805 = vshrl.u32 %v804, 7
    %v806 = vsub.s32 5, %v805
    %v807 = vrot.slane %v111, %v806
    %808 = vmatprep.subr.mxu0 0.0
    %809 = vmatpush1.msra.mxu0 %v803
    %810 = vmatprep.subr.mxu0 0.0
    %811 = vmatpush1.msra.mxu0 %v802
    %812 = vmatprep.subr.mxu0 0.0
    %813 = vmatpush1.msra.mxu0 %v801
    %814 = vmatprep.subr.mxu0 0.0
    %815 = vmatpush1.msra.mxu0 %v800
    %816 = vmatprep.subr.mxu0 0.0
    %817 = vmatpush1.msra.mxu0 %v799
    %818 = vmatprep.subr.mxu0 0.0
    %819 = vmatpush1.msra.mxu0 %v798
    %820 = vmatprep.subr.mxu0 0.0
    %821 = vmatpush1.msra.mxu0 %v797
    %822 = vmatprep.subr.mxu0 0.0
    %823 = vmatpush1.msra.mxu0 %v796
    %824 = vmatprep.subr.mxu0 0.0
    %825 = vmatpush1.msra.mxu0 %v795
    %826 = vmatprep.subr.mxu0 0.0
    %827 = vmatpush1.msra.mxu0 %v794
    %828 = vmatprep.subr.mxu0 0.0
    %829 = vmatpush1.msra.mxu0 %v793
    %830 = vmatprep.subr.mxu0 0.0
    %831 = vmatpush1.msra.mxu0 %v792
    %832 = vmatprep.subr.mxu0 0.0
    %833 = vmatpush1.msra.mxu0 %v791
    %834 = vmatprep.subr.mxu0 0.0
    %835 = vmatpush1.msra.mxu0 %v790
    %836 = vmatprep.subr.mxu0 0.0
    %837 = vmatpush1.msra.mxu0 %v789
    %838 = vmatprep.subr.mxu0 0.0
    %839 = vmatpush1.msra.mxu0 %v788
    %840 = vmatprep.subr.mxu0 0.0
    %841 = vmatpush2.msra.mxu0 0.0
    %842 = vmatprep.subr.mxu0 0.0
    %843 = vmatpush2.msra.mxu0 0.0
    %844 = vmatprep.subr.mxu0 0.0
    %845 = vmatpush2.msra.mxu0 0.0
    %846 = vmatprep.subr.mxu0 0.0
    %847 = vmatpush2.msra.mxu0 0.0
    %848 = vmatprep.subr.mxu0 0.0
    %849 = vmatpush2.msra.mxu0 0.0
    %850 = vmatprep.subr.mxu0 0.0
    %851 = vmatpush2.msra.mxu0 0.0
    %852 = vmatprep.subr.mxu0 0.0
    %853 = vmatpush2.msra.mxu0 0.0
    %854 = vmatprep.subr.mxu0 0.0
    %855 = vmatpush2.msra.mxu0 0.0
    %856 = vmatprep.subr.mxu0 0.0
    %857 = vmatpush2.msra.mxu0 0.0
    %858 = vmatprep.subr.mxu0 0.0
    %859 = vmatpush2.msra.mxu0 0.0
    %860 = vmatprep.subr.mxu0 0.0
    %861 = vmatpush2.msra.mxu0 0.0
    %862 = vmatprep.subr.mxu0 0.0
    %863 = vmatpush2.msra.mxu0 0.0
    %864 = vmatprep.subr.mxu0 0.0
    %865 = vmatpush2.msra.mxu0 0.0
    %866 = vmatprep.subr.mxu0 0.0
    %867 = vmatpush2.msra.mxu0 0.0
    %868 = vmatprep.subr.mxu0 0.0
    %869 = vmatpush2.msra.mxu0 0.0
    %870 = vmatprep.subr.mxu0 0.0
    %871 = vmatpush2.msra.mxu0 0.0
    %872 = vmatprep.mubr.f32.mxu0 0.0
    %873 = vmatmul.mubr.f32.gmra.mxu0 %v107
    %v874 = vpop.f32.mrf.mxu0
    %v875 = vadd.f32 %v807, %v874
    %v876 = vpop.f32.mrf.mxu0
    %877 = vmatprep.mubr.f32.mxu0 0.0
    %878 = vmatmul.mubr.f32.gmra.mxu0 %v108
    %v879 = vpop.f32.mrf.mxu0
    %v880 = vadd.f32 %v807, %v879
    %v881 = vpop.f32.mrf.mxu0
    %882 = vdwg.mxu0
    %883 = vmatprep.subr.mxu0 0.0
    %884 = vmatpush1.xpose.msra.mxu0 0.0
    %885 = vmatprep.subr.mxu0 0.0
    %886 = vmatpush1.xpose.msra.mxu0 0.0
    %887 = vmatprep.subr.mxu0 0.0
    %888 = vmatpush1.xpose.msra.mxu0 0.0
    %889 = vmatprep.subr.mxu0 0.0
    %890 = vmatpush1.xpose.msra.mxu0 0.0
    %891 = vmatprep.subr.mxu0 0.0
    %892 = vmatpush1.xpose.msra.mxu0 0.0
    %893 = vmatprep.subr.mxu0 0.0
    %894 = vmatpush1.xpose.msra.mxu0 0.0
    %895 = vmatprep.subr.mxu0 0.0
    %896 = vmatpush1.xpose.msra.mxu0 0.0
    %897 = vmatprep.subr.mxu0 0.0
    %898 = vmatpush1.xpose.msra.mxu0 0.0
    %899 = vmatprep.subr.mxu0 0.0
    %900 = vmatpush1.xpose.msra.mxu0 0.0
    %901 = vmatprep.subr.mxu0 0.0
    %902 = vmatpush1.xpose.msra.mxu0 0.0
    %903 = vmatprep.subr.mxu0 0.0
    %904 = vmatpush1.xpose.msra.mxu0 0.0
    %905 = vmatprep.subr.mxu0 0.0
    %906 = vmatpush1.xpose.msra.mxu0 0.0
    %907 = vmatprep.subr.mxu0 0.0
    %908 = vmatpush1.xpose.msra.mxu0 0.0
    %909 = vmatprep.subr.mxu0 0.0
    %910 = vmatpush1.xpose.msra.mxu0 0.0
    %911 = vmatprep.subr.mxu0 0.0
    %912 = vmatpush1.xpose.msra.mxu0 %v784
    %913 = vmatprep.subr.mxu0 0.0
    %914 = vmatpush1.xpose.msra.mxu0 %v779
    %915 = vmatprep.subr.mxu0 0.0
    %916 = vmatpush2.xpose.msra.mxu0 0.0
    %917 = vmatprep.subr.mxu0 0.0
    %918 = vmatpush2.xpose.msra.mxu0 0.0
    %919 = vmatprep.subr.mxu0 0.0
    %920 = vmatpush2.xpose.msra.mxu0 0.0
    %921 = vmatprep.subr.mxu0 0.0
    %922 = vmatpush2.xpose.msra.mxu0 0.0
    %923 = vmatprep.subr.mxu0 0.0
    %924 = vmatpush2.xpose.msra.mxu0 0.0
    %925 = vmatprep.subr.mxu0 0.0
    %926 = vmatpush2.xpose.msra.mxu0 0.0
    %927 = vmatprep.subr.mxu0 0.0
    %928 = vmatpush2.xpose.msra.mxu0 0.0
    %929 = vmatprep.subr.mxu0 0.0
    %930 = vmatpush2.xpose.msra.mxu0 0.0
    %931 = vmatprep.subr.mxu0 0.0
    %932 = vmatpush2.xpose.msra.mxu0 0.0
    %933 = vmatprep.subr.mxu0 0.0
    %934 = vmatpush2.xpose.msra.mxu0 0.0
    %935 = vmatprep.subr.mxu0 0.0
    %936 = vmatpush2.xpose.msra.mxu0 0.0
    %937 = vmatprep.subr.mxu0 0.0
    %938 = vmatpush2.xpose.msra.mxu0 0.0
    %939 = vmatprep.subr.mxu0 0.0
    %940 = vmatpush2.xpose.msra.mxu0 0.0
    %941 = vmatprep.subr.mxu0 0.0
    %942 = vmatpush2.xpose.msra.mxu0 0.0
    %943 = vmatprep.subr.mxu0 0.0
    %944 = vmatpush2.xpose.msra.mxu0 0.0
    %945 = vmatprep.subr.mxu0 0.0
    %946 = vmatpush2.xpose.msra.mxu0 0.0
    %947 = vmatprep.mubr.f32.mxu0 0.0
    %948 = vmatmul.mubr.f32.gmra.mxu0 %v683
    %v949 = vpop.f32.mrf.mxu0
    %v950 = vadd.f32 %v109, %v949
    %v951 = vpop.f32.mrf.mxu0
    %952 = vmatprep.mubr.f32.mxu0 0.0
    %953 = vmatmul.mubr.f32.gmra.mxu0 %v688
    %v954 = vpop.f32.mrf.mxu0
    %v955 = vadd.f32 %v110, %v954
    %v956 = vpop.f32.mrf.mxu0
    %957 = vdwg.mxu0
    %v958 = vsel %vm475, %v950, -inf
    %959 = vmax.xlane.f32.xlu0 %v958
    %v960 = vpop.xlane.xlu0 %959
    %v961 = vsel %vm475, %v955, -inf
    %962 = vmax.xlane.f32.xlu0 %v961
    %v963 = vpop.xlane.xlu0 %962
    %v964 = vsub.f32 %v950, %v960
    %v965 = vsub.f32 %v955, %v963
    %v966 = vmul.f32 %v964, 1.442695
    %v967 = vpow.pop %v966
    %v968 = vmul.f32 %v965, 1.442695
    %v969 = vpow.pop %v968
    %v970 = vsel %vm475, %v967, 0.0
    %971 = vadd.xlane.f32.xlu0 %v970
    %v972 = vpop.xlane.xlu0 %971
    %v973 = vsel %vm475, %v969, 0.0
    %974 = vadd.xlane.f32.xlu0 %v973
    %v975 = vpop.xlane.xlu0 %974
    %v976 = vrcp.pop %v972
    %v977 = vrcp.pop %v975
    %v978 = vmul.f32 %v967, %v976
    %v979 = vmul.f32 %v969, %v977
    %v981 = vsel %vm475, %v978, 0
    %v984 = vsel %vm475, %v979, 0
    %986 = vmatprep.subr.mxu0 0.0
    %987 = vmatpush1.msra.mxu0 0.0
    %988 = vmatprep.subr.mxu0 0.0
    %989 = vmatpush1.msra.mxu0 0.0
    %990 = vmatprep.subr.mxu0 0.0
    %991 = vmatpush1.msra.mxu0 0.0
    %992 = vmatprep.subr.mxu0 0.0
    %993 = vmatpush1.msra.mxu0 0.0
    %994 = vmatprep.subr.mxu0 0.0
    %995 = vmatpush1.msra.mxu0 0.0
    %996 = vmatprep.subr.mxu0 0.0
    %997 = vmatpush1.msra.mxu0 0.0
    %998 = vmatprep.subr.mxu0 0.0
    %999 = vmatpush1.msra.mxu0 0.0
    %1000 = vmatprep.subr.mxu0 0.0
    %1001 = vmatpush1.msra.mxu0 0.0
    %1002 = vmatprep.subr.mxu0 0.0
    %1003 = vmatpush1.msra.mxu0 0.0
    %1004 = vmatprep.subr.mxu0 0.0
    %1005 = vmatpush1.msra.mxu0 0.0
    %1006 = vmatprep.subr.mxu0 0.0
    %1007 = vmatpush1.msra.mxu0 0.0
    %1008 = vmatprep.subr.mxu0 0.0
    %1009 = vmatpush1.msra.mxu0 0.0
    %1010 = vmatprep.subr.mxu0 0.0
    %1011 = vmatpush1.msra.mxu0 0.0
    %1012 = vmatprep.subr.mxu0 0.0
    %1013 = vmatpush1.msra.mxu0 0.0
    %1014 = vmatprep.subr.mxu0 0.0
    %1015 = vmatpush1.msra.mxu0 %v880
    %1016 = vmatprep.subr.mxu0 0.0
    %1017 = vmatpush1.msra.mxu0 %v875
    %1018 = vmatprep.subr.mxu0 0.0
    %1019 = vmatpush2.msra.mxu0 0.0
    %1020 = vmatprep.subr.mxu0 0.0
    %1021 = vmatpush2.msra.mxu0 0.0
    %1022 = vmatprep.subr.mxu0 0.0
    %1023 = vmatpush2.msra.mxu0 0.0
    %1024 = vmatprep.subr.mxu0 0.0
    %1025 = vmatpush2.msra.mxu0 0.0
    %1026 = vmatprep.subr.mxu0 0.0
    %1027 = vmatpush2.msra.mxu0 0.0
    %1028 = vmatprep.subr.mxu0 0.0
    %1029 = vmatpush2.msra.mxu0 0.0
    %1030 = vmatprep.subr.mxu0 0.0
    %1031 = vmatpush2.msra.mxu0 0.0
    %1032 = vmatprep.subr.mxu0 0.0
    %1033 = vmatpush2.msra.mxu0 0.0
    %1034 = vmatprep.subr.mxu0 0.0
    %1035 = vmatpush2.msra.mxu0 0.0
    %1036 = vmatprep.subr.mxu0 0.0
    %1037 = vmatpush2.msra.mxu0 0.0
    %1038 = vmatprep.subr.mxu0 0.0
    %1039 = vmatpush2.msra.mxu0 0.0
    %1040 = vmatprep.subr.mxu0 0.0
    %1041 = vmatpush2.msra.mxu0 0.0
    %1042 = vmatprep.subr.mxu0 0.0
    %1043 = vmatpush2.msra.mxu0 0.0
    %1044 = vmatprep.subr.mxu0 0.0
    %1045 = vmatpush2.msra.mxu0 0.0
    %1046 = vmatprep.subr.mxu0 0.0
    %1047 = vmatpush2.msra.mxu0 0.0
    %1048 = vmatprep.subr.mxu0 0.0
    %1049 = vmatpush2.msra.mxu0 0.0
    %1050 = vmatprep.mubr.f32.mxu0 0.0
    %1051 = vmatmul.mubr.f32.gmra.mxu0 %v981
    %v1052 = vpop.f32.mrf.mxu0
    %v1053 = vadd.f32 0.0, %v1052
    %v1054 = vpop.f32.mrf.mxu0
    %1055 = vmatprep.mubr.f32.mxu0 0.0
    %1056 = vmatmul.mubr.f32.gmra.mxu0 %v984
    %v1057 = vpop.f32.mrf.mxu0
    %v1058 = vadd.f32 0.0, %v1057
    %v1059 = vpop.f32.mrf.mxu0
    %1060 = vdwg.mxu0
    %s1061 = scalar_lea.vmem [#allocation5], 128
    %v1062 = vld [vmem:[%s1061] sm:$0xff]
    %v1063 = vld [vmem:[%s1061 + $0x8] sm:$0xff]
    %v1064 = vld [vmem:[%s1061 + $0x10] sm:$0xff]
    %v1065 = vld [vmem:[%s1061 + $0x18] sm:$0xff]
    %v1066 = vld [vmem:[%s1061 + $0x20] sm:$0xff]
    %v1067 = vld [vmem:[%s1061 + $0x28] sm:$0xff]
    %v1068 = vld [vmem:[%s1061 + $0x30] sm:$0xff]
    %v1069 = vld [vmem:[%s1061 + $0x38] sm:$0xff]
    %v1070 = vld [vmem:[%s1061 + $0x40] sm:$0xff]
    %v1071 = vld [vmem:[%s1061 + $0x48] sm:$0xff]
    %v1072 = vld [vmem:[%s1061 + $0x50] sm:$0xff]
    %v1073 = vld [vmem:[%s1061 + $0x58] sm:$0xff]
    %v1074 = vld [vmem:[%s1061 + $0x60] sm:$0xff]
    %v1075 = vld [vmem:[%s1061 + $0x68] sm:$0xff]
    %v1076 = vld [vmem:[%s1061 + $0x70] sm:$0xff]
    %v1077 = vld [vmem:[%s1061 + $0x78] sm:$0xff]
    %1078 = vmatprep.subr.mxu0 0.0
    %1079 = vmatpush1.msra.mxu0 %v1077
    %1080 = vmatprep.subr.mxu0 0.0
    %1081 = vmatpush1.msra.mxu0 %v1076
    %1082 = vmatprep.subr.mxu0 0.0
    %1083 = vmatpush1.msra.mxu0 %v1075
    %1084 = vmatprep.subr.mxu0 0.0
    %1085 = vmatpush1.msra.mxu0 %v1074
    %1086 = vmatprep.subr.mxu0 0.0
    %1087 = vmatpush1.msra.mxu0 %v1073
    %1088 = vmatprep.subr.mxu0 0.0
    %1089 = vmatpush1.msra.mxu0 %v1072
    %1090 = vmatprep.subr.mxu0 0.0
    %1091 = vmatpush1.msra.mxu0 %v1071
    %1092 = vmatprep.subr.mxu0 0.0
    %1093 = vmatpush1.msra.mxu0 %v1070
    %1094 = vmatprep.subr.mxu0 0.0
    %1095 = vmatpush1.msra.mxu0 %v1069
    %1096 = vmatprep.subr.mxu0 0.0
    %1097 = vmatpush1.msra.mxu0 %v1068
    %1098 = vmatprep.subr.mxu0 0.0
    %1099 = vmatpush1.msra.mxu0 %v1067
    %1100 = vmatprep.subr.mxu0 0.0
    %1101 = vmatpush1.msra.mxu0 %v1066
    %1102 = vmatprep.subr.mxu0 0.0
    %1103 = vmatpush1.msra.mxu0 %v1065
    %1104 = vmatprep.subr.mxu0 0.0
    %1105 = vmatpush1.msra.mxu0 %v1064
    %1106 = vmatprep.subr.mxu0 0.0
    %1107 = vmatpush1.msra.mxu0 %v1063
    %1108 = vmatprep.subr.mxu0 0.0
    %1109 = vmatpush1.msra.mxu0 %v1062
    %1110 = vmatprep.subr.mxu0 0.0
    %1111 = vmatpush2.msra.mxu0 0.0
    %1112 = vmatprep.subr.mxu0 0.0
    %1113 = vmatpush2.msra.mxu0 0.0
    %1114 = vmatprep.subr.mxu0 0.0
    %1115 = vmatpush2.msra.mxu0 0.0
    %1116 = vmatprep.subr.mxu0 0.0
    %1117 = vmatpush2.msra.mxu0 0.0
    %1118 = vmatprep.subr.mxu0 0.0
    %1119 = vmatpush2.msra.mxu0 0.0
    %1120 = vmatprep.subr.mxu0 0.0
    %1121 = vmatpush2.msra.mxu0 0.0
    %1122 = vmatprep.subr.mxu0 0.0
    %1123 = vmatpush2.msra.mxu0 0.0
    %1124 = vmatprep.subr.mxu0 0.0
    %1125 = vmatpush2.msra.mxu0 0.0
    %1126 = vmatprep.subr.mxu0 0.0
    %1127 = vmatpush2.msra.mxu0 0.0
    %1128 = vmatprep.subr.mxu0 0.0
    %1129 = vmatpush2.msra.mxu0 0.0
    %1130 = vmatprep.subr.mxu0 0.0
    %1131 = vmatpush2.msra.mxu0 0.0
    %1132 = vmatprep.subr.mxu0 0.0
    %1133 = vmatpush2.msra.mxu0 0.0
    %1134 = vmatprep.subr.mxu0 0.0
    %1135 = vmatpush2.msra.mxu0 0.0
    %1136 = vmatprep.subr.mxu0 0.0
    %1137 = vmatpush2.msra.mxu0 0.0
    %1138 = vmatprep.subr.mxu0 0.0
    %1139 = vmatpush2.msra.mxu0 0.0
    %1140 = vmatprep.subr.mxu0 0.0
    %1141 = vmatpush2.msra.mxu0 0.0
    %1142 = vmatprep.mubr.f32.mxu0 0.0
    %1143 = vmatmul.mubr.f32.gmra.mxu0 %v1053
    %v1144 = vpop.f32.mrf.mxu0
    %v1145 = vadd.f32 0.0, %v1144
    %v1146 = vpop.f32.mrf.mxu0
    %1147 = vmatprep.mubr.f32.mxu0 0.0
    %1148 = vmatmul.mubr.f32.gmra.mxu0 %v1058
    %v1149 = vpop.f32.mrf.mxu0
    %v1150 = vadd.f32 0.0, %v1149
    %v1151 = vpop.f32.mrf.mxu0
    %1152 = vdwg.mxu0
    %1153 = vmatprep.subr.mxu0 0.0
    %1154 = vmatpush1.msra.mxu0 %v594
    %1155 = vmatprep.subr.mxu0 0.0
    %1156 = vmatpush1.msra.mxu0 %v593
    %1157 = vmatprep.subr.mxu0 0.0
    %1158 = vmatpush1.msra.mxu0 %v592
    %1159 = vmatprep.subr.mxu0 0.0
    %1160 = vmatpush1.msra.mxu0 %v591
    %1161 = vmatprep.subr.mxu0 0.0
    %1162 = vmatpush1.msra.mxu0 %v590
    %1163 = vmatprep.subr.mxu0 0.0
    %1164 = vmatpush1.msra.mxu0 %v589
    %1165 = vmatprep.subr.mxu0 0.0
    %1166 = vmatpush1.msra.mxu0 %v588
    %1167 = vmatprep.subr.mxu0 0.0
    %1168 = vmatpush1.msra.mxu0 %v587
    %1169 = vmatprep.subr.mxu0 0.0
    %1170 = vmatpush1.msra.mxu0 %v586
    %1171 = vmatprep.subr.mxu0 0.0
    %1172 = vmatpush1.msra.mxu0 %v585
    %1173 = vmatprep.subr.mxu0 0.0
    %1174 = vmatpush1.msra.mxu0 %v584
    %1175 = vmatprep.subr.mxu0 0.0
    %1176 = vmatpush1.msra.mxu0 %v583
    %1177 = vmatprep.subr.mxu0 0.0
    %1178 = vmatpush1.msra.mxu0 %v582
    %1179 = vmatprep.subr.mxu0 0.0
    %1180 = vmatpush1.msra.mxu0 %v581
    %1181 = vmatprep.subr.mxu0 0.0
    %1182 = vmatpush1.msra.mxu0 %v580
    %1183 = vmatprep.subr.mxu0 0.0
    %1184 = vmatpush1.msra.mxu0 %v579
    %1185 = vmatprep.subr.mxu0 0.0
    %1186 = vmatpush2.msra.mxu0 0.0
    %1187 = vmatprep.subr.mxu0 0.0
    %1188 = vmatpush2.msra.mxu0 0.0
    %1189 = vmatprep.subr.mxu0 0.0
    %1190 = vmatpush2.msra.mxu0 0.0
    %1191 = vmatprep.subr.mxu0 0.0
    %1192 = vmatpush2.msra.mxu0 0.0
    %1193 = vmatprep.subr.mxu0 0.0
    %1194 = vmatpush2.msra.mxu0 0.0
    %1195 = vmatprep.subr.mxu0 0.0
    %1196 = vmatpush2.msra.mxu0 0.0
    %1197 = vmatprep.subr.mxu0 0.0
    %1198 = vmatpush2.msra.mxu0 0.0
    %1199 = vmatprep.subr.mxu0 0.0
    %1200 = vmatpush2.msra.mxu0 0.0
    %1201 = vmatprep.subr.mxu0 0.0
    %1202 = vmatpush2.msra.mxu0 0.0
    %1203 = vmatprep.subr.mxu0 0.0
    %1204 = vmatpush2.msra.mxu0 0.0
    %1205 = vmatprep.subr.mxu0 0.0
    %1206 = vmatpush2.msra.mxu0 0.0
    %1207 = vmatprep.subr.mxu0 0.0
    %1208 = vmatpush2.msra.mxu0 0.0
    %1209 = vmatprep.subr.mxu0 0.0
    %1210 = vmatpush2.msra.mxu0 0.0
    %1211 = vmatprep.subr.mxu0 0.0
    %1212 = vmatpush2.msra.mxu0 0.0
    %1213 = vmatprep.subr.mxu0 0.0
    %1214 = vmatpush2.msra.mxu0 0.0
    %1215 = vmatprep.subr.mxu0 0.0
    %1216 = vmatpush2.msra.mxu0 0.0
    %1217 = vmatprep.mubr.f32.mxu0 0.0
    %1218 = vmatmul.mubr.f32.gmra.mxu0 %v571
    %v1219 = vpop.f32.mrf.mxu0
    %v1220 = vadd.f32 %v1145, %v1219
    %v1221 = vpop.f32.mrf.mxu0
    %1222 = vmatprep.mubr.f32.mxu0 0.0
    %1223 = vmatmul.mubr.f32.gmra.mxu0 %v576
    %v1224 = vpop.f32.mrf.mxu0
    %v1225 = vadd.f32 %v1150, %v1224
    %v1226 = vpop.f32.mrf.mxu0
    %1227 = vdwg.mxu0
    %s1228 = scalar_lea.vmem [#allocation2], 768
    %v1229 = vld [vmem:[%s1228] sm:$0xff]
    %v1230 = vld [vmem:[%s1228 + $0x8] sm:$0xff]
    %v1231 = vld [vmem:[%s1228 + $0x10] sm:$0xff]
    %v1232 = vld [vmem:[%s1228 + $0x18] sm:$0xff]
    %v1233 = vld [vmem:[%s1228 + $0x20] sm:$0xff]
    %v1234 = vld [vmem:[%s1228 + $0x28] sm:$0xff]
    %v1235 = vld [vmem:[%s1228 + $0x30] sm:$0xff]
    %v1236 = vld [vmem:[%s1228 + $0x38] sm:$0xff]
    %v1237 = vld [vmem:[%s1228 + $0x40] sm:$0xff]
    %v1238 = vld [vmem:[%s1228 + $0x48] sm:$0xff]
    %v1239 = vld [vmem:[%s1228 + $0x50] sm:$0xff]
    %v1240 = vld [vmem:[%s1228 + $0x58] sm:$0xff]
    %v1241 = vld [vmem:[%s1228 + $0x60] sm:$0xff]
    %v1242 = vld [vmem:[%s1228 + $0x68] sm:$0xff]
    %v1243 = vld [vmem:[%s1228 + $0x70] sm:$0xff]
    %v1244 = vld [vmem:[%s1228 + $0x78] sm:$0xff]
    %v1245 = vlaneseq
    %v1246 = vshrl.u32 %v1245, 7
    %v1247 = vsub.s32 6, %v1246
    %v1248 = vrot.slane %v111, %v1247
    %1249 = vmatprep.subr.mxu0 0.0
    %1250 = vmatpush1.msra.mxu0 %v1244
    %1251 = vmatprep.subr.mxu0 0.0
    %1252 = vmatpush1.msra.mxu0 %v1243
    %1253 = vmatprep.subr.mxu0 0.0
    %1254 = vmatpush1.msra.mxu0 %v1242
    %1255 = vmatprep.subr.mxu0 0.0
    %1256 = vmatpush1.msra.mxu0 %v1241
    %1257 = vmatprep.subr.mxu0 0.0
    %1258 = vmatpush1.msra.mxu0 %v1240
    %1259 = vmatprep.subr.mxu0 0.0
    %1260 = vmatpush1.msra.mxu0 %v1239
    %1261 = vmatprep.subr.mxu0 0.0
    %1262 = vmatpush1.msra.mxu0 %v1238
    %1263 = vmatprep.subr.mxu0 0.0
    %1264 = vmatpush1.msra.mxu0 %v1237
    %1265 = vmatprep.subr.mxu0 0.0
    %1266 = vmatpush1.msra.mxu0 %v1236
    %1267 = vmatprep.subr.mxu0 0.0
    %1268 = vmatpush1.msra.mxu0 %v1235
    %1269 = vmatprep.subr.mxu0 0.0
    %1270 = vmatpush1.msra.mxu0 %v1234
    %1271 = vmatprep.subr.mxu0 0.0
    %1272 = vmatpush1.msra.mxu0 %v1233
    %1273 = vmatprep.subr.mxu0 0.0
    %1274 = vmatpush1.msra.mxu0 %v1232
    %1275 = vmatprep.subr.mxu0 0.0
    %1276 = vmatpush1.msra.mxu0 %v1231
    %1277 = vmatprep.subr.mxu0 0.0
    %1278 = vmatpush1.msra.mxu0 %v1230
    %1279 = vmatprep.subr.mxu0 0.0
    %1280 = vmatpush1.msra.mxu0 %v1229
    %1281 = vmatprep.subr.mxu0 0.0
    %1282 = vmatpush2.msra.mxu0 0.0
    %1283 = vmatprep.subr.mxu0 0.0
    %1284 = vmatpush2.msra.mxu0 0.0
    %1285 = vmatprep.subr.mxu0 0.0
    %1286 = vmatpush2.msra.mxu0 0.0
    %1287 = vmatprep.subr.mxu0 0.0
    %1288 = vmatpush2.msra.mxu0 0.0
    %1289 = vmatprep.subr.mxu0 0.0
    %1290 = vmatpush2.msra.mxu0 0.0
    %1291 = vmatprep.subr.mxu0 0.0
    %1292 = vmatpush2.msra.mxu0 0.0
    %1293 = vmatprep.subr.mxu0 0.0
    %1294 = vmatpush2.msra.mxu0 0.0
    %1295 = vmatprep.subr.mxu0 0.0
    %1296 = vmatpush2.msra.mxu0 0.0
    %1297 = vmatprep.subr.mxu0 0.0
    %1298 = vmatpush2.msra.mxu0 0.0
    %1299 = vmatprep.subr.mxu0 0.0
    %1300 = vmatpush2.msra.mxu0 0.0
    %1301 = vmatprep.subr.mxu0 0.0
    %1302 = vmatpush2.msra.mxu0 0.0
    %1303 = vmatprep.subr.mxu0 0.0
    %1304 = vmatpush2.msra.mxu0 0.0
    %1305 = vmatprep.subr.mxu0 0.0
    %1306 = vmatpush2.msra.mxu0 0.0
    %1307 = vmatprep.subr.mxu0 0.0
    %1308 = vmatpush2.msra.mxu0 0.0
    %1309 = vmatprep.subr.mxu0 0.0
    %1310 = vmatpush2.msra.mxu0 0.0
    %1311 = vmatprep.subr.mxu0 0.0
    %1312 = vmatpush2.msra.mxu0 0.0
    %1313 = vmatprep.mubr.f32.mxu0 0.0
    %1314 = vmatmul.mubr.f32.gmra.mxu0 %v107
    %v1315 = vpop.f32.mrf.mxu0
    %v1316 = vadd.f32 %v1248, %v1315
    %v1317 = vpop.f32.mrf.mxu0
    %1318 = vmatprep.mubr.f32.mxu0 0.0
    %1319 = vmatmul.mubr.f32.gmra.mxu0 %v108
    %v1320 = vpop.f32.mrf.mxu0
    %v1321 = vadd.f32 %v1248, %v1320
    %v1322 = vpop.f32.mrf.mxu0
    %1323 = vdwg.mxu0
    %s1324 = scalar_lea.vmem [#allocation2], 896
    %v1325 = vld [vmem:[%s1324] sm:$0xff]
    %v1326 = vld [vmem:[%s1324 + $0x8] sm:$0xff]
    %v1327 = vld [vmem:[%s1324 + $0x10] sm:$0xff]
    %v1328 = vld [vmem:[%s1324 + $0x18] sm:$0xff]
    %v1329 = vld [vmem:[%s1324 + $0x20] sm:$0xff]
    %v1330 = vld [vmem:[%s1324 + $0x28] sm:$0xff]
    %v1331 = vld [vmem:[%s1324 + $0x30] sm:$0xff]
    %v1332 = vld [vmem:[%s1324 + $0x38] sm:$0xff]
    %v1333 = vld [vmem:[%s1324 + $0x40] sm:$0xff]
    %v1334 = vld [vmem:[%s1324 + $0x48] sm:$0xff]
    %v1335 = vld [vmem:[%s1324 + $0x50] sm:$0xff]
    %v1336 = vld [vmem:[%s1324 + $0x58] sm:$0xff]
    %v1337 = vld [vmem:[%s1324 + $0x60] sm:$0xff]
    %v1338 = vld [vmem:[%s1324 + $0x68] sm:$0xff]
    %v1339 = vld [vmem:[%s1324 + $0x70] sm:$0xff]
    %v1340 = vld [vmem:[%s1324 + $0x78] sm:$0xff]
    %v1341 = vlaneseq
    %v1342 = vshrl.u32 %v1341, 7
    %v1343 = vsub.s32 7, %v1342
    %v1344 = vrot.slane %v111, %v1343
    %1345 = vmatprep.subr.mxu0 0.0
    %1346 = vmatpush1.msra.mxu0 %v1340
    %1347 = vmatprep.subr.mxu0 0.0
    %1348 = vmatpush1.msra.mxu0 %v1339
    %1349 = vmatprep.subr.mxu0 0.0
    %1350 = vmatpush1.msra.mxu0 %v1338
    %1351 = vmatprep.subr.mxu0 0.0
    %1352 = vmatpush1.msra.mxu0 %v1337
    %1353 = vmatprep.subr.mxu0 0.0
    %1354 = vmatpush1.msra.mxu0 %v1336
    %1355 = vmatprep.subr.mxu0 0.0
    %1356 = vmatpush1.msra.mxu0 %v1335
    %1357 = vmatprep.subr.mxu0 0.0
    %1358 = vmatpush1.msra.mxu0 %v1334
    %1359 = vmatprep.subr.mxu0 0.0
    %1360 = vmatpush1.msra.mxu0 %v1333
    %1361 = vmatprep.subr.mxu0 0.0
    %1362 = vmatpush1.msra.mxu0 %v1332
    %1363 = vmatprep.subr.mxu0 0.0
    %1364 = vmatpush1.msra.mxu0 %v1331
    %1365 = vmatprep.subr.mxu0 0.0
    %1366 = vmatpush1.msra.mxu0 %v1330
    %1367 = vmatprep.subr.mxu0 0.0
    %1368 = vmatpush1.msra.mxu0 %v1329
    %1369 = vmatprep.subr.mxu0 0.0
    %1370 = vmatpush1.msra.mxu0 %v1328
    %1371 = vmatprep.subr.mxu0 0.0
    %1372 = vmatpush1.msra.mxu0 %v1327
    %1373 = vmatprep.subr.mxu0 0.0
    %1374 = vmatpush1.msra.mxu0 %v1326
    %1375 = vmatprep.subr.mxu0 0.0
    %1376 = vmatpush1.msra.mxu0 %v1325
    %1377 = vmatprep.subr.mxu0 0.0
    %1378 = vmatpush2.msra.mxu0 0.0
    %1379 = vmatprep.subr.mxu0 0.0
    %1380 = vmatpush2.msra.mxu0 0.0
    %1381 = vmatprep.subr.mxu0 0.0
    %1382 = vmatpush2.msra.mxu0 0.0
    %1383 = vmatprep.subr.mxu0 0.0
    %1384 = vmatpush2.msra.mxu0 0.0
    %1385 = vmatprep.subr.mxu0 0.0
    %1386 = vmatpush2.msra.mxu0 0.0
    %1387 = vmatprep.subr.mxu0 0.0
    %1388 = vmatpush2.msra.mxu0 0.0
    %1389 = vmatprep.subr.mxu0 0.0
    %1390 = vmatpush2.msra.mxu0 0.0
    %1391 = vmatprep.subr.mxu0 0.0
    %1392 = vmatpush2.msra.mxu0 0.0
    %1393 = vmatprep.subr.mxu0 0.0
    %1394 = vmatpush2.msra.mxu0 0.0
    %1395 = vmatprep.subr.mxu0 0.0
    %1396 = vmatpush2.msra.mxu0 0.0
    %1397 = vmatprep.subr.mxu0 0.0
    %1398 = vmatpush2.msra.mxu0 0.0
    %1399 = vmatprep.subr.mxu0 0.0
    %1400 = vmatpush2.msra.mxu0 0.0
    %1401 = vmatprep.subr.mxu0 0.0
    %1402 = vmatpush2.msra.mxu0 0.0
    %1403 = vmatprep.subr.mxu0 0.0
    %1404 = vmatpush2.msra.mxu0 0.0
    %1405 = vmatprep.subr.mxu0 0.0
    %1406 = vmatpush2.msra.mxu0 0.0
    %1407 = vmatprep.subr.mxu0 0.0
    %1408 = vmatpush2.msra.mxu0 0.0
    %1409 = vmatprep.mubr.f32.mxu0 0.0
    %1410 = vmatmul.mubr.f32.gmra.mxu0 %v107
    %v1411 = vpop.f32.mrf.mxu0
    %v1412 = vadd.f32 %v1344, %v1411
    %v1413 = vpop.f32.mrf.mxu0
    %1414 = vmatprep.mubr.f32.mxu0 0.0
    %1415 = vmatmul.mubr.f32.gmra.mxu0 %v108
    %v1416 = vpop.f32.mrf.mxu0
    %v1417 = vadd.f32 %v1344, %v1416
    %v1418 = vpop.f32.mrf.mxu0
    %1419 = vdwg.mxu0
    %s1420 = scalar_lea.vmem [#allocation2], 1024
    %v1421 = vld [vmem:[%s1420] sm:$0xff]
    %v1422 = vld [vmem:[%s1420 + $0x8] sm:$0xff]
    %v1423 = vld [vmem:[%s1420 + $0x10] sm:$0xff]
    %v1424 = vld [vmem:[%s1420 + $0x18] sm:$0xff]
    %v1425 = vld [vmem:[%s1420 + $0x20] sm:$0xff]
    %v1426 = vld [vmem:[%s1420 + $0x28] sm:$0xff]
    %v1427 = vld [vmem:[%s1420 + $0x30] sm:$0xff]
    %v1428 = vld [vmem:[%s1420 + $0x38] sm:$0xff]
    %v1429 = vld [vmem:[%s1420 + $0x40] sm:$0xff]
    %v1430 = vld [vmem:[%s1420 + $0x48] sm:$0xff]
    %v1431 = vld [vmem:[%s1420 + $0x50] sm:$0xff]
    %v1432 = vld [vmem:[%s1420 + $0x58] sm:$0xff]
    %v1433 = vld [vmem:[%s1420 + $0x60] sm:$0xff]
    %v1434 = vld [vmem:[%s1420 + $0x68] sm:$0xff]
    %v1435 = vld [vmem:[%s1420 + $0x70] sm:$0xff]
    %v1436 = vld [vmem:[%s1420 + $0x78] sm:$0xff]
    %v1437 = vlaneseq
    %v1438 = vshrl.u32 %v1437, 7
    %v1439 = vsub.s32 0, %v1438
    %v1440 = vrot.slane %v112, %v1439
    %1441 = vmatprep.subr.mxu0 0.0
    %1442 = vmatpush1.msra.mxu0 %v1436
    %1443 = vmatprep.subr.mxu0 0.0
    %1444 = vmatpush1.msra.mxu0 %v1435
    %1445 = vmatprep.subr.mxu0 0.0
    %1446 = vmatpush1.msra.mxu0 %v1434
    %1447 = vmatprep.subr.mxu0 0.0
    %1448 = vmatpush1.msra.mxu0 %v1433
    %1449 = vmatprep.subr.mxu0 0.0
    %1450 = vmatpush1.msra.mxu0 %v1432
    %1451 = vmatprep.subr.mxu0 0.0
    %1452 = vmatpush1.msra.mxu0 %v1431
    %1453 = vmatprep.subr.mxu0 0.0
    %1454 = vmatpush1.msra.mxu0 %v1430
    %1455 = vmatprep.subr.mxu0 0.0
    %1456 = vmatpush1.msra.mxu0 %v1429
    %1457 = vmatprep.subr.mxu0 0.0
    %1458 = vmatpush1.msra.mxu0 %v1428
    %1459 = vmatprep.subr.mxu0 0.0
    %1460 = vmatpush1.msra.mxu0 %v1427
    %1461 = vmatprep.subr.mxu0 0.0
    %1462 = vmatpush1.msra.mxu0 %v1426
    %1463 = vmatprep.subr.mxu0 0.0
    %1464 = vmatpush1.msra.mxu0 %v1425
    %1465 = vmatprep.subr.mxu0 0.0
    %1466 = vmatpush1.msra.mxu0 %v1424
    %1467 = vmatprep.subr.mxu0 0.0
    %1468 = vmatpush1.msra.mxu0 %v1423
    %1469 = vmatprep.subr.mxu0 0.0
    %1470 = vmatpush1.msra.mxu0 %v1422
    %1471 = vmatprep.subr.mxu0 0.0
    %1472 = vmatpush1.msra.mxu0 %v1421
    %1473 = vmatprep.subr.mxu0 0.0
    %1474 = vmatpush2.msra.mxu0 0.0
    %1475 = vmatprep.subr.mxu0 0.0
    %1476 = vmatpush2.msra.mxu0 0.0
    %1477 = vmatprep.subr.mxu0 0.0
    %1478 = vmatpush2.msra.mxu0 0.0
    %1479 = vmatprep.subr.mxu0 0.0
    %1480 = vmatpush2.msra.mxu0 0.0
    %1481 = vmatprep.subr.mxu0 0.0
    %1482 = vmatpush2.msra.mxu0 0.0
    %1483 = vmatprep.subr.mxu0 0.0
    %1484 = vmatpush2.msra.mxu0 0.0
    %1485 = vmatprep.subr.mxu0 0.0
    %1486 = vmatpush2.msra.mxu0 0.0
    %1487 = vmatprep.subr.mxu0 0.0
    %1488 = vmatpush2.msra.mxu0 0.0
    %1489 = vmatprep.subr.mxu0 0.0
    %1490 = vmatpush2.msra.mxu0 0.0
    %1491 = vmatprep.subr.mxu0 0.0
    %1492 = vmatpush2.msra.mxu0 0.0
    %1493 = vmatprep.subr.mxu0 0.0
    %1494 = vmatpush2.msra.mxu0 0.0
    %1495 = vmatprep.subr.mxu0 0.0
    %1496 = vmatpush2.msra.mxu0 0.0
    %1497 = vmatprep.subr.mxu0 0.0
    %1498 = vmatpush2.msra.mxu0 0.0
    %1499 = vmatprep.subr.mxu0 0.0
    %1500 = vmatpush2.msra.mxu0 0.0
    %1501 = vmatprep.subr.mxu0 0.0
    %1502 = vmatpush2.msra.mxu0 0.0
    %1503 = vmatprep.subr.mxu0 0.0
    %1504 = vmatpush2.msra.mxu0 0.0
    %1505 = vmatprep.mubr.f32.mxu0 0.0
    %1506 = vmatmul.mubr.f32.gmra.mxu0 %v107
    %v1507 = vpop.f32.mrf.mxu0
    %v1508 = vadd.f32 %v1440, %v1507
    %v1509 = vpop.f32.mrf.mxu0
    %1510 = vmatprep.mubr.f32.mxu0 0.0
    %1511 = vmatmul.mubr.f32.gmra.mxu0 %v108
    %v1512 = vpop.f32.mrf.mxu0
    %v1513 = vadd.f32 %v1440, %v1512
    %v1514 = vpop.f32.mrf.mxu0
    %1515 = vdwg.mxu0
    %1516 = vmatprep.subr.mxu0 0.0
    %1517 = vmatpush1.xpose.msra.mxu0 0.0
    %1518 = vmatprep.subr.mxu0 0.0
    %1519 = vmatpush1.xpose.msra.mxu0 0.0
    %1520 = vmatprep.subr.mxu0 0.0
    %1521 = vmatpush1.xpose.msra.mxu0 0.0
    %1522 = vmatprep.subr.mxu0 0.0
    %1523 = vmatpush1.xpose.msra.mxu0 0.0
    %1524 = vmatprep.subr.mxu0 0.0
    %1525 = vmatpush1.xpose.msra.mxu0 0.0
    %1526 = vmatprep.subr.mxu0 0.0
    %1527 = vmatpush1.xpose.msra.mxu0 0.0
    %1528 = vmatprep.subr.mxu0 0.0
    %1529 = vmatpush1.xpose.msra.mxu0 0.0
    %1530 = vmatprep.subr.mxu0 0.0
    %1531 = vmatpush1.xpose.msra.mxu0 0.0
    %1532 = vmatprep.subr.mxu0 0.0
    %1533 = vmatpush1.xpose.msra.mxu0 0.0
    %1534 = vmatprep.subr.mxu0 0.0
    %1535 = vmatpush1.xpose.msra.mxu0 0.0
    %1536 = vmatprep.subr.mxu0 0.0
    %1537 = vmatpush1.xpose.msra.mxu0 0.0
    %1538 = vmatprep.subr.mxu0 0.0
    %1539 = vmatpush1.xpose.msra.mxu0 0.0
    %1540 = vmatprep.subr.mxu0 0.0
    %1541 = vmatpush1.xpose.msra.mxu0 0.0
    %1542 = vmatprep.subr.mxu0 0.0
    %1543 = vmatpush1.xpose.msra.mxu0 0.0
    %1544 = vmatprep.subr.mxu0 0.0
    %1545 = vmatpush1.xpose.msra.mxu0 %v1417
    %1546 = vmatprep.subr.mxu0 0.0
    %1547 = vmatpush1.xpose.msra.mxu0 %v1412
    %1548 = vmatprep.subr.mxu0 0.0
    %1549 = vmatpush2.xpose.msra.mxu0 0.0
    %1550 = vmatprep.subr.mxu0 0.0
    %1551 = vmatpush2.xpose.msra.mxu0 0.0
    %1552 = vmatprep.subr.mxu0 0.0
    %1553 = vmatpush2.xpose.msra.mxu0 0.0
    %1554 = vmatprep.subr.mxu0 0.0
    %1555 = vmatpush2.xpose.msra.mxu0 0.0
    %1556 = vmatprep.subr.mxu0 0.0
    %1557 = vmatpush2.xpose.msra.mxu0 0.0
    %1558 = vmatprep.subr.mxu0 0.0
    %1559 = vmatpush2.xpose.msra.mxu0 0.0
    %1560 = vmatprep.subr.mxu0 0.0
    %1561 = vmatpush2.xpose.msra.mxu0 0.0
    %1562 = vmatprep.subr.mxu0 0.0
    %1563 = vmatpush2.xpose.msra.mxu0 0.0
    %1564 = vmatprep.subr.mxu0 0.0
    %1565 = vmatpush2.xpose.msra.mxu0 0.0
    %1566 = vmatprep.subr.mxu0 0.0
    %1567 = vmatpush2.xpose.msra.mxu0 0.0
    %1568 = vmatprep.subr.mxu0 0.0
    %1569 = vmatpush2.xpose.msra.mxu0 0.0
    %1570 = vmatprep.subr.mxu0 0.0
    %1571 = vmatpush2.xpose.msra.mxu0 0.0
    %1572 = vmatprep.subr.mxu0 0.0
    %1573 = vmatpush2.xpose.msra.mxu0 0.0
    %1574 = vmatprep.subr.mxu0 0.0
    %1575 = vmatpush2.xpose.msra.mxu0 0.0
    %1576 = vmatprep.subr.mxu0 0.0
    %1577 = vmatpush2.xpose.msra.mxu0 0.0
    %1578 = vmatprep.subr.mxu0 0.0
    %1579 = vmatpush2.xpose.msra.mxu0 0.0
    %1580 = vmatprep.mubr.f32.mxu0 0.0
    %1581 = vmatmul.mubr.f32.gmra.mxu0 %v1316
    %v1582 = vpop.f32.mrf.mxu0
    %v1583 = vadd.f32 %v109, %v1582
    %v1584 = vpop.f32.mrf.mxu0
    %1585 = vmatprep.mubr.f32.mxu0 0.0
    %1586 = vmatmul.mubr.f32.gmra.mxu0 %v1321
    %v1587 = vpop.f32.mrf.mxu0
    %v1588 = vadd.f32 %v110, %v1587
    %v1589 = vpop.f32.mrf.mxu0
    %1590 = vdwg.mxu0
    %v1591 = vsel %vm475, %v1583, -inf
    %1592 = vmax.xlane.f32.xlu0 %v1591
    %v1593 = vpop.xlane.xlu0 %1592
    %v1594 = vsel %vm475, %v1588, -inf
    %1595 = vmax.xlane.f32.xlu0 %v1594
    %v1596 = vpop.xlane.xlu0 %1595
    %v1597 = vsub.f32 %v1583, %v1593
    %v1598 = vsub.f32 %v1588, %v1596
    %v1599 = vmul.f32 %v1597, 1.442695
    %v1600 = vpow.pop %v1599
    %v1601 = vmul.f32 %v1598, 1.442695
    %v1602 = vpow.pop %v1601
    %v1603 = vsel %vm475, %v1600, 0.0
    %1604 = vadd.xlane.f32.xlu0 %v1603
    %v1605 = vpop.xlane.xlu0 %1604
    %v1606 = vsel %vm475, %v1602, 0.0
    %1607 = vadd.xlane.f32.xlu0 %v1606
    %v1608 = vpop.xlane.xlu0 %1607
    %v1609 = vrcp.pop %v1605
    %v1610 = vrcp.pop %v1608
    %v1611 = vmul.f32 %v1600, %v1609
    %v1612 = vmul.f32 %v1602, %v1610
    %v1614 = vsel %vm475, %v1611, 0
    %v1617 = vsel %vm475, %v1612, 0
    %1619 = vmatprep.subr.mxu0 0.0
    %1620 = vmatpush1.msra.mxu0 0.0
    %1621 = vmatprep.subr.mxu0 0.0
    %1622 = vmatpush1.msra.mxu0 0.0
    %1623 = vmatprep.subr.mxu0 0.0
    %1624 = vmatpush1.msra.mxu0 0.0
    %1625 = vmatprep.subr.mxu0 0.0
    %1626 = vmatpush1.msra.mxu0 0.0
    %1627 = vmatprep.subr.mxu0 0.0
    %1628 = vmatpush1.msra.mxu0 0.0
    %1629 = vmatprep.subr.mxu0 0.0
    %1630 = vmatpush1.msra.mxu0 0.0
    %1631 = vmatprep.subr.mxu0 0.0
    %1632 = vmatpush1.msra.mxu0 0.0
    %1633 = vmatprep.subr.mxu0 0.0
    %1634 = vmatpush1.msra.mxu0 0.0
    %1635 = vmatprep.subr.mxu0 0.0
    %1636 = vmatpush1.msra.mxu0 0.0
    %1637 = vmatprep.subr.mxu0 0.0
    %1638 = vmatpush1.msra.mxu0 0.0
    %1639 = vmatprep.subr.mxu0 0.0
    %1640 = vmatpush1.msra.mxu0 0.0
    %1641 = vmatprep.subr.mxu0 0.0
    %1642 = vmatpush1.msra.mxu0 0.0
    %1643 = vmatprep.subr.mxu0 0.0
    %1644 = vmatpush1.msra.mxu0 0.0
    %1645 = vmatprep.subr.mxu0 0.0
    %1646 = vmatpush1.msra.mxu0 0.0
    %1647 = vmatprep.subr.mxu0 0.0
    %1648 = vmatpush1.msra.mxu0 %v1513
    %1649 = vmatprep.subr.mxu0 0.0
    %1650 = vmatpush1.msra.mxu0 %v1508
    %1651 = vmatprep.subr.mxu0 0.0
    %1652 = vmatpush2.msra.mxu0 0.0
    %1653 = vmatprep.subr.mxu0 0.0
    %1654 = vmatpush2.msra.mxu0 0.0
    %1655 = vmatprep.subr.mxu0 0.0
    %1656 = vmatpush2.msra.mxu0 0.0
    %1657 = vmatprep.subr.mxu0 0.0
    %1658 = vmatpush2.msra.mxu0 0.0
    %1659 = vmatprep.subr.mxu0 0.0
    %1660 = vmatpush2.msra.mxu0 0.0
    %1661 = vmatprep.subr.mxu0 0.0
    %1662 = vmatpush2.msra.mxu0 0.0
    %1663 = vmatprep.subr.mxu0 0.0
    %1664 = vmatpush2.msra.mxu0 0.0
    %1665 = vmatprep.subr.mxu0 0.0
    %1666 = vmatpush2.msra.mxu0 0.0
    %1667 = vmatprep.subr.mxu0 0.0
    %1668 = vmatpush2.msra.mxu0 0.0
    %1669 = vmatprep.subr.mxu0 0.0
    %1670 = vmatpush2.msra.mxu0 0.0
    %1671 = vmatprep.subr.mxu0 0.0
    %1672 = vmatpush2.msra.mxu0 0.0
    %1673 = vmatprep.subr.mxu0 0.0
    %1674 = vmatpush2.msra.mxu0 0.0
    %1675 = vmatprep.subr.mxu0 0.0
    %1676 = vmatpush2.msra.mxu0 0.0
    %1677 = vmatprep.subr.mxu0 0.0
    %1678 = vmatpush2.msra.mxu0 0.0
    %1679 = vmatprep.subr.mxu0 0.0
    %1680 = vmatpush2.msra.mxu0 0.0
    %1681 = vmatprep.subr.mxu0 0.0
    %1682 = vmatpush2.msra.mxu0 0.0
    %1683 = vmatprep.mubr.f32.mxu0 0.0
    %1684 = vmatmul.mubr.f32.gmra.mxu0 %v1614
    %v1685 = vpop.f32.mrf.mxu0
    %v1686 = vadd.f32 0.0, %v1685
    %v1687 = vpop.f32.mrf.mxu0
    %1688 = vmatprep.mubr.f32.mxu0 0.0
    %1689 = vmatmul.mubr.f32.gmra.mxu0 %v1617
    %v1690 = vpop.f32.mrf.mxu0
    %v1691 = vadd.f32 0.0, %v1690
    %v1692 = vpop.f32.mrf.mxu0
    %1693 = vdwg.mxu0
    %s1694 = scalar_lea.vmem [#allocation5], 256
    %v1695 = vld [vmem:[%s1694] sm:$0xff]
    %v1696 = vld [vmem:[%s1694 + $0x8] sm:$0xff]
    %v1697 = vld [vmem:[%s1694 + $0x10] sm:$0xff]
    %v1698 = vld [vmem:[%s1694 + $0x18] sm:$0xff]
    %v1699 = vld [vmem:[%s1694 + $0x20] sm:$0xff]
    %v1700 = vld [vmem:[%s1694 + $0x28] sm:$0xff]
    %v1701 = vld [vmem:[%s1694 + $0x30] sm:$0xff]
    %v1702 = vld [vmem:[%s1694 + $0x38] sm:$0xff]
    %v1703 = vld [vmem:[%s1694 + $0x40] sm:$0xff]
    %v1704 = vld [vmem:[%s1694 + $0x48] sm:$0xff]
    %v1705 = vld [vmem:[%s1694 + $0x50] sm:$0xff]
    %v1706 = vld [vmem:[%s1694 + $0x58] sm:$0xff]
    %v1707 = vld [vmem:[%s1694 + $0x60] sm:$0xff]
    %v1708 = vld [vmem:[%s1694 + $0x68] sm:$0xff]
    %v1709 = vld [vmem:[%s1694 + $0x70] sm:$0xff]
    %v1710 = vld [vmem:[%s1694 + $0x78] sm:$0xff]
    %1711 = vmatprep.subr.mxu0 0.0
    %1712 = vmatpush1.msra.mxu0 %v1710
    %1713 = vmatprep.subr.mxu0 0.0
    %1714 = vmatpush1.msra.mxu0 %v1709
    %1715 = vmatprep.subr.mxu0 0.0
    %1716 = vmatpush1.msra.mxu0 %v1708
    %1717 = vmatprep.subr.mxu0 0.0
    %1718 = vmatpush1.msra.mxu0 %v1707
    %1719 = vmatprep.subr.mxu0 0.0
    %1720 = vmatpush1.msra.mxu0 %v1706
    %1721 = vmatprep.subr.mxu0 0.0
    %1722 = vmatpush1.msra.mxu0 %v1705
    %1723 = vmatprep.subr.mxu0 0.0
    %1724 = vmatpush1.msra.mxu0 %v1704
    %1725 = vmatprep.subr.mxu0 0.0
    %1726 = vmatpush1.msra.mxu0 %v1703
    %1727 = vmatprep.subr.mxu0 0.0
    %1728 = vmatpush1.msra.mxu0 %v1702
    %1729 = vmatprep.subr.mxu0 0.0
    %1730 = vmatpush1.msra.mxu0 %v1701
    %1731 = vmatprep.subr.mxu0 0.0
    %1732 = vmatpush1.msra.mxu0 %v1700
    %1733 = vmatprep.subr.mxu0 0.0
    %1734 = vmatpush1.msra.mxu0 %v1699
    %1735 = vmatprep.subr.mxu0 0.0
    %1736 = vmatpush1.msra.mxu0 %v1698
    %1737 = vmatprep.subr.mxu0 0.0
    %1738 = vmatpush1.msra.mxu0 %v1697
    %1739 = vmatprep.subr.mxu0 0.0
    %1740 = vmatpush1.msra.mxu0 %v1696
    %1741 = vmatprep.subr.mxu0 0.0
    %1742 = vmatpush1.msra.mxu0 %v1695
    %1743 = vmatprep.subr.mxu0 0.0
    %1744 = vmatpush2.msra.mxu0 0.0
    %1745 = vmatprep.subr.mxu0 0.0
    %1746 = vmatpush2.msra.mxu0 0.0
    %1747 = vmatprep.subr.mxu0 0.0
    %1748 = vmatpush2.msra.mxu0 0.0
    %1749 = vmatprep.subr.mxu0 0.0
    %1750 = vmatpush2.msra.mxu0 0.0
    %1751 = vmatprep.subr.mxu0 0.0
    %1752 = vmatpush2.msra.mxu0 0.0
    %1753 = vmatprep.subr.mxu0 0.0
    %1754 = vmatpush2.msra.mxu0 0.0
    %1755 = vmatprep.subr.mxu0 0.0
    %1756 = vmatpush2.msra.mxu0 0.0
    %1757 = vmatprep.subr.mxu0 0.0
    %1758 = vmatpush2.msra.mxu0 0.0
    %1759 = vmatprep.subr.mxu0 0.0
    %1760 = vmatpush2.msra.mxu0 0.0
    %1761 = vmatprep.subr.mxu0 0.0
    %1762 = vmatpush2.msra.mxu0 0.0
    %1763 = vmatprep.subr.mxu0 0.0
    %1764 = vmatpush2.msra.mxu0 0.0
    %1765 = vmatprep.subr.mxu0 0.0
    %1766 = vmatpush2.msra.mxu0 0.0
    %1767 = vmatprep.subr.mxu0 0.0
    %1768 = vmatpush2.msra.mxu0 0.0
    %1769 = vmatprep.subr.mxu0 0.0
    %1770 = vmatpush2.msra.mxu0 0.0
    %1771 = vmatprep.subr.mxu0 0.0
    %1772 = vmatpush2.msra.mxu0 0.0
    %1773 = vmatprep.subr.mxu0 0.0
    %1774 = vmatpush2.msra.mxu0 0.0
    %1775 = vmatprep.mubr.f32.mxu0 0.0
    %1776 = vmatmul.mubr.f32.gmra.mxu0 %v1686
    %v1777 = vpop.f32.mrf.mxu0
    %v1778 = vadd.f32 0.0, %v1777
    %v1779 = vpop.f32.mrf.mxu0
    %1780 = vmatprep.mubr.f32.mxu0 0.0
    %1781 = vmatmul.mubr.f32.gmra.mxu0 %v1691
    %v1782 = vpop.f32.mrf.mxu0
    %v1783 = vadd.f32 0.0, %v1782
    %v1784 = vpop.f32.mrf.mxu0
    %1785 = vdwg.mxu0
    %v1786 = vadd.f32 %v1220, %v1778
    %v1787 = vadd.f32 %v1225, %v1783
    %v1788 = vlaneseq
    %v1789 = vshrl.u32 %v1788, 7
    %v1790 = vsub.s32 1, %v1789
    %v1791 = vrot.slane %v112, %v1790
    %v1792 = vadd.f32 %v1786, %v1791
    %v1793 = vadd.f32 %v1787, %v1791
    %v1794 = vadd.f32 %v107, %v1792
    %v1795 = vadd.f32 %v108, %v1793
    %1796 = vadd.xlane.f32.xlu0 %v1794
    %v1797 = vpop.xlane.xlu0 %1796
    %1798 = vadd.xlane.f32.xlu0 %v1795
    %v1799 = vpop.xlane.xlu0 %1798
    %v1800 = vmul.f32 %v1797, 0.030303031
    %v1801 = vmul.f32 %v1799, 0.030303031
    %v1802 = vsub.f32 %v1794, %v1800
    %v1803 = vsub.f32 %v1795, %v1801
    %v1804 = vmul.f32 %v1802, %v102
    %v1805 = vmul.f32 %v1803, %v102
    %v1806 = vmul.f32 %v1804, %v1804
    %v1807 = vmul.f32 %v1805, %v1805
    %1808 = vadd.xlane.f32.xlu0 %v1806
    %v1809 = vpop.xlane.xlu0 %1808
    %1810 = vadd.xlane.f32.xlu0 %v1807
    %v1811 = vpop.xlane.xlu0 %1810
    %v1812 = vmul.f32 %v1809, 0.030303031
    %v1813 = vmul.f32 %v1811, 0.030303031
    %v1814 = vadd.f32 %v1812, 1e-05
    %v1815 = vadd.f32 %v1813, 1e-05
    %v1816 = vrsqrt.pop %v1814
    %v1817 = vrsqrt.pop %v1815
    %v1818 = vmul.f32 %v1804, %v1816
    %v1819 = vmul.f32 %v1805, %v1817
    %v1820 = vlaneseq
    %v1821 = vshrl.u32 %v1820, 7
    %v1822 = vsub.s32 4, %v1821
    %v1823 = vrot.slane %v112, %v1822
    %v1824 = vmul.f32 %v1818, %v1823
    %v1825 = vmul.f32 %v1819, %v1823
    %v1826 = vlaneseq
    %v1827 = vshrl.u32 %v1826, 7
    %v1828 = vsub.s32 5, %v1827
    %v1829 = vrot.slane %v112, %v1828
    %v1830 = vadd.f32 %v1824, %v1829
    %v1831 = vadd.f32 %v1825, %v1829
    %v1832 = vld [vmem:[#allocation7] sm:$0xff]
    %v1833 = vld [vmem:[#allocation7 + $0x8] sm:$0xff]
    %v1834 = vld [vmem:[#allocation7 + $0x10] sm:$0xff]
    %v1835 = vld [vmem:[#allocation7 + $0x18] sm:$0xff]
    %v1836 = vld [vmem:[#allocation7 + $0x20] sm:$0xff]
    %v1837 = vld [vmem:[#allocation7 + $0x28] sm:$0xff]
    %v1838 = vld [vmem:[#allocation7 + $0x30] sm:$0xff]
    %v1839 = vld [vmem:[#allocation7 + $0x38] sm:$0xff]
    %v1840 = vld [vmem:[#allocation7 + $0x40] sm:$0xff]
    %v1841 = vld [vmem:[#allocation7 + $0x48] sm:$0xff]
    %v1842 = vld [vmem:[#allocation7 + $0x50] sm:$0xff]
    %v1843 = vld [vmem:[#allocation7 + $0x58] sm:$0xff]
    %v1844 = vld [vmem:[#allocation7 + $0x60] sm:$0xff]
    %v1845 = vld [vmem:[#allocation7 + $0x68] sm:$0xff]
    %v1846 = vld [vmem:[#allocation7 + $0x70] sm:$0xff]
    %v1847 = vld [vmem:[#allocation7 + $0x78] sm:$0xff]
    %v1848 = vlaneseq
    %v1849 = vshrl.u32 %v1848, 7
    %v1850 = vsub.s32 2, %v1849
    %v1851 = vrot.slane %v112, %v1850
    %1852 = vmatprep.subr.mxu0 0.0
    %1853 = vmatpush1.msra.mxu0 %v1847
    %1854 = vmatprep.subr.mxu0 0.0
    %1855 = vmatpush1.msra.mxu0 %v1846
    %1856 = vmatprep.subr.mxu0 0.0
    %1857 = vmatpush1.msra.mxu0 %v1845
    %1858 = vmatprep.subr.mxu0 0.0
    %1859 = vmatpush1.msra.mxu0 %v1844
    %1860 = vmatprep.subr.mxu0 0.0
    %1861 = vmatpush1.msra.mxu0 %v1843
    %1862 = vmatprep.subr.mxu0 0.0
    %1863 = vmatpush1.msra.mxu0 %v1842
    %1864 = vmatprep.subr.mxu0 0.0
    %1865 = vmatpush1.msra.mxu0 %v1841
    %1866 = vmatprep.subr.mxu0 0.0
    %1867 = vmatpush1.msra.mxu0 %v1840
    %1868 = vmatprep.subr.mxu0 0.0
    %1869 = vmatpush1.msra.mxu0 %v1839
    %1870 = vmatprep.subr.mxu0 0.0
    %1871 = vmatpush1.msra.mxu0 %v1838
    %1872 = vmatprep.subr.mxu0 0.0
    %1873 = vmatpush1.msra.mxu0 %v1837
    %1874 = vmatprep.subr.mxu0 0.0
    %1875 = vmatpush1.msra.mxu0 %v1836
    %1876 = vmatprep.subr.mxu0 0.0
    %1877 = vmatpush1.msra.mxu0 %v1835
    %1878 = vmatprep.subr.mxu0 0.0
    %1879 = vmatpush1.msra.mxu0 %v1834
    %1880 = vmatprep.subr.mxu0 0.0
    %1881 = vmatpush1.msra.mxu0 %v1833
    %1882 = vmatprep.subr.mxu0 0.0
    %1883 = vmatpush1.msra.mxu0 %v1832
    %1884 = vmatprep.subr.mxu0 0.0
    %1885 = vmatpush2.msra.mxu0 0.0
    %1886 = vmatprep.subr.mxu0 0.0
    %1887 = vmatpush2.msra.mxu0 0.0
    %1888 = vmatprep.subr.mxu0 0.0
    %1889 = vmatpush2.msra.mxu0 0.0
    %1890 = vmatprep.subr.mxu0 0.0
    %1891 = vmatpush2.msra.mxu0 0.0
    %1892 = vmatprep.subr.mxu0 0.0
    %1893 = vmatpush2.msra.mxu0 0.0
    %1894 = vmatprep.subr.mxu0 0.0
    %1895 = vmatpush2.msra.mxu0 0.0
    %1896 = vmatprep.subr.mxu0 0.0
    %1897 = vmatpush2.msra.mxu0 0.0
    %1898 = vmatprep.subr.mxu0 0.0
    %1899 = vmatpush2.msra.mxu0 0.0
    %1900 = vmatprep.subr.mxu0 0.0
    %1901 = vmatpush2.msra.mxu0 0.0
    %1902 = vmatprep.subr.mxu0 0.0
    %1903 = vmatpush2.msra.mxu0 0.0
    %1904 = vmatprep.subr.mxu0 0.0
    %1905 = vmatpush2.msra.mxu0 0.0
    %1906 = vmatprep.subr.mxu0 0.0
    %1907 = vmatpush2.msra.mxu0 0.0
    %1908 = vmatprep.subr.mxu0 0.0
    %1909 = vmatpush2.msra.mxu0 0.0
    %1910 = vmatprep.subr.mxu0 0.0
    %1911 = vmatpush2.msra.mxu0 0.0
    %1912 = vmatprep.subr.mxu0 0.0
    %1913 = vmatpush2.msra.mxu0 0.0
    %1914 = vmatprep.subr.mxu0 0.0
    %1915 = vmatpush2.msra.mxu0 0.0
    %1916 = vmatprep.mubr.f32.mxu0 0.0
    %1917 = vmatmul.mubr.f32.gmra.mxu0 %v1830
    %v1918 = vpop.f32.mrf.mxu0
    %v1919 = vadd.f32 %v1851, %v1918
    %v1920 = vpop.f32.mrf.mxu0
    %1921 = vmatprep.mubr.f32.mxu0 0.0
    %1922 = vmatmul.mubr.f32.gmra.mxu0 %v1831
    %v1923 = vpop.f32.mrf.mxu0
    %v1924 = vadd.f32 %v1851, %v1923
    %v1925 = vpop.f32.mrf.mxu0
    %1926 = vdwg.mxu0
    %v1927 = vmax.f32 %v1919, 0.0
    %v1928 = vmax.f32 %v1924, 0.0
    %v1929 = vld [vmem:[#allocation8] sm:$0xff]
    %v1930 = vld [vmem:[#allocation8 + $0x8] sm:$0xff]
    %v1931 = vld [vmem:[#allocation8 + $0x10] sm:$0xff]
    %v1932 = vld [vmem:[#allocation8 + $0x18] sm:$0xff]
    %v1933 = vld [vmem:[#allocation8 + $0x20] sm:$0xff]
    %v1934 = vld [vmem:[#allocation8 + $0x28] sm:$0xff]
    %v1935 = vld [vmem:[#allocation8 + $0x30] sm:$0xff]
    %v1936 = vld [vmem:[#allocation8 + $0x38] sm:$0xff]
    %v1937 = vld [vmem:[#allocation8 + $0x40] sm:$0xff]
    %v1938 = vld [vmem:[#allocation8 + $0x48] sm:$0xff]
    %v1939 = vld [vmem:[#allocation8 + $0x50] sm:$0xff]
    %v1940 = vld [vmem:[#allocation8 + $0x58] sm:$0xff]
    %v1941 = vld [vmem:[#allocation8 + $0x60] sm:$0xff]
    %v1942 = vld [vmem:[#allocation8 + $0x68] sm:$0xff]
    %v1943 = vld [vmem:[#allocation8 + $0x70] sm:$0xff]
    %v1944 = vld [vmem:[#allocation8 + $0x78] sm:$0xff]
    %v1945 = vlaneseq
    %v1946 = vshrl.u32 %v1945, 7
    %v1947 = vsub.s32 3, %v1946
    %v1948 = vrot.slane %v112, %v1947
    %1949 = vmatprep.subr.mxu0 0.0
    %1950 = vmatpush1.msra.mxu0 %v1944
    %1951 = vmatprep.subr.mxu0 0.0
    %1952 = vmatpush1.msra.mxu0 %v1943
    %1953 = vmatprep.subr.mxu0 0.0
    %1954 = vmatpush1.msra.mxu0 %v1942
    %1955 = vmatprep.subr.mxu0 0.0
    %1956 = vmatpush1.msra.mxu0 %v1941
    %1957 = vmatprep.subr.mxu0 0.0
    %1958 = vmatpush1.msra.mxu0 %v1940
    %1959 = vmatprep.subr.mxu0 0.0
    %1960 = vmatpush1.msra.mxu0 %v1939
    %1961 = vmatprep.subr.mxu0 0.0
    %1962 = vmatpush1.msra.mxu0 %v1938
    %1963 = vmatprep.subr.mxu0 0.0
    %1964 = vmatpush1.msra.mxu0 %v1937
    %1965 = vmatprep.subr.mxu0 0.0
    %1966 = vmatpush1.msra.mxu0 %v1936
    %1967 = vmatprep.subr.mxu0 0.0
    %1968 = vmatpush1.msra.mxu0 %v1935
    %1969 = vmatprep.subr.mxu0 0.0
    %1970 = vmatpush1.msra.mxu0 %v1934
    %1971 = vmatprep.subr.mxu0 0.0
    %1972 = vmatpush1.msra.mxu0 %v1933
    %1973 = vmatprep.subr.mxu0 0.0
    %1974 = vmatpush1.msra.mxu0 %v1932
    %1975 = vmatprep.subr.mxu0 0.0
    %1976 = vmatpush1.msra.mxu0 %v1931
    %1977 = vmatprep.subr.mxu0 0.0
    %1978 = vmatpush1.msra.mxu0 %v1930
    %1979 = vmatprep.subr.mxu0 0.0
    %1980 = vmatpush1.msra.mxu0 %v1929
    %1981 = vmatprep.subr.mxu0 0.0
    %1982 = vmatpush2.msra.mxu0 0.0
    %1983 = vmatprep.subr.mxu0 0.0
    %1984 = vmatpush2.msra.mxu0 0.0
    %1985 = vmatprep.subr.mxu0 0.0
    %1986 = vmatpush2.msra.mxu0 0.0
    %1987 = vmatprep.subr.mxu0 0.0
    %1988 = vmatpush2.msra.mxu0 0.0
    %1989 = vmatprep.subr.mxu0 0.0
    %1990 = vmatpush2.msra.mxu0 0.0
    %1991 = vmatprep.subr.mxu0 0.0
    %1992 = vmatpush2.msra.mxu0 0.0
    %1993 = vmatprep.subr.mxu0 0.0
    %1994 = vmatpush2.msra.mxu0 0.0
    %1995 = vmatprep.subr.mxu0 0.0
    %1996 = vmatpush2.msra.mxu0 0.0
    %1997 = vmatprep.subr.mxu0 0.0
    %1998 = vmatpush2.msra.mxu0 0.0
    %1999 = vmatprep.subr.mxu0 0.0
    %2000 = vmatpush2.msra.mxu0 0.0
    %2001 = vmatprep.subr.mxu0 0.0
    %2002 = vmatpush2.msra.mxu0 0.0
    %2003 = vmatprep.subr.mxu0 0.0
    %2004 = vmatpush2.msra.mxu0 0.0
    %2005 = vmatprep.subr.mxu0 0.0
    %2006 = vmatpush2.msra.mxu0 0.0
    %2007 = vmatprep.subr.mxu0 0.0
    %2008 = vmatpush2.msra.mxu0 0.0
    %2009 = vmatprep.subr.mxu0 0.0
    %2010 = vmatpush2.msra.mxu0 0.0
    %2011 = vmatprep.subr.mxu0 0.0
    %2012 = vmatpush2.msra.mxu0 0.0
    %2013 = vmatprep.mubr.f32.mxu0 0.0
    %2014 = vmatmul.mubr.f32.gmra.mxu0 %v1927
    %v2015 = vpop.f32.mrf.mxu0
    %v2016 = vadd.f32 %v1948, %v2015
    %v2017 = vpop.f32.mrf.mxu0
    %2018 = vmatprep.mubr.f32.mxu0 0.0
    %2019 = vmatmul.mubr.f32.gmra.mxu0 %v1928
    %v2020 = vpop.f32.mrf.mxu0
    %v2021 = vadd.f32 %v1948, %v2020
    %v2022 = vpop.f32.mrf.mxu0
    %2023 = vdwg.mxu0
    %v2024 = vadd.f32 %v1830, %v2016
    %v2025 = vadd.f32 %v1831, %v2021
    %2026 = vadd.xlane.f32.xlu0 %v2024
    %v2027 = vpop.xlane.xlu0 %2026
    %2028 = vadd.xlane.f32.xlu0 %v2025
    %v2029 = vpop.xlane.xlu0 %2028
    %v2030 = vmul.f32 %v2027, 0.030303031
    %v2031 = vmul.f32 %v2029, 0.030303031
    %v2032 = vsub.f32 %v2024, %v2030
    %v2033 = vsub.f32 %v2025, %v2031
    %v2034 = vmul.f32 %v2032, %v102
    %v2035 = vmul.f32 %v2033, %v102
    %v2036 = vmul.f32 %v2034, %v2034
    %v2037 = vmul.f32 %v2035, %v2035
    %2038 = vadd.xlane.f32.xlu0 %v2036
    %v2039 = vpop.xlane.xlu0 %2038
    %2040 = vadd.xlane.f32.xlu0 %v2037
    %v2041 = vpop.xlane.xlu0 %2040
    %v2042 = vmul.f32 %v2039, 0.030303031
    %v2043 = vmul.f32 %v2041, 0.030303031
    %v2044 = vadd.f32 %v2042, 1e-05
    %v2045 = vadd.f32 %v2043, 1e-05
    %v2046 = vrsqrt.pop %v2044
    %v2047 = vrsqrt.pop %v2045
    %v2048 = vmul.f32 %v2034, %v2046
    %v2049 = vmul.f32 %v2035, %v2047
    %v2050 = vlaneseq
    %v2051 = vshrl.u32 %v2050, 7
    %v2052 = vsub.s32 6, %v2051
    %v2053 = vrot.slane %v112, %v2052
    %v2054 = vmul.f32 %v2048, %v2053
    %v2055 = vmul.f32 %v2049, %v2053
    %v2056 = vlaneseq
    %v2057 = vshrl.u32 %v2056, 7
    %v2058 = vsub.s32 7, %v2057
    %v2059 = vrot.slane %v112, %v2058
    %v2060 = vadd.f32 %v2054, %v2059
    %v2061 = vadd.f32 %v2055, %v2059
    %s2062 = scalar_lea.vmem [#allocation10], 16
    %v2063 = vld [vmem:[%s2062] sm:$0xff]
    %v2064 = vld [vmem:[%s2062 + $0x8] sm:$0xff]
    %s2065 = scalar_lea.vmem [#allocation2], 1152
    %v2066 = vld [vmem:[%s2065] sm:$0xff]
    %v2067 = vld [vmem:[%s2065 + $0x8] sm:$0xff]
    %v2068 = vld [vmem:[%s2065 + $0x10] sm:$0xff]
    %v2069 = vld [vmem:[%s2065 + $0x18] sm:$0xff]
    %v2070 = vld [vmem:[%s2065 + $0x20] sm:$0xff]
    %v2071 = vld [vmem:[%s2065 + $0x28] sm:$0xff]
    %v2072 = vld [vmem:[%s2065 + $0x30] sm:$0xff]
    %v2073 = vld [vmem:[%s2065 + $0x38] sm:$0xff]
    %v2074 = vld [vmem:[%s2065 + $0x40] sm:$0xff]
    %v2075 = vld [vmem:[%s2065 + $0x48] sm:$0xff]
    %v2076 = vld [vmem:[%s2065 + $0x50] sm:$0xff]
    %v2077 = vld [vmem:[%s2065 + $0x58] sm:$0xff]
    %v2078 = vld [vmem:[%s2065 + $0x60] sm:$0xff]
    %v2079 = vld [vmem:[%s2065 + $0x68] sm:$0xff]
    %v2080 = vld [vmem:[%s2065 + $0x70] sm:$0xff]
    %v2081 = vld [vmem:[%s2065 + $0x78] sm:$0xff]
    %v2082 = vlaneseq
    %v2083 = vshrl.u32 %v2082, 7
    %v2084 = vsub.s32 0, %v2083
    %v2085 = vrot.slane %v2063, %v2084
    %2086 = vmatprep.subr.mxu0 0.0
    %2087 = vmatpush1.msra.mxu0 %v2081
    %2088 = vmatprep.subr.mxu0 0.0
    %2089 = vmatpush1.msra.mxu0 %v2080
    %2090 = vmatprep.subr.mxu0 0.0
    %2091 = vmatpush1.msra.mxu0 %v2079
    %2092 = vmatprep.subr.mxu0 0.0
    %2093 = vmatpush1.msra.mxu0 %v2078
    %2094 = vmatprep.subr.mxu0 0.0
    %2095 = vmatpush1.msra.mxu0 %v2077
    %2096 = vmatprep.subr.mxu0 0.0
    %2097 = vmatpush1.msra.mxu0 %v2076
    %2098 = vmatprep.subr.mxu0 0.0
    %2099 = vmatpush1.msra.mxu0 %v2075
    %2100 = vmatprep.subr.mxu0 0.0
    %2101 = vmatpush1.msra.mxu0 %v2074
    %2102 = vmatprep.subr.mxu0 0.0
    %2103 = vmatpush1.msra.mxu0 %v2073
    %2104 = vmatprep.subr.mxu0 0.0
    %2105 = vmatpush1.msra.mxu0 %v2072
    %2106 = vmatprep.subr.mxu0 0.0
    %2107 = vmatpush1.msra.mxu0 %v2071
    %2108 = vmatprep.subr.mxu0 0.0
    %2109 = vmatpush1.msra.mxu0 %v2070
    %2110 = vmatprep.subr.mxu0 0.0
    %2111 = vmatpush1.msra.mxu0 %v2069
    %2112 = vmatprep.subr.mxu0 0.0
    %2113 = vmatpush1.msra.mxu0 %v2068
    %2114 = vmatprep.subr.mxu0 0.0
    %2115 = vmatpush1.msra.mxu0 %v2067
    %2116 = vmatprep.subr.mxu0 0.0
    %2117 = vmatpush1.msra.mxu0 %v2066
    %2118 = vmatprep.subr.mxu0 0.0
    %2119 = vmatpush2.msra.mxu0 0.0
    %2120 = vmatprep.subr.mxu0 0.0
    %2121 = vmatpush2.msra.mxu0 0.0
    %2122 = vmatprep.subr.mxu0 0.0
    %2123 = vmatpush2.msra.mxu0 0.0
    %2124 = vmatprep.subr.mxu0 0.0
    %2125 = vmatpush2.msra.mxu0 0.0
    %2126 = vmatprep.subr.mxu0 0.0
    %2127 = vmatpush2.msra.mxu0 0.0
    %2128 = vmatprep.subr.mxu0 0.0
    %2129 = vmatpush2.msra.mxu0 0.0
    %2130 = vmatprep.subr.mxu0 0.0
    %2131 = vmatpush2.msra.mxu0 0.0
    %2132 = vmatprep.subr.mxu0 0.0
    %2133 = vmatpush2.msra.mxu0 0.0
    %2134 = vmatprep.subr.mxu0 0.0
    %2135 = vmatpush2.msra.mxu0 0.0
    %2136 = vmatprep.subr.mxu0 0.0
    %2137 = vmatpush2.msra.mxu0 0.0
    %2138 = vmatprep.subr.mxu0 0.0
    %2139 = vmatpush2.msra.mxu0 0.0
    %2140 = vmatprep.subr.mxu0 0.0
    %2141 = vmatpush2.msra.mxu0 0.0
    %2142 = vmatprep.subr.mxu0 0.0
    %2143 = vmatpush2.msra.mxu0 0.0
    %2144 = vmatprep.subr.mxu0 0.0
    %2145 = vmatpush2.msra.mxu0 0.0
    %2146 = vmatprep.subr.mxu0 0.0
    %2147 = vmatpush2.msra.mxu0 0.0
    %2148 = vmatprep.subr.mxu0 0.0
    %2149 = vmatpush2.msra.mxu0 0.0
    %2150 = vmatprep.mubr.f32.mxu0 0.0
    %2151 = vmatmul.mubr.f32.gmra.mxu0 %v2060
    %v2152 = vpop.f32.mrf.mxu0
    %v2153 = vadd.f32 %v2085, %v2152
    %v2154 = vpop.f32.mrf.mxu0
    %2155 = vmatprep.mubr.f32.mxu0 0.0
    %2156 = vmatmul.mubr.f32.gmra.mxu0 %v2061
    %v2157 = vpop.f32.mrf.mxu0
    %v2158 = vadd.f32 %v2085, %v2157
    %v2159 = vpop.f32.mrf.mxu0
    %2160 = vdwg.mxu0
    %s2161 = scalar_lea.vmem [#allocation2], 1280
    %v2162 = vld [vmem:[%s2161] sm:$0xff]
    %v2163 = vld [vmem:[%s2161 + $0x8] sm:$0xff]
    %v2164 = vld [vmem:[%s2161 + $0x10] sm:$0xff]
    %v2165 = vld [vmem:[%s2161 + $0x18] sm:$0xff]
    %v2166 = vld [vmem:[%s2161 + $0x20] sm:$0xff]
    %v2167 = vld [vmem:[%s2161 + $0x28] sm:$0xff]
    %v2168 = vld [vmem:[%s2161 + $0x30] sm:$0xff]
    %v2169 = vld [vmem:[%s2161 + $0x38] sm:$0xff]
    %v2170 = vld [vmem:[%s2161 + $0x40] sm:$0xff]
    %v2171 = vld [vmem:[%s2161 + $0x48] sm:$0xff]
    %v2172 = vld [vmem:[%s2161 + $0x50] sm:$0xff]
    %v2173 = vld [vmem:[%s2161 + $0x58] sm:$0xff]
    %v2174 = vld [vmem:[%s2161 + $0x60] sm:$0xff]
    %v2175 = vld [vmem:[%s2161 + $0x68] sm:$0xff]
    %v2176 = vld [vmem:[%s2161 + $0x70] sm:$0xff]
    %v2177 = vld [vmem:[%s2161 + $0x78] sm:$0xff]
    %v2178 = vlaneseq
    %v2179 = vshrl.u32 %v2178, 7
    %v2180 = vsub.s32 1, %v2179
    %v2181 = vrot.slane %v2063, %v2180
    %2182 = vmatprep.subr.mxu0 0.0
    %2183 = vmatpush1.msra.mxu0 %v2177
    %2184 = vmatprep.subr.mxu0 0.0
    %2185 = vmatpush1.msra.mxu0 %v2176
    %2186 = vmatprep.subr.mxu0 0.0
    %2187 = vmatpush1.msra.mxu0 %v2175
    %2188 = vmatprep.subr.mxu0 0.0
    %2189 = vmatpush1.msra.mxu0 %v2174
    %2190 = vmatprep.subr.mxu0 0.0
    %2191 = vmatpush1.msra.mxu0 %v2173
    %2192 = vmatprep.subr.mxu0 0.0
    %2193 = vmatpush1.msra.mxu0 %v2172
    %2194 = vmatprep.subr.mxu0 0.0
    %2195 = vmatpush1.msra.mxu0 %v2171
    %2196 = vmatprep.subr.mxu0 0.0
    %2197 = vmatpush1.msra.mxu0 %v2170
    %2198 = vmatprep.subr.mxu0 0.0
    %2199 = vmatpush1.msra.mxu0 %v2169
    %2200 = vmatprep.subr.mxu0 0.0
    %2201 = vmatpush1.msra.mxu0 %v2168
    %2202 = vmatprep.subr.mxu0 0.0
    %2203 = vmatpush1.msra.mxu0 %v2167
    %2204 = vmatprep.subr.mxu0 0.0
    %2205 = vmatpush1.msra.mxu0 %v2166
    %2206 = vmatprep.subr.mxu0 0.0
    %2207 = vmatpush1.msra.mxu0 %v2165
    %2208 = vmatprep.subr.mxu0 0.0
    %2209 = vmatpush1.msra.mxu0 %v2164
    %2210 = vmatprep.subr.mxu0 0.0
    %2211 = vmatpush1.msra.mxu0 %v2163
    %2212 = vmatprep.subr.mxu0 0.0
    %2213 = vmatpush1.msra.mxu0 %v2162
    %2214 = vmatprep.subr.mxu0 0.0
    %2215 = vmatpush2.msra.mxu0 0.0
    %2216 = vmatprep.subr.mxu0 0.0
    %2217 = vmatpush2.msra.mxu0 0.0
    %2218 = vmatprep.subr.mxu0 0.0
    %2219 = vmatpush2.msra.mxu0 0.0
    %2220 = vmatprep.subr.mxu0 0.0
    %2221 = vmatpush2.msra.mxu0 0.0
    %2222 = vmatprep.subr.mxu0 0.0
    %2223 = vmatpush2.msra.mxu0 0.0
    %2224 = vmatprep.subr.mxu0 0.0
    %2225 = vmatpush2.msra.mxu0 0.0
    %2226 = vmatprep.subr.mxu0 0.0
    %2227 = vmatpush2.msra.mxu0 0.0
    %2228 = vmatprep.subr.mxu0 0.0
    %2229 = vmatpush2.msra.mxu0 0.0
    %2230 = vmatprep.subr.mxu0 0.0
    %2231 = vmatpush2.msra.mxu0 0.0
    %2232 = vmatprep.subr.mxu0 0.0
    %2233 = vmatpush2.msra.mxu0 0.0
    %2234 = vmatprep.subr.mxu0 0.0
    %2235 = vmatpush2.msra.mxu0 0.0
    %2236 = vmatprep.subr.mxu0 0.0
    %2237 = vmatpush2.msra.mxu0 0.0
    %2238 = vmatprep.subr.mxu0 0.0
    %2239 = vmatpush2.msra.mxu0 0.0
    %2240 = vmatprep.subr.mxu0 0.0
    %2241 = vmatpush2.msra.mxu0 0.0
    %2242 = vmatprep.subr.mxu0 0.0
    %2243 = vmatpush2.msra.mxu0 0.0
    %2244 = vmatprep.subr.mxu0 0.0
    %2245 = vmatpush2.msra.mxu0 0.0
    %2246 = vmatprep.mubr.f32.mxu0 0.0
    %2247 = vmatmul.mubr.f32.gmra.mxu0 %v2060
    %v2248 = vpop.f32.mrf.mxu0
    %v2249 = vadd.f32 %v2181, %v2248
    %v2250 = vpop.f32.mrf.mxu0
    %2251 = vmatprep.mubr.f32.mxu0 0.0
    %2252 = vmatmul.mubr.f32.gmra.mxu0 %v2061
    %v2253 = vpop.f32.mrf.mxu0
    %v2254 = vadd.f32 %v2181, %v2253
    %v2255 = vpop.f32.mrf.mxu0
    %2256 = vdwg.mxu0
    %s2257 = scalar_lea.vmem [#allocation2], 1408
    %v2258 = vld [vmem:[%s2257] sm:$0xff]
    %v2259 = vld [vmem:[%s2257 + $0x8] sm:$0xff]
    %v2260 = vld [vmem:[%s2257 + $0x10] sm:$0xff]
    %v2261 = vld [vmem:[%s2257 + $0x18] sm:$0xff]
    %v2262 = vld [vmem:[%s2257 + $0x20] sm:$0xff]
    %v2263 = vld [vmem:[%s2257 + $0x28] sm:$0xff]
    %v2264 = vld [vmem:[%s2257 + $0x30] sm:$0xff]
    %v2265 = vld [vmem:[%s2257 + $0x38] sm:$0xff]
    %v2266 = vld [vmem:[%s2257 + $0x40] sm:$0xff]
    %v2267 = vld [vmem:[%s2257 + $0x48] sm:$0xff]
    %v2268 = vld [vmem:[%s2257 + $0x50] sm:$0xff]
    %v2269 = vld [vmem:[%s2257 + $0x58] sm:$0xff]
    %v2270 = vld [vmem:[%s2257 + $0x60] sm:$0xff]
    %v2271 = vld [vmem:[%s2257 + $0x68] sm:$0xff]
    %v2272 = vld [vmem:[%s2257 + $0x70] sm:$0xff]
    %v2273 = vld [vmem:[%s2257 + $0x78] sm:$0xff]
    %v2274 = vlaneseq
    %v2275 = vshrl.u32 %v2274, 7
    %v2276 = vsub.s32 2, %v2275
    %v2277 = vrot.slane %v2063, %v2276
    %2278 = vmatprep.subr.mxu0 0.0
    %2279 = vmatpush1.msra.mxu0 %v2273
    %2280 = vmatprep.subr.mxu0 0.0
    %2281 = vmatpush1.msra.mxu0 %v2272
    %2282 = vmatprep.subr.mxu0 0.0
    %2283 = vmatpush1.msra.mxu0 %v2271
    %2284 = vmatprep.subr.mxu0 0.0
    %2285 = vmatpush1.msra.mxu0 %v2270
    %2286 = vmatprep.subr.mxu0 0.0
    %2287 = vmatpush1.msra.mxu0 %v2269
    %2288 = vmatprep.subr.mxu0 0.0
    %2289 = vmatpush1.msra.mxu0 %v2268
    %2290 = vmatprep.subr.mxu0 0.0
    %2291 = vmatpush1.msra.mxu0 %v2267
    %2292 = vmatprep.subr.mxu0 0.0
    %2293 = vmatpush1.msra.mxu0 %v2266
    %2294 = vmatprep.subr.mxu0 0.0
    %2295 = vmatpush1.msra.mxu0 %v2265
    %2296 = vmatprep.subr.mxu0 0.0
    %2297 = vmatpush1.msra.mxu0 %v2264
    %2298 = vmatprep.subr.mxu0 0.0
    %2299 = vmatpush1.msra.mxu0 %v2263
    %2300 = vmatprep.subr.mxu0 0.0
    %2301 = vmatpush1.msra.mxu0 %v2262
    %2302 = vmatprep.subr.mxu0 0.0
    %2303 = vmatpush1.msra.mxu0 %v2261
    %2304 = vmatprep.subr.mxu0 0.0
    %2305 = vmatpush1.msra.mxu0 %v2260
    %2306 = vmatprep.subr.mxu0 0.0
    %2307 = vmatpush1.msra.mxu0 %v2259
    %2308 = vmatprep.subr.mxu0 0.0
    %2309 = vmatpush1.msra.mxu0 %v2258
    %2310 = vmatprep.subr.mxu0 0.0
    %2311 = vmatpush2.msra.mxu0 0.0
    %2312 = vmatprep.subr.mxu0 0.0
    %2313 = vmatpush2.msra.mxu0 0.0
    %2314 = vmatprep.subr.mxu0 0.0
    %2315 = vmatpush2.msra.mxu0 0.0
    %2316 = vmatprep.subr.mxu0 0.0
    %2317 = vmatpush2.msra.mxu0 0.0
    %2318 = vmatprep.subr.mxu0 0.0
    %2319 = vmatpush2.msra.mxu0 0.0
    %2320 = vmatprep.subr.mxu0 0.0
    %2321 = vmatpush2.msra.mxu0 0.0
    %2322 = vmatprep.subr.mxu0 0.0
    %2323 = vmatpush2.msra.mxu0 0.0
    %2324 = vmatprep.subr.mxu0 0.0
    %2325 = vmatpush2.msra.mxu0 0.0
    %2326 = vmatprep.subr.mxu0 0.0
    %2327 = vmatpush2.msra.mxu0 0.0
    %2328 = vmatprep.subr.mxu0 0.0
    %2329 = vmatpush2.msra.mxu0 0.0
    %2330 = vmatprep.subr.mxu0 0.0
    %2331 = vmatpush2.msra.mxu0 0.0
    %2332 = vmatprep.subr.mxu0 0.0
    %2333 = vmatpush2.msra.mxu0 0.0
    %2334 = vmatprep.subr.mxu0 0.0
    %2335 = vmatpush2.msra.mxu0 0.0
    %2336 = vmatprep.subr.mxu0 0.0
    %2337 = vmatpush2.msra.mxu0 0.0
    %2338 = vmatprep.subr.mxu0 0.0
    %2339 = vmatpush2.msra.mxu0 0.0
    %2340 = vmatprep.subr.mxu0 0.0
    %2341 = vmatpush2.msra.mxu0 0.0
    %2342 = vmatprep.mubr.f32.mxu0 0.0
    %2343 = vmatmul.mubr.f32.gmra.mxu0 %v2060
    %v2344 = vpop.f32.mrf.mxu0
    %v2345 = vadd.f32 %v2277, %v2344
    %v2346 = vpop.f32.mrf.mxu0
    %2347 = vmatprep.mubr.f32.mxu0 0.0
    %2348 = vmatmul.mubr.f32.gmra.mxu0 %v2061
    %v2349 = vpop.f32.mrf.mxu0
    %v2350 = vadd.f32 %v2277, %v2349
    %v2351 = vpop.f32.mrf.mxu0
    %2352 = vdwg.mxu0
    %2353 = vmatprep.subr.mxu0 0.0
    %2354 = vmatpush1.xpose.msra.mxu0 0.0
    %2355 = vmatprep.subr.mxu0 0.0
    %2356 = vmatpush1.xpose.msra.mxu0 0.0
    %2357 = vmatprep.subr.mxu0 0.0
    %2358 = vmatpush1.xpose.msra.mxu0 0.0
    %2359 = vmatprep.subr.mxu0 0.0
    %2360 = vmatpush1.xpose.msra.mxu0 0.0
    %2361 = vmatprep.subr.mxu0 0.0
    %2362 = vmatpush1.xpose.msra.mxu0 0.0
    %2363 = vmatprep.subr.mxu0 0.0
    %2364 = vmatpush1.xpose.msra.mxu0 0.0
    %2365 = vmatprep.subr.mxu0 0.0
    %2366 = vmatpush1.xpose.msra.mxu0 0.0
    %2367 = vmatprep.subr.mxu0 0.0
    %2368 = vmatpush1.xpose.msra.mxu0 0.0
    %2369 = vmatprep.subr.mxu0 0.0
    %2370 = vmatpush1.xpose.msra.mxu0 0.0
    %2371 = vmatprep.subr.mxu0 0.0
    %2372 = vmatpush1.xpose.msra.mxu0 0.0
    %2373 = vmatprep.subr.mxu0 0.0
    %2374 = vmatpush1.xpose.msra.mxu0 0.0
    %2375 = vmatprep.subr.mxu0 0.0
    %2376 = vmatpush1.xpose.msra.mxu0 0.0
    %2377 = vmatprep.subr.mxu0 0.0
    %2378 = vmatpush1.xpose.msra.mxu0 0.0
    %2379 = vmatprep.subr.mxu0 0.0
    %2380 = vmatpush1.xpose.msra.mxu0 0.0
    %2381 = vmatprep.subr.mxu0 0.0
    %2382 = vmatpush1.xpose.msra.mxu0 %v2254
    %2383 = vmatprep.subr.mxu0 0.0
    %2384 = vmatpush1.xpose.msra.mxu0 %v2249
    %2385 = vmatprep.subr.mxu0 0.0
    %2386 = vmatpush2.xpose.msra.mxu0 0.0
    %2387 = vmatprep.subr.mxu0 0.0
    %2388 = vmatpush2.xpose.msra.mxu0 0.0
    %2389 = vmatprep.subr.mxu0 0.0
    %2390 = vmatpush2.xpose.msra.mxu0 0.0
    %2391 = vmatprep.subr.mxu0 0.0
    %2392 = vmatpush2.xpose.msra.mxu0 0.0
    %2393 = vmatprep.subr.mxu0 0.0
    %2394 = vmatpush2.xpose.msra.mxu0 0.0
    %2395 = vmatprep.subr.mxu0 0.0
    %2396 = vmatpush2.xpose.msra.mxu0 0.0
    %2397 = vmatprep.subr.mxu0 0.0
    %2398 = vmatpush2.xpose.msra.mxu0 0.0
    %2399 = vmatprep.subr.mxu0 0.0
    %2400 = vmatpush2.xpose.msra.mxu0 0.0
    %2401 = vmatprep.subr.mxu0 0.0
    %2402 = vmatpush2.xpose.msra.mxu0 0.0
    %2403 = vmatprep.subr.mxu0 0.0
    %2404 = vmatpush2.xpose.msra.mxu0 0.0
    %2405 = vmatprep.subr.mxu0 0.0
    %2406 = vmatpush2.xpose.msra.mxu0 0.0
    %2407 = vmatprep.subr.mxu0 0.0
    %2408 = vmatpush2.xpose.msra.mxu0 0.0
    %2409 = vmatprep.subr.mxu0 0.0
    %2410 = vmatpush2.xpose.msra.mxu0 0.0
    %2411 = vmatprep.subr.mxu0 0.0
    %2412 = vmatpush2.xpose.msra.mxu0 0.0
    %2413 = vmatprep.subr.mxu0 0.0
    %2414 = vmatpush2.xpose.msra.mxu0 0.0
    %2415 = vmatprep.subr.mxu0 0.0
    %2416 = vmatpush2.xpose.msra.mxu0 0.0
    %2417 = vmatprep.mubr.f32.mxu0 0.0
    %2418 = vmatmul.mubr.f32.gmra.mxu0 %v2153
    %v2419 = vpop.f32.mrf.mxu0
    %v2420 = vadd.f32 %v109, %v2419
    %v2421 = vpop.f32.mrf.mxu0
    %2422 = vmatprep.mubr.f32.mxu0 0.0
    %2423 = vmatmul.mubr.f32.gmra.mxu0 %v2158
    %v2424 = vpop.f32.mrf.mxu0
    %v2425 = vadd.f32 %v110, %v2424
    %v2426 = vpop.f32.mrf.mxu0
    %2427 = vdwg.mxu0
    %v2428 = vsel %vm475, %v2420, -inf
    %2429 = vmax.xlane.f32.xlu0 %v2428
    %v2430 = vpop.xlane.xlu0 %2429
    %v2431 = vsel %vm475, %v2425, -inf
    %2432 = vmax.xlane.f32.xlu0 %v2431
    %v2433 = vpop.xlane.xlu0 %2432
    %v2434 = vsub.f32 %v2420, %v2430
    %v2435 = vsub.f32 %v2425, %v2433
    %v2436 = vmul.f32 %v2434, 1.442695
    %v2437 = vpow.pop %v2436
    %v2438 = vmul.f32 %v2435, 1.442695
    %v2439 = vpow.pop %v2438
    %v2440 = vsel %vm475, %v2437, 0.0
    %2441 = vadd.xlane.f32.xlu0 %v2440
    %v2442 = vpop.xlane.xlu0 %2441
    %v2443 = vsel %vm475, %v2439, 0.0
    %2444 = vadd.xlane.f32.xlu0 %v2443
    %v2445 = vpop.xlane.xlu0 %2444
    %v2446 = vrcp.pop %v2442
    %v2447 = vrcp.pop %v2445
    %v2448 = vmul.f32 %v2437, %v2446
    %v2449 = vmul.f32 %v2439, %v2447
    %v2451 = vsel %vm475, %v2448, 0
    %v2454 = vsel %vm475, %v2449, 0
    %2456 = vmatprep.subr.mxu0 0.0
    %2457 = vmatpush1.msra.mxu0 0.0
    %2458 = vmatprep.subr.mxu0 0.0
    %2459 = vmatpush1.msra.mxu0 0.0
    %2460 = vmatprep.subr.mxu0 0.0
    %2461 = vmatpush1.msra.mxu0 0.0
    %2462 = vmatprep.subr.mxu0 0.0
    %2463 = vmatpush1.msra.mxu0 0.0
    %2464 = vmatprep.subr.mxu0 0.0
    %2465 = vmatpush1.msra.mxu0 0.0
    %2466 = vmatprep.subr.mxu0 0.0
    %2467 = vmatpush1.msra.mxu0 0.0
    %2468 = vmatprep.subr.mxu0 0.0
    %2469 = vmatpush1.msra.mxu0 0.0
    %2470 = vmatprep.subr.mxu0 0.0
    %2471 = vmatpush1.msra.mxu0 0.0
    %2472 = vmatprep.subr.mxu0 0.0
    %2473 = vmatpush1.msra.mxu0 0.0
    %2474 = vmatprep.subr.mxu0 0.0
    %2475 = vmatpush1.msra.mxu0 0.0
    %2476 = vmatprep.subr.mxu0 0.0
    %2477 = vmatpush1.msra.mxu0 0.0
    %2478 = vmatprep.subr.mxu0 0.0
    %2479 = vmatpush1.msra.mxu0 0.0
    %2480 = vmatprep.subr.mxu0 0.0
    %2481 = vmatpush1.msra.mxu0 0.0
    %2482 = vmatprep.subr.mxu0 0.0
    %2483 = vmatpush1.msra.mxu0 0.0
    %2484 = vmatprep.subr.mxu0 0.0
    %2485 = vmatpush1.msra.mxu0 %v2350
    %2486 = vmatprep.subr.mxu0 0.0
    %2487 = vmatpush1.msra.mxu0 %v2345
    %2488 = vmatprep.subr.mxu0 0.0
    %2489 = vmatpush2.msra.mxu0 0.0
    %2490 = vmatprep.subr.mxu0 0.0
    %2491 = vmatpush2.msra.mxu0 0.0
    %2492 = vmatprep.subr.mxu0 0.0
    %2493 = vmatpush2.msra.mxu0 0.0
    %2494 = vmatprep.subr.mxu0 0.0
    %2495 = vmatpush2.msra.mxu0 0.0
    %2496 = vmatprep.subr.mxu0 0.0
    %2497 = vmatpush2.msra.mxu0 0.0
    %2498 = vmatprep.subr.mxu0 0.0
    %2499 = vmatpush2.msra.mxu0 0.0
    %2500 = vmatprep.subr.mxu0 0.0
    %2501 = vmatpush2.msra.mxu0 0.0
    %2502 = vmatprep.subr.mxu0 0.0
    %2503 = vmatpush2.msra.mxu0 0.0
    %2504 = vmatprep.subr.mxu0 0.0
    %2505 = vmatpush2.msra.mxu0 0.0
    %2506 = vmatprep.subr.mxu0 0.0
    %2507 = vmatpush2.msra.mxu0 0.0
    %2508 = vmatprep.subr.mxu0 0.0
    %2509 = vmatpush2.msra.mxu0 0.0
    %2510 = vmatprep.subr.mxu0 0.0
    %2511 = vmatpush2.msra.mxu0 0.0
    %2512 = vmatprep.subr.mxu0 0.0
    %2513 = vmatpush2.msra.mxu0 0.0
    %2514 = vmatprep.subr.mxu0 0.0
    %2515 = vmatpush2.msra.mxu0 0.0
    %2516 = vmatprep.subr.mxu0 0.0
    %2517 = vmatpush2.msra.mxu0 0.0
    %2518 = vmatprep.subr.mxu0 0.0
    %2519 = vmatpush2.msra.mxu0 0.0
    %2520 = vmatprep.mubr.f32.mxu0 0.0
    %2521 = vmatmul.mubr.f32.gmra.mxu0 %v2451
    %v2522 = vpop.f32.mrf.mxu0
    %v2523 = vadd.f32 0.0, %v2522
    %v2524 = vpop.f32.mrf.mxu0
    %2525 = vmatprep.mubr.f32.mxu0 0.0
    %2526 = vmatmul.mubr.f32.gmra.mxu0 %v2454
    %v2527 = vpop.f32.mrf.mxu0
    %v2528 = vadd.f32 0.0, %v2527
    %v2529 = vpop.f32.mrf.mxu0
    %2530 = vdwg.mxu0
    %s2531 = scalar_lea.vmem [#allocation5], 384
    %v2532 = vld [vmem:[%s2531] sm:$0xff]
    %v2533 = vld [vmem:[%s2531 + $0x8] sm:$0xff]
    %v2534 = vld [vmem:[%s2531 + $0x10] sm:$0xff]
    %v2535 = vld [vmem:[%s2531 + $0x18] sm:$0xff]
    %v2536 = vld [vmem:[%s2531 + $0x20] sm:$0xff]
    %v2537 = vld [vmem:[%s2531 + $0x28] sm:$0xff]
    %v2538 = vld [vmem:[%s2531 + $0x30] sm:$0xff]
    %v2539 = vld [vmem:[%s2531 + $0x38] sm:$0xff]
    %v2540 = vld [vmem:[%s2531 + $0x40] sm:$0xff]
    %v2541 = vld [vmem:[%s2531 + $0x48] sm:$0xff]
    %v2542 = vld [vmem:[%s2531 + $0x50] sm:$0xff]
    %v2543 = vld [vmem:[%s2531 + $0x58] sm:$0xff]
    %v2544 = vld [vmem:[%s2531 + $0x60] sm:$0xff]
    %v2545 = vld [vmem:[%s2531 + $0x68] sm:$0xff]
    %v2546 = vld [vmem:[%s2531 + $0x70] sm:$0xff]
    %v2547 = vld [vmem:[%s2531 + $0x78] sm:$0xff]
    %s2548 = scalar_lea.vmem [#allocation2], 1536
    %v2549 = vld [vmem:[%s2548] sm:$0xff]
    %v2550 = vld [vmem:[%s2548 + $0x8] sm:$0xff]
    %v2551 = vld [vmem:[%s2548 + $0x10] sm:$0xff]
    %v2552 = vld [vmem:[%s2548 + $0x18] sm:$0xff]
    %v2553 = vld [vmem:[%s2548 + $0x20] sm:$0xff]
    %v2554 = vld [vmem:[%s2548 + $0x28] sm:$0xff]
    %v2555 = vld [vmem:[%s2548 + $0x30] sm:$0xff]
    %v2556 = vld [vmem:[%s2548 + $0x38] sm:$0xff]
    %v2557 = vld [vmem:[%s2548 + $0x40] sm:$0xff]
    %v2558 = vld [vmem:[%s2548 + $0x48] sm:$0xff]
    %v2559 = vld [vmem:[%s2548 + $0x50] sm:$0xff]
    %v2560 = vld [vmem:[%s2548 + $0x58] sm:$0xff]
    %v2561 = vld [vmem:[%s2548 + $0x60] sm:$0xff]
    %v2562 = vld [vmem:[%s2548 + $0x68] sm:$0xff]
    %v2563 = vld [vmem:[%s2548 + $0x70] sm:$0xff]
    %v2564 = vld [vmem:[%s2548 + $0x78] sm:$0xff]
    %v2565 = vlaneseq
    %v2566 = vshrl.u32 %v2565, 7
    %v2567 = vsub.s32 3, %v2566
    %v2568 = vrot.slane %v2063, %v2567
    %2569 = vmatprep.subr.mxu0 0.0
    %2570 = vmatpush1.msra.mxu0 %v2564
    %2571 = vmatprep.subr.mxu0 0.0
    %2572 = vmatpush1.msra.mxu0 %v2563
    %2573 = vmatprep.subr.mxu0 0.0
    %2574 = vmatpush1.msra.mxu0 %v2562
    %2575 = vmatprep.subr.mxu0 0.0
    %2576 = vmatpush1.msra.mxu0 %v2561
    %2577 = vmatprep.subr.mxu0 0.0
    %2578 = vmatpush1.msra.mxu0 %v2560
    %2579 = vmatprep.subr.mxu0 0.0
    %2580 = vmatpush1.msra.mxu0 %v2559
    %2581 = vmatprep.subr.mxu0 0.0
    %2582 = vmatpush1.msra.mxu0 %v2558
    %2583 = vmatprep.subr.mxu0 0.0
    %2584 = vmatpush1.msra.mxu0 %v2557
    %2585 = vmatprep.subr.mxu0 0.0
    %2586 = vmatpush1.msra.mxu0 %v2556
    %2587 = vmatprep.subr.mxu0 0.0
    %2588 = vmatpush1.msra.mxu0 %v2555
    %2589 = vmatprep.subr.mxu0 0.0
    %2590 = vmatpush1.msra.mxu0 %v2554
    %2591 = vmatprep.subr.mxu0 0.0
    %2592 = vmatpush1.msra.mxu0 %v2553
    %2593 = vmatprep.subr.mxu0 0.0
    %2594 = vmatpush1.msra.mxu0 %v2552
    %2595 = vmatprep.subr.mxu0 0.0
    %2596 = vmatpush1.msra.mxu0 %v2551
    %2597 = vmatprep.subr.mxu0 0.0
    %2598 = vmatpush1.msra.mxu0 %v2550
    %2599 = vmatprep.subr.mxu0 0.0
    %2600 = vmatpush1.msra.mxu0 %v2549
    %2601 = vmatprep.subr.mxu0 0.0
    %2602 = vmatpush2.msra.mxu0 0.0
    %2603 = vmatprep.subr.mxu0 0.0
    %2604 = vmatpush2.msra.mxu0 0.0
    %2605 = vmatprep.subr.mxu0 0.0
    %2606 = vmatpush2.msra.mxu0 0.0
    %2607 = vmatprep.subr.mxu0 0.0
    %2608 = vmatpush2.msra.mxu0 0.0
    %2609 = vmatprep.subr.mxu0 0.0
    %2610 = vmatpush2.msra.mxu0 0.0
    %2611 = vmatprep.subr.mxu0 0.0
    %2612 = vmatpush2.msra.mxu0 0.0
    %2613 = vmatprep.subr.mxu0 0.0
    %2614 = vmatpush2.msra.mxu0 0.0
    %2615 = vmatprep.subr.mxu0 0.0
    %2616 = vmatpush2.msra.mxu0 0.0
    %2617 = vmatprep.subr.mxu0 0.0
    %2618 = vmatpush2.msra.mxu0 0.0
    %2619 = vmatprep.subr.mxu0 0.0
    %2620 = vmatpush2.msra.mxu0 0.0
    %2621 = vmatprep.subr.mxu0 0.0
    %2622 = vmatpush2.msra.mxu0 0.0
    %2623 = vmatprep.subr.mxu0 0.0
    %2624 = vmatpush2.msra.mxu0 0.0
    %2625 = vmatprep.subr.mxu0 0.0
    %2626 = vmatpush2.msra.mxu0 0.0
    %2627 = vmatprep.subr.mxu0 0.0
    %2628 = vmatpush2.msra.mxu0 0.0
    %2629 = vmatprep.subr.mxu0 0.0
    %2630 = vmatpush2.msra.mxu0 0.0
    %2631 = vmatprep.subr.mxu0 0.0
    %2632 = vmatpush2.msra.mxu0 0.0
    %2633 = vmatprep.mubr.f32.mxu0 0.0
    %2634 = vmatmul.mubr.f32.gmra.mxu0 %v2060
    %v2635 = vpop.f32.mrf.mxu0
    %v2636 = vadd.f32 %v2568, %v2635
    %v2637 = vpop.f32.mrf.mxu0
    %2638 = vmatprep.mubr.f32.mxu0 0.0
    %2639 = vmatmul.mubr.f32.gmra.mxu0 %v2061
    %v2640 = vpop.f32.mrf.mxu0
    %v2641 = vadd.f32 %v2568, %v2640
    %v2642 = vpop.f32.mrf.mxu0
    %2643 = vdwg.mxu0
    %s2644 = scalar_lea.vmem [#allocation2], 1664
    %v2645 = vld [vmem:[%s2644] sm:$0xff]
    %v2646 = vld [vmem:[%s2644 + $0x8] sm:$0xff]
    %v2647 = vld [vmem:[%s2644 + $0x10] sm:$0xff]
    %v2648 = vld [vmem:[%s2644 + $0x18] sm:$0xff]
    %v2649 = vld [vmem:[%s2644 + $0x20] sm:$0xff]
    %v2650 = vld [vmem:[%s2644 + $0x28] sm:$0xff]
    %v2651 = vld [vmem:[%s2644 + $0x30] sm:$0xff]
    %v2652 = vld [vmem:[%s2644 + $0x38] sm:$0xff]
    %v2653 = vld [vmem:[%s2644 + $0x40] sm:$0xff]
    %v2654 = vld [vmem:[%s2644 + $0x48] sm:$0xff]
    %v2655 = vld [vmem:[%s2644 + $0x50] sm:$0xff]
    %v2656 = vld [vmem:[%s2644 + $0x58] sm:$0xff]
    %v2657 = vld [vmem:[%s2644 + $0x60] sm:$0xff]
    %v2658 = vld [vmem:[%s2644 + $0x68] sm:$0xff]
    %v2659 = vld [vmem:[%s2644 + $0x70] sm:$0xff]
    %v2660 = vld [vmem:[%s2644 + $0x78] sm:$0xff]
    %v2661 = vlaneseq
    %v2662 = vshrl.u32 %v2661, 7
    %v2663 = vsub.s32 4, %v2662
    %v2664 = vrot.slane %v2063, %v2663
    %2665 = vmatprep.subr.mxu0 0.0
    %2666 = vmatpush1.msra.mxu0 %v2660
    %2667 = vmatprep.subr.mxu0 0.0
    %2668 = vmatpush1.msra.mxu0 %v2659
    %2669 = vmatprep.subr.mxu0 0.0
    %2670 = vmatpush1.msra.mxu0 %v2658
    %2671 = vmatprep.subr.mxu0 0.0
    %2672 = vmatpush1.msra.mxu0 %v2657
    %2673 = vmatprep.subr.mxu0 0.0
    %2674 = vmatpush1.msra.mxu0 %v2656
    %2675 = vmatprep.subr.mxu0 0.0
    %2676 = vmatpush1.msra.mxu0 %v2655
    %2677 = vmatprep.subr.mxu0 0.0
    %2678 = vmatpush1.msra.mxu0 %v2654
    %2679 = vmatprep.subr.mxu0 0.0
    %2680 = vmatpush1.msra.mxu0 %v2653
    %2681 = vmatprep.subr.mxu0 0.0
    %2682 = vmatpush1.msra.mxu0 %v2652
    %2683 = vmatprep.subr.mxu0 0.0
    %2684 = vmatpush1.msra.mxu0 %v2651
    %2685 = vmatprep.subr.mxu0 0.0
    %2686 = vmatpush1.msra.mxu0 %v2650
    %2687 = vmatprep.subr.mxu0 0.0
    %2688 = vmatpush1.msra.mxu0 %v2649
    %2689 = vmatprep.subr.mxu0 0.0
    %2690 = vmatpush1.msra.mxu0 %v2648
    %2691 = vmatprep.subr.mxu0 0.0
    %2692 = vmatpush1.msra.mxu0 %v2647
    %2693 = vmatprep.subr.mxu0 0.0
    %2694 = vmatpush1.msra.mxu0 %v2646
    %2695 = vmatprep.subr.mxu0 0.0
    %2696 = vmatpush1.msra.mxu0 %v2645
    %2697 = vmatprep.subr.mxu0 0.0
    %2698 = vmatpush2.msra.mxu0 0.0
    %2699 = vmatprep.subr.mxu0 0.0
    %2700 = vmatpush2.msra.mxu0 0.0
    %2701 = vmatprep.subr.mxu0 0.0
    %2702 = vmatpush2.msra.mxu0 0.0
    %2703 = vmatprep.subr.mxu0 0.0
    %2704 = vmatpush2.msra.mxu0 0.0
    %2705 = vmatprep.subr.mxu0 0.0
    %2706 = vmatpush2.msra.mxu0 0.0
    %2707 = vmatprep.subr.mxu0 0.0
    %2708 = vmatpush2.msra.mxu0 0.0
    %2709 = vmatprep.subr.mxu0 0.0
    %2710 = vmatpush2.msra.mxu0 0.0
    %2711 = vmatprep.subr.mxu0 0.0
    %2712 = vmatpush2.msra.mxu0 0.0
    %2713 = vmatprep.subr.mxu0 0.0
    %2714 = vmatpush2.msra.mxu0 0.0
    %2715 = vmatprep.subr.mxu0 0.0
    %2716 = vmatpush2.msra.mxu0 0.0
    %2717 = vmatprep.subr.mxu0 0.0
    %2718 = vmatpush2.msra.mxu0 0.0
    %2719 = vmatprep.subr.mxu0 0.0
    %2720 = vmatpush2.msra.mxu0 0.0
    %2721 = vmatprep.subr.mxu0 0.0
    %2722 = vmatpush2.msra.mxu0 0.0
    %2723 = vmatprep.subr.mxu0 0.0
    %2724 = vmatpush2.msra.mxu0 0.0
    %2725 = vmatprep.subr.mxu0 0.0
    %2726 = vmatpush2.msra.mxu0 0.0
    %2727 = vmatprep.subr.mxu0 0.0
    %2728 = vmatpush2.msra.mxu0 0.0
    %2729 = vmatprep.mubr.f32.mxu0 0.0
    %2730 = vmatmul.mubr.f32.gmra.mxu0 %v2060
    %v2731 = vpop.f32.mrf.mxu0
    %v2732 = vadd.f32 %v2664, %v2731
    %v2733 = vpop.f32.mrf.mxu0
    %2734 = vmatprep.mubr.f32.mxu0 0.0
    %2735 = vmatmul.mubr.f32.gmra.mxu0 %v2061
    %v2736 = vpop.f32.mrf.mxu0
    %v2737 = vadd.f32 %v2664, %v2736
    %v2738 = vpop.f32.mrf.mxu0
    %2739 = vdwg.mxu0
    %s2740 = scalar_lea.vmem [#allocation2], 1792
    %v2741 = vld [vmem:[%s2740] sm:$0xff]
    %v2742 = vld [vmem:[%s2740 + $0x8] sm:$0xff]
    %v2743 = vld [vmem:[%s2740 + $0x10] sm:$0xff]
    %v2744 = vld [vmem:[%s2740 + $0x18] sm:$0xff]
    %v2745 = vld [vmem:[%s2740 + $0x20] sm:$0xff]
    %v2746 = vld [vmem:[%s2740 + $0x28] sm:$0xff]
    %v2747 = vld [vmem:[%s2740 + $0x30] sm:$0xff]
    %v2748 = vld [vmem:[%s2740 + $0x38] sm:$0xff]
    %v2749 = vld [vmem:[%s2740 + $0x40] sm:$0xff]
    %v2750 = vld [vmem:[%s2740 + $0x48] sm:$0xff]
    %v2751 = vld [vmem:[%s2740 + $0x50] sm:$0xff]
    %v2752 = vld [vmem:[%s2740 + $0x58] sm:$0xff]
    %v2753 = vld [vmem:[%s2740 + $0x60] sm:$0xff]
    %v2754 = vld [vmem:[%s2740 + $0x68] sm:$0xff]
    %v2755 = vld [vmem:[%s2740 + $0x70] sm:$0xff]
    %v2756 = vld [vmem:[%s2740 + $0x78] sm:$0xff]
    %v2757 = vlaneseq
    %v2758 = vshrl.u32 %v2757, 7
    %v2759 = vsub.s32 5, %v2758
    %v2760 = vrot.slane %v2063, %v2759
    %2761 = vmatprep.subr.mxu0 0.0
    %2762 = vmatpush1.msra.mxu0 %v2756
    %2763 = vmatprep.subr.mxu0 0.0
    %2764 = vmatpush1.msra.mxu0 %v2755
    %2765 = vmatprep.subr.mxu0 0.0
    %2766 = vmatpush1.msra.mxu0 %v2754
    %2767 = vmatprep.subr.mxu0 0.0
    %2768 = vmatpush1.msra.mxu0 %v2753
    %2769 = vmatprep.subr.mxu0 0.0
    %2770 = vmatpush1.msra.mxu0 %v2752
    %2771 = vmatprep.subr.mxu0 0.0
    %2772 = vmatpush1.msra.mxu0 %v2751
    %2773 = vmatprep.subr.mxu0 0.0
    %2774 = vmatpush1.msra.mxu0 %v2750
    %2775 = vmatprep.subr.mxu0 0.0
    %2776 = vmatpush1.msra.mxu0 %v2749
    %2777 = vmatprep.subr.mxu0 0.0
    %2778 = vmatpush1.msra.mxu0 %v2748
    %2779 = vmatprep.subr.mxu0 0.0
    %2780 = vmatpush1.msra.mxu0 %v2747
    %2781 = vmatprep.subr.mxu0 0.0
    %2782 = vmatpush1.msra.mxu0 %v2746
    %2783 = vmatprep.subr.mxu0 0.0
    %2784 = vmatpush1.msra.mxu0 %v2745
    %2785 = vmatprep.subr.mxu0 0.0
    %2786 = vmatpush1.msra.mxu0 %v2744
    %2787 = vmatprep.subr.mxu0 0.0
    %2788 = vmatpush1.msra.mxu0 %v2743
    %2789 = vmatprep.subr.mxu0 0.0
    %2790 = vmatpush1.msra.mxu0 %v2742
    %2791 = vmatprep.subr.mxu0 0.0
    %2792 = vmatpush1.msra.mxu0 %v2741
    %2793 = vmatprep.subr.mxu0 0.0
    %2794 = vmatpush2.msra.mxu0 0.0
    %2795 = vmatprep.subr.mxu0 0.0
    %2796 = vmatpush2.msra.mxu0 0.0
    %2797 = vmatprep.subr.mxu0 0.0
    %2798 = vmatpush2.msra.mxu0 0.0
    %2799 = vmatprep.subr.mxu0 0.0
    %2800 = vmatpush2.msra.mxu0 0.0
    %2801 = vmatprep.subr.mxu0 0.0
    %2802 = vmatpush2.msra.mxu0 0.0
    %2803 = vmatprep.subr.mxu0 0.0
    %2804 = vmatpush2.msra.mxu0 0.0
    %2805 = vmatprep.subr.mxu0 0.0
    %2806 = vmatpush2.msra.mxu0 0.0
    %2807 = vmatprep.subr.mxu0 0.0
    %2808 = vmatpush2.msra.mxu0 0.0
    %2809 = vmatprep.subr.mxu0 0.0
    %2810 = vmatpush2.msra.mxu0 0.0
    %2811 = vmatprep.subr.mxu0 0.0
    %2812 = vmatpush2.msra.mxu0 0.0
    %2813 = vmatprep.subr.mxu0 0.0
    %2814 = vmatpush2.msra.mxu0 0.0
    %2815 = vmatprep.subr.mxu0 0.0
    %2816 = vmatpush2.msra.mxu0 0.0
    %2817 = vmatprep.subr.mxu0 0.0
    %2818 = vmatpush2.msra.mxu0 0.0
    %2819 = vmatprep.subr.mxu0 0.0
    %2820 = vmatpush2.msra.mxu0 0.0
    %2821 = vmatprep.subr.mxu0 0.0
    %2822 = vmatpush2.msra.mxu0 0.0
    %2823 = vmatprep.subr.mxu0 0.0
    %2824 = vmatpush2.msra.mxu0 0.0
    %2825 = vmatprep.mubr.f32.mxu0 0.0
    %2826 = vmatmul.mubr.f32.gmra.mxu0 %v2060
    %v2827 = vpop.f32.mrf.mxu0
    %v2828 = vadd.f32 %v2760, %v2827
    %v2829 = vpop.f32.mrf.mxu0
    %2830 = vmatprep.mubr.f32.mxu0 0.0
    %2831 = vmatmul.mubr.f32.gmra.mxu0 %v2061
    %v2832 = vpop.f32.mrf.mxu0
    %v2833 = vadd.f32 %v2760, %v2832
    %v2834 = vpop.f32.mrf.mxu0
    %2835 = vdwg.mxu0
    %2836 = vmatprep.subr.mxu0 0.0
    %2837 = vmatpush1.xpose.msra.mxu0 0.0
    %2838 = vmatprep.subr.mxu0 0.0
    %2839 = vmatpush1.xpose.msra.mxu0 0.0
    %2840 = vmatprep.subr.mxu0 0.0
    %2841 = vmatpush1.xpose.msra.mxu0 0.0
    %2842 = vmatprep.subr.mxu0 0.0
    %2843 = vmatpush1.xpose.msra.mxu0 0.0
    %2844 = vmatprep.subr.mxu0 0.0
    %2845 = vmatpush1.xpose.msra.mxu0 0.0
    %2846 = vmatprep.subr.mxu0 0.0
    %2847 = vmatpush1.xpose.msra.mxu0 0.0
    %2848 = vmatprep.subr.mxu0 0.0
    %2849 = vmatpush1.xpose.msra.mxu0 0.0
    %2850 = vmatprep.subr.mxu0 0.0
    %2851 = vmatpush1.xpose.msra.mxu0 0.0
    %2852 = vmatprep.subr.mxu0 0.0
    %2853 = vmatpush1.xpose.msra.mxu0 0.0
    %2854 = vmatprep.subr.mxu0 0.0
    %2855 = vmatpush1.xpose.msra.mxu0 0.0
    %2856 = vmatprep.subr.mxu0 0.0
    %2857 = vmatpush1.xpose.msra.mxu0 0.0
    %2858 = vmatprep.subr.mxu0 0.0
    %2859 = vmatpush1.xpose.msra.mxu0 0.0
    %2860 = vmatprep.subr.mxu0 0.0
    %2861 = vmatpush1.xpose.msra.mxu0 0.0
    %2862 = vmatprep.subr.mxu0 0.0
    %2863 = vmatpush1.xpose.msra.mxu0 0.0
    %2864 = vmatprep.subr.mxu0 0.0
    %2865 = vmatpush1.xpose.msra.mxu0 %v2737
    %2866 = vmatprep.subr.mxu0 0.0
    %2867 = vmatpush1.xpose.msra.mxu0 %v2732
    %2868 = vmatprep.subr.mxu0 0.0
    %2869 = vmatpush2.xpose.msra.mxu0 0.0
    %2870 = vmatprep.subr.mxu0 0.0
    %2871 = vmatpush2.xpose.msra.mxu0 0.0
    %2872 = vmatprep.subr.mxu0 0.0
    %2873 = vmatpush2.xpose.msra.mxu0 0.0
    %2874 = vmatprep.subr.mxu0 0.0
    %2875 = vmatpush2.xpose.msra.mxu0 0.0
    %2876 = vmatprep.subr.mxu0 0.0
    %2877 = vmatpush2.xpose.msra.mxu0 0.0
    %2878 = vmatprep.subr.mxu0 0.0
    %2879 = vmatpush2.xpose.msra.mxu0 0.0
    %2880 = vmatprep.subr.mxu0 0.0
    %2881 = vmatpush2.xpose.msra.mxu0 0.0
    %2882 = vmatprep.subr.mxu0 0.0
    %2883 = vmatpush2.xpose.msra.mxu0 0.0
    %2884 = vmatprep.subr.mxu0 0.0
    %2885 = vmatpush2.xpose.msra.mxu0 0.0
    %2886 = vmatprep.subr.mxu0 0.0
    %2887 = vmatpush2.xpose.msra.mxu0 0.0
    %2888 = vmatprep.subr.mxu0 0.0
    %2889 = vmatpush2.xpose.msra.mxu0 0.0
    %2890 = vmatprep.subr.mxu0 0.0
    %2891 = vmatpush2.xpose.msra.mxu0 0.0
    %2892 = vmatprep.subr.mxu0 0.0
    %2893 = vmatpush2.xpose.msra.mxu0 0.0
    %2894 = vmatprep.subr.mxu0 0.0
    %2895 = vmatpush2.xpose.msra.mxu0 0.0
    %2896 = vmatprep.subr.mxu0 0.0
    %2897 = vmatpush2.xpose.msra.mxu0 0.0
    %2898 = vmatprep.subr.mxu0 0.0
    %2899 = vmatpush2.xpose.msra.mxu0 0.0
    %2900 = vmatprep.mubr.f32.mxu0 0.0
    %2901 = vmatmul.mubr.f32.gmra.mxu0 %v2636
    %v2902 = vpop.f32.mrf.mxu0
    %v2903 = vadd.f32 %v109, %v2902
    %v2904 = vpop.f32.mrf.mxu0
    %2905 = vmatprep.mubr.f32.mxu0 0.0
    %2906 = vmatmul.mubr.f32.gmra.mxu0 %v2641
    %v2907 = vpop.f32.mrf.mxu0
    %v2908 = vadd.f32 %v110, %v2907
    %v2909 = vpop.f32.mrf.mxu0
    %2910 = vdwg.mxu0
    %v2911 = vsel %vm475, %v2903, -inf
    %2912 = vmax.xlane.f32.xlu0 %v2911
    %v2913 = vpop.xlane.xlu0 %2912
    %v2914 = vsel %vm475, %v2908, -inf
    %2915 = vmax.xlane.f32.xlu0 %v2914
    %v2916 = vpop.xlane.xlu0 %2915
    %v2917 = vsub.f32 %v2903, %v2913
    %v2918 = vsub.f32 %v2908, %v2916
    %v2919 = vmul.f32 %v2917, 1.442695
    %v2920 = vpow.pop %v2919
    %v2921 = vmul.f32 %v2918, 1.442695
    %v2922 = vpow.pop %v2921
    %v2923 = vsel %vm475, %v2920, 0.0
    %2924 = vadd.xlane.f32.xlu0 %v2923
    %v2925 = vpop.xlane.xlu0 %2924
    %v2926 = vsel %vm475, %v2922, 0.0
    %2927 = vadd.xlane.f32.xlu0 %v2926
    %v2928 = vpop.xlane.xlu0 %2927
    %v2929 = vrcp.pop %v2925
    %v2930 = vrcp.pop %v2928
    %v2931 = vmul.f32 %v2920, %v2929
    %v2932 = vmul.f32 %v2922, %v2930
    %v2934 = vsel %vm475, %v2931, 0
    %v2937 = vsel %vm475, %v2932, 0
    %2939 = vmatprep.subr.mxu0 0.0
    %2940 = vmatpush1.msra.mxu0 0.0
    %2941 = vmatprep.subr.mxu0 0.0
    %2942 = vmatpush1.msra.mxu0 0.0
    %2943 = vmatprep.subr.mxu0 0.0
    %2944 = vmatpush1.msra.mxu0 0.0
    %2945 = vmatprep.subr.mxu0 0.0
    %2946 = vmatpush1.msra.mxu0 0.0
    %2947 = vmatprep.subr.mxu0 0.0
    %2948 = vmatpush1.msra.mxu0 0.0
    %2949 = vmatprep.subr.mxu0 0.0
    %2950 = vmatpush1.msra.mxu0 0.0
    %2951 = vmatprep.subr.mxu0 0.0
    %2952 = vmatpush1.msra.mxu0 0.0
    %2953 = vmatprep.subr.mxu0 0.0
    %2954 = vmatpush1.msra.mxu0 0.0
    %2955 = vmatprep.subr.mxu0 0.0
    %2956 = vmatpush1.msra.mxu0 0.0
    %2957 = vmatprep.subr.mxu0 0.0
    %2958 = vmatpush1.msra.mxu0 0.0
    %2959 = vmatprep.subr.mxu0 0.0
    %2960 = vmatpush1.msra.mxu0 0.0
    %2961 = vmatprep.subr.mxu0 0.0
    %2962 = vmatpush1.msra.mxu0 0.0
    %2963 = vmatprep.subr.mxu0 0.0
    %2964 = vmatpush1.msra.mxu0 0.0
    %2965 = vmatprep.subr.mxu0 0.0
    %2966 = vmatpush1.msra.mxu0 0.0
    %2967 = vmatprep.subr.mxu0 0.0
    %2968 = vmatpush1.msra.mxu0 %v2833
    %2969 = vmatprep.subr.mxu0 0.0
    %2970 = vmatpush1.msra.mxu0 %v2828
    %2971 = vmatprep.subr.mxu0 0.0
    %2972 = vmatpush2.msra.mxu0 0.0
    %2973 = vmatprep.subr.mxu0 0.0
    %2974 = vmatpush2.msra.mxu0 0.0
    %2975 = vmatprep.subr.mxu0 0.0
    %2976 = vmatpush2.msra.mxu0 0.0
    %2977 = vmatprep.subr.mxu0 0.0
    %2978 = vmatpush2.msra.mxu0 0.0
    %2979 = vmatprep.subr.mxu0 0.0
    %2980 = vmatpush2.msra.mxu0 0.0
    %2981 = vmatprep.subr.mxu0 0.0
    %2982 = vmatpush2.msra.mxu0 0.0
    %2983 = vmatprep.subr.mxu0 0.0
    %2984 = vmatpush2.msra.mxu0 0.0
    %2985 = vmatprep.subr.mxu0 0.0
    %2986 = vmatpush2.msra.mxu0 0.0
    %2987 = vmatprep.subr.mxu0 0.0
    %2988 = vmatpush2.msra.mxu0 0.0
    %2989 = vmatprep.subr.mxu0 0.0
    %2990 = vmatpush2.msra.mxu0 0.0
    %2991 = vmatprep.subr.mxu0 0.0
    %2992 = vmatpush2.msra.mxu0 0.0
    %2993 = vmatprep.subr.mxu0 0.0
    %2994 = vmatpush2.msra.mxu0 0.0
    %2995 = vmatprep.subr.mxu0 0.0
    %2996 = vmatpush2.msra.mxu0 0.0
    %2997 = vmatprep.subr.mxu0 0.0
    %2998 = vmatpush2.msra.mxu0 0.0
    %2999 = vmatprep.subr.mxu0 0.0
    %3000 = vmatpush2.msra.mxu0 0.0
    %3001 = vmatprep.subr.mxu0 0.0
    %3002 = vmatpush2.msra.mxu0 0.0
    %3003 = vmatprep.mubr.f32.mxu0 0.0
    %3004 = vmatmul.mubr.f32.gmra.mxu0 %v2934
    %v3005 = vpop.f32.mrf.mxu0
    %v3006 = vadd.f32 0.0, %v3005
    %v3007 = vpop.f32.mrf.mxu0
    %3008 = vmatprep.mubr.f32.mxu0 0.0
    %3009 = vmatmul.mubr.f32.gmra.mxu0 %v2937
    %v3010 = vpop.f32.mrf.mxu0
    %v3011 = vadd.f32 0.0, %v3010
    %v3012 = vpop.f32.mrf.mxu0
    %3013 = vdwg.mxu0
    %s3014 = scalar_lea.vmem [#allocation5], 512
    %v3015 = vld [vmem:[%s3014] sm:$0xff]
    %v3016 = vld [vmem:[%s3014 + $0x8] sm:$0xff]
    %v3017 = vld [vmem:[%s3014 + $0x10] sm:$0xff]
    %v3018 = vld [vmem:[%s3014 + $0x18] sm:$0xff]
    %v3019 = vld [vmem:[%s3014 + $0x20] sm:$0xff]
    %v3020 = vld [vmem:[%s3014 + $0x28] sm:$0xff]
    %v3021 = vld [vmem:[%s3014 + $0x30] sm:$0xff]
    %v3022 = vld [vmem:[%s3014 + $0x38] sm:$0xff]
    %v3023 = vld [vmem:[%s3014 + $0x40] sm:$0xff]
    %v3024 = vld [vmem:[%s3014 + $0x48] sm:$0xff]
    %v3025 = vld [vmem:[%s3014 + $0x50] sm:$0xff]
    %v3026 = vld [vmem:[%s3014 + $0x58] sm:$0xff]
    %v3027 = vld [vmem:[%s3014 + $0x60] sm:$0xff]
    %v3028 = vld [vmem:[%s3014 + $0x68] sm:$0xff]
    %v3029 = vld [vmem:[%s3014 + $0x70] sm:$0xff]
    %v3030 = vld [vmem:[%s3014 + $0x78] sm:$0xff]
    %3031 = vmatprep.subr.mxu0 0.0
    %3032 = vmatpush1.msra.mxu0 %v3030
    %3033 = vmatprep.subr.mxu0 0.0
    %3034 = vmatpush1.msra.mxu0 %v3029
    %3035 = vmatprep.subr.mxu0 0.0
    %3036 = vmatpush1.msra.mxu0 %v3028
    %3037 = vmatprep.subr.mxu0 0.0
    %3038 = vmatpush1.msra.mxu0 %v3027
    %3039 = vmatprep.subr.mxu0 0.0
    %3040 = vmatpush1.msra.mxu0 %v3026
    %3041 = vmatprep.subr.mxu0 0.0
    %3042 = vmatpush1.msra.mxu0 %v3025
    %3043 = vmatprep.subr.mxu0 0.0
    %3044 = vmatpush1.msra.mxu0 %v3024
    %3045 = vmatprep.subr.mxu0 0.0
    %3046 = vmatpush1.msra.mxu0 %v3023
    %3047 = vmatprep.subr.mxu0 0.0
    %3048 = vmatpush1.msra.mxu0 %v3022
    %3049 = vmatprep.subr.mxu0 0.0
    %3050 = vmatpush1.msra.mxu0 %v3021
    %3051 = vmatprep.subr.mxu0 0.0
    %3052 = vmatpush1.msra.mxu0 %v3020
    %3053 = vmatprep.subr.mxu0 0.0
    %3054 = vmatpush1.msra.mxu0 %v3019
    %3055 = vmatprep.subr.mxu0 0.0
    %3056 = vmatpush1.msra.mxu0 %v3018
    %3057 = vmatprep.subr.mxu0 0.0
    %3058 = vmatpush1.msra.mxu0 %v3017
    %3059 = vmatprep.subr.mxu0 0.0
    %3060 = vmatpush1.msra.mxu0 %v3016
    %3061 = vmatprep.subr.mxu0 0.0
    %3062 = vmatpush1.msra.mxu0 %v3015
    %3063 = vmatprep.subr.mxu0 0.0
    %3064 = vmatpush2.msra.mxu0 0.0
    %3065 = vmatprep.subr.mxu0 0.0
    %3066 = vmatpush2.msra.mxu0 0.0
    %3067 = vmatprep.subr.mxu0 0.0
    %3068 = vmatpush2.msra.mxu0 0.0
    %3069 = vmatprep.subr.mxu0 0.0
    %3070 = vmatpush2.msra.mxu0 0.0
    %3071 = vmatprep.subr.mxu0 0.0
    %3072 = vmatpush2.msra.mxu0 0.0
    %3073 = vmatprep.subr.mxu0 0.0
    %3074 = vmatpush2.msra.mxu0 0.0
    %3075 = vmatprep.subr.mxu0 0.0
    %3076 = vmatpush2.msra.mxu0 0.0
    %3077 = vmatprep.subr.mxu0 0.0
    %3078 = vmatpush2.msra.mxu0 0.0
    %3079 = vmatprep.subr.mxu0 0.0
    %3080 = vmatpush2.msra.mxu0 0.0
    %3081 = vmatprep.subr.mxu0 0.0
    %3082 = vmatpush2.msra.mxu0 0.0
    %3083 = vmatprep.subr.mxu0 0.0
    %3084 = vmatpush2.msra.mxu0 0.0
    %3085 = vmatprep.subr.mxu0 0.0
    %3086 = vmatpush2.msra.mxu0 0.0
    %3087 = vmatprep.subr.mxu0 0.0
    %3088 = vmatpush2.msra.mxu0 0.0
    %3089 = vmatprep.subr.mxu0 0.0
    %3090 = vmatpush2.msra.mxu0 0.0
    %3091 = vmatprep.subr.mxu0 0.0
    %3092 = vmatpush2.msra.mxu0 0.0
    %3093 = vmatprep.subr.mxu0 0.0
    %3094 = vmatpush2.msra.mxu0 0.0
    %3095 = vmatprep.mubr.f32.mxu0 0.0
    %3096 = vmatmul.mubr.f32.gmra.mxu0 %v3006
    %v3097 = vpop.f32.mrf.mxu0
    %v3098 = vadd.f32 0.0, %v3097
    %v3099 = vpop.f32.mrf.mxu0
    %3100 = vmatprep.mubr.f32.mxu0 0.0
    %3101 = vmatmul.mubr.f32.gmra.mxu0 %v3011
    %v3102 = vpop.f32.mrf.mxu0
    %v3103 = vadd.f32 0.0, %v3102
    %v3104 = vpop.f32.mrf.mxu0
    %3105 = vdwg.mxu0
    %3106 = vmatprep.subr.mxu0 0.0
    %3107 = vmatpush1.msra.mxu0 %v2547
    %3108 = vmatprep.subr.mxu0 0.0
    %3109 = vmatpush1.msra.mxu0 %v2546
    %3110 = vmatprep.subr.mxu0 0.0
    %3111 = vmatpush1.msra.mxu0 %v2545
    %3112 = vmatprep.subr.mxu0 0.0
    %3113 = vmatpush1.msra.mxu0 %v2544
    %3114 = vmatprep.subr.mxu0 0.0
    %3115 = vmatpush1.msra.mxu0 %v2543
    %3116 = vmatprep.subr.mxu0 0.0
    %3117 = vmatpush1.msra.mxu0 %v2542
    %3118 = vmatprep.subr.mxu0 0.0
    %3119 = vmatpush1.msra.mxu0 %v2541
    %3120 = vmatprep.subr.mxu0 0.0
    %3121 = vmatpush1.msra.mxu0 %v2540
    %3122 = vmatprep.subr.mxu0 0.0
    %3123 = vmatpush1.msra.mxu0 %v2539
    %3124 = vmatprep.subr.mxu0 0.0
    %3125 = vmatpush1.msra.mxu0 %v2538
    %3126 = vmatprep.subr.mxu0 0.0
    %3127 = vmatpush1.msra.mxu0 %v2537
    %3128 = vmatprep.subr.mxu0 0.0
    %3129 = vmatpush1.msra.mxu0 %v2536
    %3130 = vmatprep.subr.mxu0 0.0
    %3131 = vmatpush1.msra.mxu0 %v2535
    %3132 = vmatprep.subr.mxu0 0.0
    %3133 = vmatpush1.msra.mxu0 %v2534
    %3134 = vmatprep.subr.mxu0 0.0
    %3135 = vmatpush1.msra.mxu0 %v2533
    %3136 = vmatprep.subr.mxu0 0.0
    %3137 = vmatpush1.msra.mxu0 %v2532
    %3138 = vmatprep.subr.mxu0 0.0
    %3139 = vmatpush2.msra.mxu0 0.0
    %3140 = vmatprep.subr.mxu0 0.0
    %3141 = vmatpush2.msra.mxu0 0.0
    %3142 = vmatprep.subr.mxu0 0.0
    %3143 = vmatpush2.msra.mxu0 0.0
    %3144 = vmatprep.subr.mxu0 0.0
    %3145 = vmatpush2.msra.mxu0 0.0
    %3146 = vmatprep.subr.mxu0 0.0
    %3147 = vmatpush2.msra.mxu0 0.0
    %3148 = vmatprep.subr.mxu0 0.0
    %3149 = vmatpush2.msra.mxu0 0.0
    %3150 = vmatprep.subr.mxu0 0.0
    %3151 = vmatpush2.msra.mxu0 0.0
    %3152 = vmatprep.subr.mxu0 0.0
    %3153 = vmatpush2.msra.mxu0 0.0
    %3154 = vmatprep.subr.mxu0 0.0
    %3155 = vmatpush2.msra.mxu0 0.0
    %3156 = vmatprep.subr.mxu0 0.0
    %3157 = vmatpush2.msra.mxu0 0.0
    %3158 = vmatprep.subr.mxu0 0.0
    %3159 = vmatpush2.msra.mxu0 0.0
    %3160 = vmatprep.subr.mxu0 0.0
    %3161 = vmatpush2.msra.mxu0 0.0
    %3162 = vmatprep.subr.mxu0 0.0
    %3163 = vmatpush2.msra.mxu0 0.0
    %3164 = vmatprep.subr.mxu0 0.0
    %3165 = vmatpush2.msra.mxu0 0.0
    %3166 = vmatprep.subr.mxu0 0.0
    %3167 = vmatpush2.msra.mxu0 0.0
    %3168 = vmatprep.subr.mxu0 0.0
    %3169 = vmatpush2.msra.mxu0 0.0
    %3170 = vmatprep.mubr.f32.mxu0 0.0
    %3171 = vmatmul.mubr.f32.gmra.mxu0 %v2523
    %v3172 = vpop.f32.mrf.mxu0
    %v3173 = vadd.f32 %v3098, %v3172
    %v3174 = vpop.f32.mrf.mxu0
    %3175 = vmatprep.mubr.f32.mxu0 0.0
    %3176 = vmatmul.mubr.f32.gmra.mxu0 %v2528
    %v3177 = vpop.f32.mrf.mxu0
    %v3178 = vadd.f32 %v3103, %v3177
    %v3179 = vpop.f32.mrf.mxu0
    %3180 = vdwg.mxu0
    %s3181 = scalar_lea.vmem [#allocation2], 1920
    %v3182 = vld [vmem:[%s3181] sm:$0xff]
    %v3183 = vld [vmem:[%s3181 + $0x8] sm:$0xff]
    %v3184 = vld [vmem:[%s3181 + $0x10] sm:$0xff]
    %v3185 = vld [vmem:[%s3181 + $0x18] sm:$0xff]
    %v3186 = vld [vmem:[%s3181 + $0x20] sm:$0xff]
    %v3187 = vld [vmem:[%s3181 + $0x28] sm:$0xff]
    %v3188 = vld [vmem:[%s3181 + $0x30] sm:$0xff]
    %v3189 = vld [vmem:[%s3181 + $0x38] sm:$0xff]
    %v3190 = vld [vmem:[%s3181 + $0x40] sm:$0xff]
    %v3191 = vld [vmem:[%s3181 + $0x48] sm:$0xff]
    %v3192 = vld [vmem:[%s3181 + $0x50] sm:$0xff]
    %v3193 = vld [vmem:[%s3181 + $0x58] sm:$0xff]
    %v3194 = vld [vmem:[%s3181 + $0x60] sm:$0xff]
    %v3195 = vld [vmem:[%s3181 + $0x68] sm:$0xff]
    %v3196 = vld [vmem:[%s3181 + $0x70] sm:$0xff]
    %v3197 = vld [vmem:[%s3181 + $0x78] sm:$0xff]
    %v3198 = vlaneseq
    %v3199 = vshrl.u32 %v3198, 7
    %v3200 = vsub.s32 6, %v3199
    %v3201 = vrot.slane %v2063, %v3200
    %3202 = vmatprep.subr.mxu0 0.0
    %3203 = vmatpush1.msra.mxu0 %v3197
    %3204 = vmatprep.subr.mxu0 0.0
    %3205 = vmatpush1.msra.mxu0 %v3196
    %3206 = vmatprep.subr.mxu0 0.0
    %3207 = vmatpush1.msra.mxu0 %v3195
    %3208 = vmatprep.subr.mxu0 0.0
    %3209 = vmatpush1.msra.mxu0 %v3194
    %3210 = vmatprep.subr.mxu0 0.0
    %3211 = vmatpush1.msra.mxu0 %v3193
    %3212 = vmatprep.subr.mxu0 0.0
    %3213 = vmatpush1.msra.mxu0 %v3192
    %3214 = vmatprep.subr.mxu0 0.0
    %3215 = vmatpush1.msra.mxu0 %v3191
    %3216 = vmatprep.subr.mxu0 0.0
    %3217 = vmatpush1.msra.mxu0 %v3190
    %3218 = vmatprep.subr.mxu0 0.0
    %3219 = vmatpush1.msra.mxu0 %v3189
    %3220 = vmatprep.subr.mxu0 0.0
    %3221 = vmatpush1.msra.mxu0 %v3188
    %3222 = vmatprep.subr.mxu0 0.0
    %3223 = vmatpush1.msra.mxu0 %v3187
    %3224 = vmatprep.subr.mxu0 0.0
    %3225 = vmatpush1.msra.mxu0 %v3186
    %3226 = vmatprep.subr.mxu0 0.0
    %3227 = vmatpush1.msra.mxu0 %v3185
    %3228 = vmatprep.subr.mxu0 0.0
    %3229 = vmatpush1.msra.mxu0 %v3184
    %3230 = vmatprep.subr.mxu0 0.0
    %3231 = vmatpush1.msra.mxu0 %v3183
    %3232 = vmatprep.subr.mxu0 0.0
    %3233 = vmatpush1.msra.mxu0 %v3182
    %3234 = vmatprep.subr.mxu0 0.0
    %3235 = vmatpush2.msra.mxu0 0.0
    %3236 = vmatprep.subr.mxu0 0.0
    %3237 = vmatpush2.msra.mxu0 0.0
    %3238 = vmatprep.subr.mxu0 0.0
    %3239 = vmatpush2.msra.mxu0 0.0
    %3240 = vmatprep.subr.mxu0 0.0
    %3241 = vmatpush2.msra.mxu0 0.0
    %3242 = vmatprep.subr.mxu0 0.0
    %3243 = vmatpush2.msra.mxu0 0.0
    %3244 = vmatprep.subr.mxu0 0.0
    %3245 = vmatpush2.msra.mxu0 0.0
    %3246 = vmatprep.subr.mxu0 0.0
    %3247 = vmatpush2.msra.mxu0 0.0
    %3248 = vmatprep.subr.mxu0 0.0
    %3249 = vmatpush2.msra.mxu0 0.0
    %3250 = vmatprep.subr.mxu0 0.0
    %3251 = vmatpush2.msra.mxu0 0.0
    %3252 = vmatprep.subr.mxu0 0.0
    %3253 = vmatpush2.msra.mxu0 0.0
    %3254 = vmatprep.subr.mxu0 0.0
    %3255 = vmatpush2.msra.mxu0 0.0
    %3256 = vmatprep.subr.mxu0 0.0
    %3257 = vmatpush2.msra.mxu0 0.0
    %3258 = vmatprep.subr.mxu0 0.0
    %3259 = vmatpush2.msra.mxu0 0.0
    %3260 = vmatprep.subr.mxu0 0.0
    %3261 = vmatpush2.msra.mxu0 0.0
    %3262 = vmatprep.subr.mxu0 0.0
    %3263 = vmatpush2.msra.mxu0 0.0
    %3264 = vmatprep.subr.mxu0 0.0
    %3265 = vmatpush2.msra.mxu0 0.0
    %3266 = vmatprep.mubr.f32.mxu0 0.0
    %3267 = vmatmul.mubr.f32.gmra.mxu0 %v2060
    %v3268 = vpop.f32.mrf.mxu0
    %v3269 = vadd.f32 %v3201, %v3268
    %v3270 = vpop.f32.mrf.mxu0
    %3271 = vmatprep.mubr.f32.mxu0 0.0
    %3272 = vmatmul.mubr.f32.gmra.mxu0 %v2061
    %v3273 = vpop.f32.mrf.mxu0
    %v3274 = vadd.f32 %v3201, %v3273
    %v3275 = vpop.f32.mrf.mxu0
    %3276 = vdwg.mxu0
    %s3277 = scalar_lea.vmem [#allocation2], 2048
    %v3278 = vld [vmem:[%s3277] sm:$0xff]
    %v3279 = vld [vmem:[%s3277 + $0x8] sm:$0xff]
    %v3280 = vld [vmem:[%s3277 + $0x10] sm:$0xff]
    %v3281 = vld [vmem:[%s3277 + $0x18] sm:$0xff]
    %v3282 = vld [vmem:[%s3277 + $0x20] sm:$0xff]
    %v3283 = vld [vmem:[%s3277 + $0x28] sm:$0xff]
    %v3284 = vld [vmem:[%s3277 + $0x30] sm:$0xff]
    %v3285 = vld [vmem:[%s3277 + $0x38] sm:$0xff]
    %v3286 = vld [vmem:[%s3277 + $0x40] sm:$0xff]
    %v3287 = vld [vmem:[%s3277 + $0x48] sm:$0xff]
    %v3288 = vld [vmem:[%s3277 + $0x50] sm:$0xff]
    %v3289 = vld [vmem:[%s3277 + $0x58] sm:$0xff]
    %v3290 = vld [vmem:[%s3277 + $0x60] sm:$0xff]
    %v3291 = vld [vmem:[%s3277 + $0x68] sm:$0xff]
    %v3292 = vld [vmem:[%s3277 + $0x70] sm:$0xff]
    %v3293 = vld [vmem:[%s3277 + $0x78] sm:$0xff]
    %v3294 = vlaneseq
    %v3295 = vshrl.u32 %v3294, 7
    %v3296 = vsub.s32 7, %v3295
    %v3297 = vrot.slane %v2063, %v3296
    %3298 = vmatprep.subr.mxu0 0.0
    %3299 = vmatpush1.msra.mxu0 %v3293
    %3300 = vmatprep.subr.mxu0 0.0
    %3301 = vmatpush1.msra.mxu0 %v3292
    %3302 = vmatprep.subr.mxu0 0.0
    %3303 = vmatpush1.msra.mxu0 %v3291
    %3304 = vmatprep.subr.mxu0 0.0
    %3305 = vmatpush1.msra.mxu0 %v3290
    %3306 = vmatprep.subr.mxu0 0.0
    %3307 = vmatpush1.msra.mxu0 %v3289
    %3308 = vmatprep.subr.mxu0 0.0
    %3309 = vmatpush1.msra.mxu0 %v3288
    %3310 = vmatprep.subr.mxu0 0.0
    %3311 = vmatpush1.msra.mxu0 %v3287
    %3312 = vmatprep.subr.mxu0 0.0
    %3313 = vmatpush1.msra.mxu0 %v3286
    %3314 = vmatprep.subr.mxu0 0.0
    %3315 = vmatpush1.msra.mxu0 %v3285
    %3316 = vmatprep.subr.mxu0 0.0
    %3317 = vmatpush1.msra.mxu0 %v3284
    %3318 = vmatprep.subr.mxu0 0.0
    %3319 = vmatpush1.msra.mxu0 %v3283
    %3320 = vmatprep.subr.mxu0 0.0
    %3321 = vmatpush1.msra.mxu0 %v3282
    %3322 = vmatprep.subr.mxu0 0.0
    %3323 = vmatpush1.msra.mxu0 %v3281
    %3324 = vmatprep.subr.mxu0 0.0
    %3325 = vmatpush1.msra.mxu0 %v3280
    %3326 = vmatprep.subr.mxu0 0.0
    %3327 = vmatpush1.msra.mxu0 %v3279
    %3328 = vmatprep.subr.mxu0 0.0
    %3329 = vmatpush1.msra.mxu0 %v3278
    %3330 = vmatprep.subr.mxu0 0.0
    %3331 = vmatpush2.msra.mxu0 0.0
    %3332 = vmatprep.subr.mxu0 0.0
    %3333 = vmatpush2.msra.mxu0 0.0
    %3334 = vmatprep.subr.mxu0 0.0
    %3335 = vmatpush2.msra.mxu0 0.0
    %3336 = vmatprep.subr.mxu0 0.0
    %3337 = vmatpush2.msra.mxu0 0.0
    %3338 = vmatprep.subr.mxu0 0.0
    %3339 = vmatpush2.msra.mxu0 0.0
    %3340 = vmatprep.subr.mxu0 0.0
    %3341 = vmatpush2.msra.mxu0 0.0
    %3342 = vmatprep.subr.mxu0 0.0
    %3343 = vmatpush2.msra.mxu0 0.0
    %3344 = vmatprep.subr.mxu0 0.0
    %3345 = vmatpush2.msra.mxu0 0.0
    %3346 = vmatprep.subr.mxu0 0.0
    %3347 = vmatpush2.msra.mxu0 0.0
    %3348 = vmatprep.subr.mxu0 0.0
    %3349 = vmatpush2.msra.mxu0 0.0
    %3350 = vmatprep.subr.mxu0 0.0
    %3351 = vmatpush2.msra.mxu0 0.0
    %3352 = vmatprep.subr.mxu0 0.0
    %3353 = vmatpush2.msra.mxu0 0.0
    %3354 = vmatprep.subr.mxu0 0.0
    %3355 = vmatpush2.msra.mxu0 0.0
    %3356 = vmatprep.subr.mxu0 0.0
    %3357 = vmatpush2.msra.mxu0 0.0
    %3358 = vmatprep.subr.mxu0 0.0
    %3359 = vmatpush2.msra.mxu0 0.0
    %3360 = vmatprep.subr.mxu0 0.0
    %3361 = vmatpush2.msra.mxu0 0.0
    %3362 = vmatprep.mubr.f32.mxu0 0.0
    %3363 = vmatmul.mubr.f32.gmra.mxu0 %v2060
    %v3364 = vpop.f32.mrf.mxu0
    %v3365 = vadd.f32 %v3297, %v3364
    %v3366 = vpop.f32.mrf.mxu0
    %3367 = vmatprep.mubr.f32.mxu0 0.0
    %3368 = vmatmul.mubr.f32.gmra.mxu0 %v2061
    %v3369 = vpop.f32.mrf.mxu0
    %v3370 = vadd.f32 %v3297, %v3369
    %v3371 = vpop.f32.mrf.mxu0
    %3372 = vdwg.mxu0
    %s3373 = scalar_lea.vmem [#allocation2], 2176
    %v3374 = vld [vmem:[%s3373] sm:$0xff]
    %v3375 = vld [vmem:[%s3373 + $0x8] sm:$0xff]
    %v3376 = vld [vmem:[%s3373 + $0x10] sm:$0xff]
    %v3377 = vld [vmem:[%s3373 + $0x18] sm:$0xff]
    %v3378 = vld [vmem:[%s3373 + $0x20] sm:$0xff]
    %v3379 = vld [vmem:[%s3373 + $0x28] sm:$0xff]
    %v3380 = vld [vmem:[%s3373 + $0x30] sm:$0xff]
    %v3381 = vld [vmem:[%s3373 + $0x38] sm:$0xff]
    %v3382 = vld [vmem:[%s3373 + $0x40] sm:$0xff]
    %v3383 = vld [vmem:[%s3373 + $0x48] sm:$0xff]
    %v3384 = vld [vmem:[%s3373 + $0x50] sm:$0xff]
    %v3385 = vld [vmem:[%s3373 + $0x58] sm:$0xff]
    %v3386 = vld [vmem:[%s3373 + $0x60] sm:$0xff]
    %v3387 = vld [vmem:[%s3373 + $0x68] sm:$0xff]
    %v3388 = vld [vmem:[%s3373 + $0x70] sm:$0xff]
    %v3389 = vld [vmem:[%s3373 + $0x78] sm:$0xff]
    %v3390 = vlaneseq
    %v3391 = vshrl.u32 %v3390, 7
    %v3392 = vsub.s32 0, %v3391
    %v3393 = vrot.slane %v2064, %v3392
    %3394 = vmatprep.subr.mxu0 0.0
    %3395 = vmatpush1.msra.mxu0 %v3389
    %3396 = vmatprep.subr.mxu0 0.0
    %3397 = vmatpush1.msra.mxu0 %v3388
    %3398 = vmatprep.subr.mxu0 0.0
    %3399 = vmatpush1.msra.mxu0 %v3387
    %3400 = vmatprep.subr.mxu0 0.0
    %3401 = vmatpush1.msra.mxu0 %v3386
    %3402 = vmatprep.subr.mxu0 0.0
    %3403 = vmatpush1.msra.mxu0 %v3385
    %3404 = vmatprep.subr.mxu0 0.0
    %3405 = vmatpush1.msra.mxu0 %v3384
    %3406 = vmatprep.subr.mxu0 0.0
    %3407 = vmatpush1.msra.mxu0 %v3383
    %3408 = vmatprep.subr.mxu0 0.0
    %3409 = vmatpush1.msra.mxu0 %v3382
    %3410 = vmatprep.subr.mxu0 0.0
    %3411 = vmatpush1.msra.mxu0 %v3381
    %3412 = vmatprep.subr.mxu0 0.0
    %3413 = vmatpush1.msra.mxu0 %v3380
    %3414 = vmatprep.subr.mxu0 0.0
    %3415 = vmatpush1.msra.mxu0 %v3379
    %3416 = vmatprep.subr.mxu0 0.0
    %3417 = vmatpush1.msra.mxu0 %v3378
    %3418 = vmatprep.subr.mxu0 0.0
    %3419 = vmatpush1.msra.mxu0 %v3377
    %3420 = vmatprep.subr.mxu0 0.0
    %3421 = vmatpush1.msra.mxu0 %v3376
    %3422 = vmatprep.subr.mxu0 0.0
    %3423 = vmatpush1.msra.mxu0 %v3375
    %3424 = vmatprep.subr.mxu0 0.0
    %3425 = vmatpush1.msra.mxu0 %v3374
    %3426 = vmatprep.subr.mxu0 0.0
    %3427 = vmatpush2.msra.mxu0 0.0
    %3428 = vmatprep.subr.mxu0 0.0
    %3429 = vmatpush2.msra.mxu0 0.0
    %3430 = vmatprep.subr.mxu0 0.0
    %3431 = vmatpush2.msra.mxu0 0.0
    %3432 = vmatprep.subr.mxu0 0.0
    %3433 = vmatpush2.msra.mxu0 0.0
    %3434 = vmatprep.subr.mxu0 0.0
    %3435 = vmatpush2.msra.mxu0 0.0
    %3436 = vmatprep.subr.mxu0 0.0
    %3437 = vmatpush2.msra.mxu0 0.0
    %3438 = vmatprep.subr.mxu0 0.0
    %3439 = vmatpush2.msra.mxu0 0.0
    %3440 = vmatprep.subr.mxu0 0.0
    %3441 = vmatpush2.msra.mxu0 0.0
    %3442 = vmatprep.subr.mxu0 0.0
    %3443 = vmatpush2.msra.mxu0 0.0
    %3444 = vmatprep.subr.mxu0 0.0
    %3445 = vmatpush2.msra.mxu0 0.0
    %3446 = vmatprep.subr.mxu0 0.0
    %3447 = vmatpush2.msra.mxu0 0.0
    %3448 = vmatprep.subr.mxu0 0.0
    %3449 = vmatpush2.msra.mxu0 0.0
    %3450 = vmatprep.subr.mxu0 0.0
    %3451 = vmatpush2.msra.mxu0 0.0
    %3452 = vmatprep.subr.mxu0 0.0
    %3453 = vmatpush2.msra.mxu0 0.0
    %3454 = vmatprep.subr.mxu0 0.0
    %3455 = vmatpush2.msra.mxu0 0.0
    %3456 = vmatprep.subr.mxu0 0.0
    %3457 = vmatpush2.msra.mxu0 0.0
    %3458 = vmatprep.mubr.f32.mxu0 0.0
    %3459 = vmatmul.mubr.f32.gmra.mxu0 %v2060
    %v3460 = vpop.f32.mrf.mxu0
    %v3461 = vadd.f32 %v3393, %v3460
    %v3462 = vpop.f32.mrf.mxu0
    %3463 = vmatprep.mubr.f32.mxu0 0.0
    %3464 = vmatmul.mubr.f32.gmra.mxu0 %v2061
    %v3465 = vpop.f32.mrf.mxu0
    %v3466 = vadd.f32 %v3393, %v3465
    %v3467 = vpop.f32.mrf.mxu0
    %3468 = vdwg.mxu0
    %3469 = vmatprep.subr.mxu0 0.0
    %3470 = vmatpush1.xpose.msra.mxu0 0.0
    %3471 = vmatprep.subr.mxu0 0.0
    %3472 = vmatpush1.xpose.msra.mxu0 0.0
    %3473 = vmatprep.subr.mxu0 0.0
    %3474 = vmatpush1.xpose.msra.mxu0 0.0
    %3475 = vmatprep.subr.mxu0 0.0
    %3476 = vmatpush1.xpose.msra.mxu0 0.0
    %3477 = vmatprep.subr.mxu0 0.0
    %3478 = vmatpush1.xpose.msra.mxu0 0.0
    %3479 = vmatprep.subr.mxu0 0.0
    %3480 = vmatpush1.xpose.msra.mxu0 0.0
    %3481 = vmatprep.subr.mxu0 0.0
    %3482 = vmatpush1.xpose.msra.mxu0 0.0
    %3483 = vmatprep.subr.mxu0 0.0
    %3484 = vmatpush1.xpose.msra.mxu0 0.0
    %3485 = vmatprep.subr.mxu0 0.0
    %3486 = vmatpush1.xpose.msra.mxu0 0.0
    %3487 = vmatprep.subr.mxu0 0.0
    %3488 = vmatpush1.xpose.msra.mxu0 0.0
    %3489 = vmatprep.subr.mxu0 0.0
    %3490 = vmatpush1.xpose.msra.mxu0 0.0
    %3491 = vmatprep.subr.mxu0 0.0
    %3492 = vmatpush1.xpose.msra.mxu0 0.0
    %3493 = vmatprep.subr.mxu0 0.0
    %3494 = vmatpush1.xpose.msra.mxu0 0.0
    %3495 = vmatprep.subr.mxu0 0.0
    %3496 = vmatpush1.xpose.msra.mxu0 0.0
    %3497 = vmatprep.subr.mxu0 0.0
    %3498 = vmatpush1.xpose.msra.mxu0 %v3370
    %3499 = vmatprep.subr.mxu0 0.0
    %3500 = vmatpush1.xpose.msra.mxu0 %v3365
    %3501 = vmatprep.subr.mxu0 0.0
    %3502 = vmatpush2.xpose.msra.mxu0 0.0
    %3503 = vmatprep.subr.mxu0 0.0
    %3504 = vmatpush2.xpose.msra.mxu0 0.0
    %3505 = vmatprep.subr.mxu0 0.0
    %3506 = vmatpush2.xpose.msra.mxu0 0.0
    %3507 = vmatprep.subr.mxu0 0.0
    %3508 = vmatpush2.xpose.msra.mxu0 0.0
    %3509 = vmatprep.subr.mxu0 0.0
    %3510 = vmatpush2.xpose.msra.mxu0 0.0
    %3511 = vmatprep.subr.mxu0 0.0
    %3512 = vmatpush2.xpose.msra.mxu0 0.0
    %3513 = vmatprep.subr.mxu0 0.0
    %3514 = vmatpush2.xpose.msra.mxu0 0.0
    %3515 = vmatprep.subr.mxu0 0.0
    %3516 = vmatpush2.xpose.msra.mxu0 0.0
    %3517 = vmatprep.subr.mxu0 0.0
    %3518 = vmatpush2.xpose.msra.mxu0 0.0
    %3519 = vmatprep.subr.mxu0 0.0
    %3520 = vmatpush2.xpose.msra.mxu0 0.0
    %3521 = vmatprep.subr.mxu0 0.0
    %3522 = vmatpush2.xpose.msra.mxu0 0.0
    %3523 = vmatprep.subr.mxu0 0.0
    %3524 = vmatpush2.xpose.msra.mxu0 0.0
    %3525 = vmatprep.subr.mxu0 0.0
    %3526 = vmatpush2.xpose.msra.mxu0 0.0
    %3527 = vmatprep.subr.mxu0 0.0
    %3528 = vmatpush2.xpose.msra.mxu0 0.0
    %3529 = vmatprep.subr.mxu0 0.0
    %3530 = vmatpush2.xpose.msra.mxu0 0.0
    %3531 = vmatprep.subr.mxu0 0.0
    %3532 = vmatpush2.xpose.msra.mxu0 0.0
    %3533 = vmatprep.mubr.f32.mxu0 0.0
    %3534 = vmatmul.mubr.f32.gmra.mxu0 %v3269
    %v3535 = vpop.f32.mrf.mxu0
    %v3536 = vadd.f32 %v109, %v3535
    %v3537 = vpop.f32.mrf.mxu0
    %3538 = vmatprep.mubr.f32.mxu0 0.0
    %3539 = vmatmul.mubr.f32.gmra.mxu0 %v3274
    %v3540 = vpop.f32.mrf.mxu0
    %v3541 = vadd.f32 %v110, %v3540
    %v3542 = vpop.f32.mrf.mxu0
    %3543 = vdwg.mxu0
    %v3544 = vsel %vm475, %v3536, -inf
    %3545 = vmax.xlane.f32.xlu0 %v3544
    %v3546 = vpop.xlane.xlu0 %3545
    %v3547 = vsel %vm475, %v3541, -inf
    %3548 = vmax.xlane.f32.xlu0 %v3547
    %v3549 = vpop.xlane.xlu0 %3548
    %v3550 = vsub.f32 %v3536, %v3546
    %v3551 = vsub.f32 %v3541, %v3549
    %v3552 = vmul.f32 %v3550, 1.442695
    %v3553 = vpow.pop %v3552
    %v3554 = vmul.f32 %v3551, 1.442695
    %v3555 = vpow.pop %v3554
    %v3556 = vsel %vm475, %v3553, 0.0
    %3557 = vadd.xlane.f32.xlu0 %v3556
    %v3558 = vpop.xlane.xlu0 %3557
    %v3559 = vsel %vm475, %v3555, 0.0
    %3560 = vadd.xlane.f32.xlu0 %v3559
    %v3561 = vpop.xlane.xlu0 %3560
    %v3562 = vrcp.pop %v3558
    %v3563 = vrcp.pop %v3561
    %v3564 = vmul.f32 %v3553, %v3562
    %v3565 = vmul.f32 %v3555, %v3563
    %v3567 = vsel %vm475, %v3564, 0
    %v3570 = vsel %vm475, %v3565, 0
    %3572 = vmatprep.subr.mxu0 0.0
    %3573 = vmatpush1.msra.mxu0 0.0
    %3574 = vmatprep.subr.mxu0 0.0
    %3575 = vmatpush1.msra.mxu0 0.0
    %3576 = vmatprep.subr.mxu0 0.0
    %3577 = vmatpush1.msra.mxu0 0.0
    %3578 = vmatprep.subr.mxu0 0.0
    %3579 = vmatpush1.msra.mxu0 0.0
    %3580 = vmatprep.subr.mxu0 0.0
    %3581 = vmatpush1.msra.mxu0 0.0
    %3582 = vmatprep.subr.mxu0 0.0
    %3583 = vmatpush1.msra.mxu0 0.0
    %3584 = vmatprep.subr.mxu0 0.0
    %3585 = vmatpush1.msra.mxu0 0.0
    %3586 = vmatprep.subr.mxu0 0.0
    %3587 = vmatpush1.msra.mxu0 0.0
    %3588 = vmatprep.subr.mxu0 0.0
    %3589 = vmatpush1.msra.mxu0 0.0
    %3590 = vmatprep.subr.mxu0 0.0
    %3591 = vmatpush1.msra.mxu0 0.0
    %3592 = vmatprep.subr.mxu0 0.0
    %3593 = vmatpush1.msra.mxu0 0.0
    %3594 = vmatprep.subr.mxu0 0.0
    %3595 = vmatpush1.msra.mxu0 0.0
    %3596 = vmatprep.subr.mxu0 0.0
    %3597 = vmatpush1.msra.mxu0 0.0
    %3598 = vmatprep.subr.mxu0 0.0
    %3599 = vmatpush1.msra.mxu0 0.0
    %3600 = vmatprep.subr.mxu0 0.0
    %3601 = vmatpush1.msra.mxu0 %v3466
    %3602 = vmatprep.subr.mxu0 0.0
    %3603 = vmatpush1.msra.mxu0 %v3461
    %3604 = vmatprep.subr.mxu0 0.0
    %3605 = vmatpush2.msra.mxu0 0.0
    %3606 = vmatprep.subr.mxu0 0.0
    %3607 = vmatpush2.msra.mxu0 0.0
    %3608 = vmatprep.subr.mxu0 0.0
    %3609 = vmatpush2.msra.mxu0 0.0
    %3610 = vmatprep.subr.mxu0 0.0
    %3611 = vmatpush2.msra.mxu0 0.0
    %3612 = vmatprep.subr.mxu0 0.0
    %3613 = vmatpush2.msra.mxu0 0.0
    %3614 = vmatprep.subr.mxu0 0.0
    %3615 = vmatpush2.msra.mxu0 0.0
    %3616 = vmatprep.subr.mxu0 0.0
    %3617 = vmatpush2.msra.mxu0 0.0
    %3618 = vmatprep.subr.mxu0 0.0
    %3619 = vmatpush2.msra.mxu0 0.0
    %3620 = vmatprep.subr.mxu0 0.0
    %3621 = vmatpush2.msra.mxu0 0.0
    %3622 = vmatprep.subr.mxu0 0.0
    %3623 = vmatpush2.msra.mxu0 0.0
    %3624 = vmatprep.subr.mxu0 0.0
    %3625 = vmatpush2.msra.mxu0 0.0
    %3626 = vmatprep.subr.mxu0 0.0
    %3627 = vmatpush2.msra.mxu0 0.0
    %3628 = vmatprep.subr.mxu0 0.0
    %3629 = vmatpush2.msra.mxu0 0.0
    %3630 = vmatprep.subr.mxu0 0.0
    %3631 = vmatpush2.msra.mxu0 0.0
    %3632 = vmatprep.subr.mxu0 0.0
    %3633 = vmatpush2.msra.mxu0 0.0
    %3634 = vmatprep.subr.mxu0 0.0
    %3635 = vmatpush2.msra.mxu0 0.0
    %3636 = vmatprep.mubr.f32.mxu0 0.0
    %3637 = vmatmul.mubr.f32.gmra.mxu0 %v3567
    %v3638 = vpop.f32.mrf.mxu0
    %v3639 = vadd.f32 0.0, %v3638
    %v3640 = vpop.f32.mrf.mxu0
    %3641 = vmatprep.mubr.f32.mxu0 0.0
    %3642 = vmatmul.mubr.f32.gmra.mxu0 %v3570
    %v3643 = vpop.f32.mrf.mxu0
    %v3644 = vadd.f32 0.0, %v3643
    %v3645 = vpop.f32.mrf.mxu0
    %3646 = vdwg.mxu0
    %s3647 = scalar_lea.vmem [#allocation5], 640
    %v3648 = vld [vmem:[%s3647] sm:$0xff]
    %v3649 = vld [vmem:[%s3647 + $0x8] sm:$0xff]
    %v3650 = vld [vmem:[%s3647 + $0x10] sm:$0xff]
    %v3651 = vld [vmem:[%s3647 + $0x18] sm:$0xff]
    %v3652 = vld [vmem:[%s3647 + $0x20] sm:$0xff]
    %v3653 = vld [vmem:[%s3647 + $0x28] sm:$0xff]
    %v3654 = vld [vmem:[%s3647 + $0x30] sm:$0xff]
    %v3655 = vld [vmem:[%s3647 + $0x38] sm:$0xff]
    %v3656 = vld [vmem:[%s3647 + $0x40] sm:$0xff]
    %v3657 = vld [vmem:[%s3647 + $0x48] sm:$0xff]
    %v3658 = vld [vmem:[%s3647 + $0x50] sm:$0xff]
    %v3659 = vld [vmem:[%s3647 + $0x58] sm:$0xff]
    %v3660 = vld [vmem:[%s3647 + $0x60] sm:$0xff]
    %v3661 = vld [vmem:[%s3647 + $0x68] sm:$0xff]
    %v3662 = vld [vmem:[%s3647 + $0x70] sm:$0xff]
    %v3663 = vld [vmem:[%s3647 + $0x78] sm:$0xff]
    %3664 = vmatprep.subr.mxu0 0.0
    %3665 = vmatpush1.msra.mxu0 %v3663
    %3666 = vmatprep.subr.mxu0 0.0
    %3667 = vmatpush1.msra.mxu0 %v3662
    %3668 = vmatprep.subr.mxu0 0.0
    %3669 = vmatpush1.msra.mxu0 %v3661
    %3670 = vmatprep.subr.mxu0 0.0
    %3671 = vmatpush1.msra.mxu0 %v3660
    %3672 = vmatprep.subr.mxu0 0.0
    %3673 = vmatpush1.msra.mxu0 %v3659
    %3674 = vmatprep.subr.mxu0 0.0
    %3675 = vmatpush1.msra.mxu0 %v3658
    %3676 = vmatprep.subr.mxu0 0.0
    %3677 = vmatpush1.msra.mxu0 %v3657
    %3678 = vmatprep.subr.mxu0 0.0
    %3679 = vmatpush1.msra.mxu0 %v3656
    %3680 = vmatprep.subr.mxu0 0.0
    %3681 = vmatpush1.msra.mxu0 %v3655
    %3682 = vmatprep.subr.mxu0 0.0
    %3683 = vmatpush1.msra.mxu0 %v3654
    %3684 = vmatprep.subr.mxu0 0.0
    %3685 = vmatpush1.msra.mxu0 %v3653
    %3686 = vmatprep.subr.mxu0 0.0
    %3687 = vmatpush1.msra.mxu0 %v3652
    %3688 = vmatprep.subr.mxu0 0.0
    %3689 = vmatpush1.msra.mxu0 %v3651
    %3690 = vmatprep.subr.mxu0 0.0
    %3691 = vmatpush1.msra.mxu0 %v3650
    %3692 = vmatprep.subr.mxu0 0.0
    %3693 = vmatpush1.msra.mxu0 %v3649
    %3694 = vmatprep.subr.mxu0 0.0
    %3695 = vmatpush1.msra.mxu0 %v3648
    %3696 = vmatprep.subr.mxu0 0.0
    %3697 = vmatpush2.msra.mxu0 0.0
    %3698 = vmatprep.subr.mxu0 0.0
    %3699 = vmatpush2.msra.mxu0 0.0
    %3700 = vmatprep.subr.mxu0 0.0
    %3701 = vmatpush2.msra.mxu0 0.0
    %3702 = vmatprep.subr.mxu0 0.0
    %3703 = vmatpush2.msra.mxu0 0.0
    %3704 = vmatprep.subr.mxu0 0.0
    %3705 = vmatpush2.msra.mxu0 0.0
    %3706 = vmatprep.subr.mxu0 0.0
    %3707 = vmatpush2.msra.mxu0 0.0
    %3708 = vmatprep.subr.mxu0 0.0
    %3709 = vmatpush2.msra.mxu0 0.0
    %3710 = vmatprep.subr.mxu0 0.0
    %3711 = vmatpush2.msra.mxu0 0.0
    %3712 = vmatprep.subr.mxu0 0.0
    %3713 = vmatpush2.msra.mxu0 0.0
    %3714 = vmatprep.subr.mxu0 0.0
    %3715 = vmatpush2.msra.mxu0 0.0
    %3716 = vmatprep.subr.mxu0 0.0
    %3717 = vmatpush2.msra.mxu0 0.0
    %3718 = vmatprep.subr.mxu0 0.0
    %3719 = vmatpush2.msra.mxu0 0.0
    %3720 = vmatprep.subr.mxu0 0.0
    %3721 = vmatpush2.msra.mxu0 0.0
    %3722 = vmatprep.subr.mxu0 0.0
    %3723 = vmatpush2.msra.mxu0 0.0
    %3724 = vmatprep.subr.mxu0 0.0
    %3725 = vmatpush2.msra.mxu0 0.0
    %3726 = vmatprep.subr.mxu0 0.0
    %3727 = vmatpush2.msra.mxu0 0.0
    %3728 = vmatprep.mubr.f32.mxu0 0.0
    %3729 = vmatmul.mubr.f32.gmra.mxu0 %v3639
    %v3730 = vpop.f32.mrf.mxu0
    %v3731 = vadd.f32 0.0, %v3730
    %v3732 = vpop.f32.mrf.mxu0
    %3733 = vmatprep.mubr.f32.mxu0 0.0
    %3734 = vmatmul.mubr.f32.gmra.mxu0 %v3644
    %v3735 = vpop.f32.mrf.mxu0
    %v3736 = vadd.f32 0.0, %v3735
    %v3737 = vpop.f32.mrf.mxu0
    %3738 = vdwg.mxu0
    %v3739 = vadd.f32 %v3173, %v3731
    %v3740 = vadd.f32 %v3178, %v3736
    %v3741 = vlaneseq
    %v3742 = vshrl.u32 %v3741, 7
    %v3743 = vsub.s32 1, %v3742
    %v3744 = vrot.slane %v2064, %v3743
    %v3745 = vadd.f32 %v3739, %v3744
    %v3746 = vadd.f32 %v3740, %v3744
    %v3747 = vadd.f32 %v2060, %v3745
    %v3748 = vadd.f32 %v2061, %v3746
    %3749 = vadd.xlane.f32.xlu0 %v3747
    %v3750 = vpop.xlane.xlu0 %3749
    %3751 = vadd.xlane.f32.xlu0 %v3748
    %v3752 = vpop.xlane.xlu0 %3751
    %v3753 = vmul.f32 %v3750, 0.030303031
    %v3754 = vmul.f32 %v3752, 0.030303031
    %v3755 = vsub.f32 %v3747, %v3753
    %v3756 = vsub.f32 %v3748, %v3754
    %v3757 = vmul.f32 %v3755, %v102
    %v3758 = vmul.f32 %v3756, %v102
    %v3759 = vmul.f32 %v3757, %v3757
    %v3760 = vmul.f32 %v3758, %v3758
    %3761 = vadd.xlane.f32.xlu0 %v3759
    %v3762 = vpop.xlane.xlu0 %3761
    %3763 = vadd.xlane.f32.xlu0 %v3760
    %v3764 = vpop.xlane.xlu0 %3763
    %v3765 = vmul.f32 %v3762, 0.030303031
    %v3766 = vmul.f32 %v3764, 0.030303031
    %v3767 = vadd.f32 %v3765, 1e-05
    %v3768 = vadd.f32 %v3766, 1e-05
    %v3769 = vrsqrt.pop %v3767
    %v3770 = vrsqrt.pop %v3768
    %v3771 = vmul.f32 %v3757, %v3769
    %v3772 = vmul.f32 %v3758, %v3770
    %v3773 = vlaneseq
    %v3774 = vshrl.u32 %v3773, 7
    %v3775 = vsub.s32 4, %v3774
    %v3776 = vrot.slane %v2064, %v3775
    %v3777 = vmul.f32 %v3771, %v3776
    %v3778 = vmul.f32 %v3772, %v3776
    %v3779 = vlaneseq
    %v3780 = vshrl.u32 %v3779, 7
    %v3781 = vsub.s32 5, %v3780
    %v3782 = vrot.slane %v2064, %v3781
    %v3783 = vadd.f32 %v3777, %v3782
    %v3784 = vadd.f32 %v3778, %v3782
    %s3785 = scalar_lea.vmem [#allocation7], 128
    %v3786 = vld [vmem:[%s3785] sm:$0xff]
    %v3787 = vld [vmem:[%s3785 + $0x8] sm:$0xff]
    %v3788 = vld [vmem:[%s3785 + $0x10] sm:$0xff]
    %v3789 = vld [vmem:[%s3785 + $0x18] sm:$0xff]
    %v3790 = vld [vmem:[%s3785 + $0x20] sm:$0xff]
    %v3791 = vld [vmem:[%s3785 + $0x28] sm:$0xff]
    %v3792 = vld [vmem:[%s3785 + $0x30] sm:$0xff]
    %v3793 = vld [vmem:[%s3785 + $0x38] sm:$0xff]
    %v3794 = vld [vmem:[%s3785 + $0x40] sm:$0xff]
    %v3795 = vld [vmem:[%s3785 + $0x48] sm:$0xff]
    %v3796 = vld [vmem:[%s3785 + $0x50] sm:$0xff]
    %v3797 = vld [vmem:[%s3785 + $0x58] sm:$0xff]
    %v3798 = vld [vmem:[%s3785 + $0x60] sm:$0xff]
    %v3799 = vld [vmem:[%s3785 + $0x68] sm:$0xff]
    %v3800 = vld [vmem:[%s3785 + $0x70] sm:$0xff]
    %v3801 = vld [vmem:[%s3785 + $0x78] sm:$0xff]
    %v3802 = vlaneseq
    %v3803 = vshrl.u32 %v3802, 7
    %v3804 = vsub.s32 2, %v3803
    %v3805 = vrot.slane %v2064, %v3804
    %3806 = vmatprep.subr.mxu0 0.0
    %3807 = vmatpush1.msra.mxu0 %v3801
    %3808 = vmatprep.subr.mxu0 0.0
    %3809 = vmatpush1.msra.mxu0 %v3800
    %3810 = vmatprep.subr.mxu0 0.0
    %3811 = vmatpush1.msra.mxu0 %v3799
    %3812 = vmatprep.subr.mxu0 0.0
    %3813 = vmatpush1.msra.mxu0 %v3798
    %3814 = vmatprep.subr.mxu0 0.0
    %3815 = vmatpush1.msra.mxu0 %v3797
    %3816 = vmatprep.subr.mxu0 0.0
    %3817 = vmatpush1.msra.mxu0 %v3796
    %3818 = vmatprep.subr.mxu0 0.0
    %3819 = vmatpush1.msra.mxu0 %v3795
    %3820 = vmatprep.subr.mxu0 0.0
    %3821 = vmatpush1.msra.mxu0 %v3794
    %3822 = vmatprep.subr.mxu0 0.0
    %3823 = vmatpush1.msra.mxu0 %v3793
    %3824 = vmatprep.subr.mxu0 0.0
    %3825 = vmatpush1.msra.mxu0 %v3792
    %3826 = vmatprep.subr.mxu0 0.0
    %3827 = vmatpush1.msra.mxu0 %v3791
    %3828 = vmatprep.subr.mxu0 0.0
    %3829 = vmatpush1.msra.mxu0 %v3790
    %3830 = vmatprep.subr.mxu0 0.0
    %3831 = vmatpush1.msra.mxu0 %v3789
    %3832 = vmatprep.subr.mxu0 0.0
    %3833 = vmatpush1.msra.mxu0 %v3788
    %3834 = vmatprep.subr.mxu0 0.0
    %3835 = vmatpush1.msra.mxu0 %v3787
    %3836 = vmatprep.subr.mxu0 0.0
    %3837 = vmatpush1.msra.mxu0 %v3786
    %3838 = vmatprep.subr.mxu0 0.0
    %3839 = vmatpush2.msra.mxu0 0.0
    %3840 = vmatprep.subr.mxu0 0.0
    %3841 = vmatpush2.msra.mxu0 0.0
    %3842 = vmatprep.subr.mxu0 0.0
    %3843 = vmatpush2.msra.mxu0 0.0
    %3844 = vmatprep.subr.mxu0 0.0
    %3845 = vmatpush2.msra.mxu0 0.0
    %3846 = vmatprep.subr.mxu0 0.0
    %3847 = vmatpush2.msra.mxu0 0.0
    %3848 = vmatprep.subr.mxu0 0.0
    %3849 = vmatpush2.msra.mxu0 0.0
    %3850 = vmatprep.subr.mxu0 0.0
    %3851 = vmatpush2.msra.mxu0 0.0
    %3852 = vmatprep.subr.mxu0 0.0
    %3853 = vmatpush2.msra.mxu0 0.0
    %3854 = vmatprep.subr.mxu0 0.0
    %3855 = vmatpush2.msra.mxu0 0.0
    %3856 = vmatprep.subr.mxu0 0.0
    %3857 = vmatpush2.msra.mxu0 0.0
    %3858 = vmatprep.subr.mxu0 0.0
    %3859 = vmatpush2.msra.mxu0 0.0
    %3860 = vmatprep.subr.mxu0 0.0
    %3861 = vmatpush2.msra.mxu0 0.0
    %3862 = vmatprep.subr.mxu0 0.0
    %3863 = vmatpush2.msra.mxu0 0.0
    %3864 = vmatprep.subr.mxu0 0.0
    %3865 = vmatpush2.msra.mxu0 0.0
    %3866 = vmatprep.subr.mxu0 0.0
    %3867 = vmatpush2.msra.mxu0 0.0
    %3868 = vmatprep.subr.mxu0 0.0
    %3869 = vmatpush2.msra.mxu0 0.0
    %3870 = vmatprep.mubr.f32.mxu0 0.0
    %3871 = vmatmul.mubr.f32.gmra.mxu0 %v3783
    %v3872 = vpop.f32.mrf.mxu0
    %v3873 = vadd.f32 %v3805, %v3872
    %v3874 = vpop.f32.mrf.mxu0
    %3875 = vmatprep.mubr.f32.mxu0 0.0
    %3876 = vmatmul.mubr.f32.gmra.mxu0 %v3784
    %v3877 = vpop.f32.mrf.mxu0
    %v3878 = vadd.f32 %v3805, %v3877
    %v3879 = vpop.f32.mrf.mxu0
    %3880 = vdwg.mxu0
    %v3881 = vmax.f32 %v3873, 0.0
    %v3882 = vmax.f32 %v3878, 0.0
    %s3883 = scalar_lea.vmem [#allocation8], 128
    %v3884 = vld [vmem:[%s3883] sm:$0xff]
    %v3885 = vld [vmem:[%s3883 + $0x8] sm:$0xff]
    %v3886 = vld [vmem:[%s3883 + $0x10] sm:$0xff]
    %v3887 = vld [vmem:[%s3883 + $0x18] sm:$0xff]
    %v3888 = vld [vmem:[%s3883 + $0x20] sm:$0xff]
    %v3889 = vld [vmem:[%s3883 + $0x28] sm:$0xff]
    %v3890 = vld [vmem:[%s3883 + $0x30] sm:$0xff]
    %v3891 = vld [vmem:[%s3883 + $0x38] sm:$0xff]
    %v3892 = vld [vmem:[%s3883 + $0x40] sm:$0xff]
    %v3893 = vld [vmem:[%s3883 + $0x48] sm:$0xff]
    %v3894 = vld [vmem:[%s3883 + $0x50] sm:$0xff]
    %v3895 = vld [vmem:[%s3883 + $0x58] sm:$0xff]
    %v3896 = vld [vmem:[%s3883 + $0x60] sm:$0xff]
    %v3897 = vld [vmem:[%s3883 + $0x68] sm:$0xff]
    %v3898 = vld [vmem:[%s3883 + $0x70] sm:$0xff]
    %v3899 = vld [vmem:[%s3883 + $0x78] sm:$0xff]
    %v3900 = vlaneseq
    %v3901 = vshrl.u32 %v3900, 7
    %v3902 = vsub.s32 3, %v3901
    %v3903 = vrot.slane %v2064, %v3902
    %3904 = vmatprep.subr.mxu0 0.0
    %3905 = vmatpush1.msra.mxu0 %v3899
    %3906 = vmatprep.subr.mxu0 0.0
    %3907 = vmatpush1.msra.mxu0 %v3898
    %3908 = vmatprep.subr.mxu0 0.0
    %3909 = vmatpush1.msra.mxu0 %v3897
    %3910 = vmatprep.subr.mxu0 0.0
    %3911 = vmatpush1.msra.mxu0 %v3896
    %3912 = vmatprep.subr.mxu0 0.0
    %3913 = vmatpush1.msra.mxu0 %v3895
    %3914 = vmatprep.subr.mxu0 0.0
    %3915 = vmatpush1.msra.mxu0 %v3894
    %3916 = vmatprep.subr.mxu0 0.0
    %3917 = vmatpush1.msra.mxu0 %v3893
    %3918 = vmatprep.subr.mxu0 0.0
    %3919 = vmatpush1.msra.mxu0 %v3892
    %3920 = vmatprep.subr.mxu0 0.0
    %3921 = vmatpush1.msra.mxu0 %v3891
    %3922 = vmatprep.subr.mxu0 0.0
    %3923 = vmatpush1.msra.mxu0 %v3890
    %3924 = vmatprep.subr.mxu0 0.0
    %3925 = vmatpush1.msra.mxu0 %v3889
    %3926 = vmatprep.subr.mxu0 0.0
    %3927 = vmatpush1.msra.mxu0 %v3888
    %3928 = vmatprep.subr.mxu0 0.0
    %3929 = vmatpush1.msra.mxu0 %v3887
    %3930 = vmatprep.subr.mxu0 0.0
    %3931 = vmatpush1.msra.mxu0 %v3886
    %3932 = vmatprep.subr.mxu0 0.0
    %3933 = vmatpush1.msra.mxu0 %v3885
    %3934 = vmatprep.subr.mxu0 0.0
    %3935 = vmatpush1.msra.mxu0 %v3884
    %3936 = vmatprep.subr.mxu0 0.0
    %3937 = vmatpush2.msra.mxu0 0.0
    %3938 = vmatprep.subr.mxu0 0.0
    %3939 = vmatpush2.msra.mxu0 0.0
    %3940 = vmatprep.subr.mxu0 0.0
    %3941 = vmatpush2.msra.mxu0 0.0
    %3942 = vmatprep.subr.mxu0 0.0
    %3943 = vmatpush2.msra.mxu0 0.0
    %3944 = vmatprep.subr.mxu0 0.0
    %3945 = vmatpush2.msra.mxu0 0.0
    %3946 = vmatprep.subr.mxu0 0.0
    %3947 = vmatpush2.msra.mxu0 0.0
    %3948 = vmatprep.subr.mxu0 0.0
    %3949 = vmatpush2.msra.mxu0 0.0
    %3950 = vmatprep.subr.mxu0 0.0
    %3951 = vmatpush2.msra.mxu0 0.0
    %3952 = vmatprep.subr.mxu0 0.0
    %3953 = vmatpush2.msra.mxu0 0.0
    %3954 = vmatprep.subr.mxu0 0.0
    %3955 = vmatpush2.msra.mxu0 0.0
    %3956 = vmatprep.subr.mxu0 0.0
    %3957 = vmatpush2.msra.mxu0 0.0
    %3958 = vmatprep.subr.mxu0 0.0
    %3959 = vmatpush2.msra.mxu0 0.0
    %3960 = vmatprep.subr.mxu0 0.0
    %3961 = vmatpush2.msra.mxu0 0.0
    %3962 = vmatprep.subr.mxu0 0.0
    %3963 = vmatpush2.msra.mxu0 0.0
    %3964 = vmatprep.subr.mxu0 0.0
    %3965 = vmatpush2.msra.mxu0 0.0
    %3966 = vmatprep.subr.mxu0 0.0
    %3967 = vmatpush2.msra.mxu0 0.0
    %3968 = vmatprep.mubr.f32.mxu0 0.0
    %3969 = vmatmul.mubr.f32.gmra.mxu0 %v3881
    %v3970 = vpop.f32.mrf.mxu0
    %v3971 = vadd.f32 %v3903, %v3970
    %v3972 = vpop.f32.mrf.mxu0
    %3973 = vmatprep.mubr.f32.mxu0 0.0
    %3974 = vmatmul.mubr.f32.gmra.mxu0 %v3882
    %v3975 = vpop.f32.mrf.mxu0
    %v3976 = vadd.f32 %v3903, %v3975
    %v3977 = vpop.f32.mrf.mxu0
    %3978 = vdwg.mxu0
    %v3979 = vadd.f32 %v3783, %v3971
    %v3980 = vadd.f32 %v3784, %v3976
    %3981 = vadd.xlane.f32.xlu0 %v3979
    %v3982 = vpop.xlane.xlu0 %3981
    %3983 = vadd.xlane.f32.xlu0 %v3980
    %v3984 = vpop.xlane.xlu0 %3983
    %v3985 = vmul.f32 %v3982, 0.030303031
    %v3986 = vmul.f32 %v3984, 0.030303031
    %v3987 = vsub.f32 %v3979, %v3985
    %v3988 = vsub.f32 %v3980, %v3986
    %v3989 = vmul.f32 %v3987, %v102
    %v3990 = vmul.f32 %v3988, %v102
    %v3991 = vmul.f32 %v3989, %v3989
    %v3992 = vmul.f32 %v3990, %v3990
    %3993 = vadd.xlane.f32.xlu0 %v3991
    %v3994 = vpop.xlane.xlu0 %3993
    %3995 = vadd.xlane.f32.xlu0 %v3992
    %v3996 = vpop.xlane.xlu0 %3995
    %v3997 = vmul.f32 %v3994, 0.030303031
    %v3998 = vmul.f32 %v3996, 0.030303031
    %v3999 = vadd.f32 %v3997, 1e-05
    %v4000 = vadd.f32 %v3998, 1e-05
    %v4001 = vrsqrt.pop %v3999
    %v4002 = vrsqrt.pop %v4000
    %v4003 = vmul.f32 %v3989, %v4001
    %v4004 = vmul.f32 %v3990, %v4002
    %v4005 = vlaneseq
    %v4006 = vshrl.u32 %v4005, 7
    %v4007 = vsub.s32 6, %v4006
    %v4008 = vrot.slane %v2064, %v4007
    %v4009 = vmul.f32 %v4003, %v4008
    %v4010 = vmul.f32 %v4004, %v4008
    %v4011 = vlaneseq
    %v4012 = vshrl.u32 %v4011, 7
    %v4013 = vsub.s32 7, %v4012
    %v4014 = vrot.slane %v2064, %v4013
    %v4015 = vadd.f32 %v4009, %v4014
    %v4016 = vadd.f32 %v4010, %v4014
    %4017 = vst [vmem:[#allocation11] sm:$0xff] %v4015
    %4018 = vst [vmem:[#allocation11 + $0x8] sm:$0xff] %v4016
    // Predicated region
    $region54: #{transformer_backbone.1} parent=1 // pred_check
      _
    $region55: #{transformer_backbone.1} parent=1 // pred_check_branch
      %4020 = sbr.rel (0) target = $region57
    $region56: #{transformer_backbone.1} parent=1 // pred_region
      %s4022 = ssub.s32 256, 256
      %4023 = vsyncadd [#allocation4], %s4022
      %s4024 = sshll.u32 [#allocation11], 4
      %s4025 = int_to_ptr.vmem [resolvable:$true] %s4024
      %4030 = dma.vmem_to_hbm [thread:$0]  %s4025, 256, %s8, [#allocation4], 128, 128, 8
    $region57: #{transformer_backbone.1} parent=1 // pred_fallthru
      _
    // Predicated region
    $region58: #{transformer_backbone.1} parent=1 // pred_check
      _
    $region59: #{transformer_backbone.1} parent=1 // pred_check_branch
      %4032 = sbr.rel (0) target = $region61
    $region60: #{transformer_backbone.1} parent=1 // pred_region
      %4033 = dma.done [#allocation4], 256
    $region61: #{transformer_backbone.1} parent=1 // pred_fallthru
      _
    %4034 = vsyncpa [#allocation3], 1
    %4035 = vsyncpa [#allocation6], 1
    %4036 = vsyncpa [#allocation9], 1
    %4037 = vsyncpa [#allocation4], 1

</llo_original>
